<compile_context>
chip_gen: v5e
topology: v5e:2x2
jax: 0.10.0
libtpu: 0.0.40
codegen_flags: <defaults>
</compile_context>

<pallas_src>
import jax
import jax.numpy as jnp
from jax.experimental import pallas as pl
from jax.experimental.pallas import tpu as pltpu


IN_DIM = 784     # 28*28, full last dim of x (no column padding)
TAIL_PAD = 128   # 64-wide hidden and 10-wide output padded to one lane group


def _round_up(n, m):
    return ((n + m - 1) // m) * m


def mlp_kernel(x_ref,
               w1_ref, b1_ref,
               w2_ref, b2_ref,
               w3_ref, b3_ref,
               w4_ref, b4_ref,
               w5_ref, b5_ref,
               o_ref):
    # One batch tile per grid step; all weights/biases are resident in VMEM.
    # bf16 dot inputs, f32 accumulation, f32 bias add, ReLU, back to bf16.
    def layer(h, w_ref, b_ref):
        y = jnp.dot(h, w_ref[...], preferred_element_type=jnp.float32) + b_ref[...]
        return jnp.maximum(y, 0.0).astype(jnp.bfloat16)

    h = x_ref[...].astype(jnp.bfloat16)   # (TM, 784) f32 tile -> bf16 in-kernel
    h = layer(h, w1_ref, b1_ref)          # (TM, 512)
    h = layer(h, w2_ref, b2_ref)          # (TM, 256)
    h = layer(h, w3_ref, b3_ref)          # (TM, 128)
    h = layer(h, w4_ref, b4_ref)          # (TM, 128) (64 real + 64 zero lanes)
    o_ref[...] = (
        jnp.dot(h, w5_ref[...], preferred_element_type=jnp.float32) + b5_ref[...])


def prepare_params(params):
    """Pad tail dims to 128 lanes; weights -> bf16, biases stay f32.

    Padding is all zeros and ReLU(0) == 0, so padded lanes never contaminate
    real outputs.
    """
    (w1, b1), (w2, b2), (w3, b3), (w4, b4), (w5, b5) = params

    def pad2(a, rows, cols):
        return jnp.pad(a, ((0, rows - a.shape[0]), (0, cols - a.shape[1])))

    w1p = w1.astype(jnp.bfloat16)                            # (784, 512)
    w2p = w2.astype(jnp.bfloat16)                            # (512, 256)
    w3p = w3.astype(jnp.bfloat16)                            # (256, 128)
    w4p = pad2(w4, 128, TAIL_PAD).astype(jnp.bfloat16)       # (128, 128)
    w5p = pad2(w5, TAIL_PAD, TAIL_PAD).astype(jnp.bfloat16)  # (128, 128)
    b4p = pad2(b4, 1, TAIL_PAD)                              # (1, 128) f32
    b5p = pad2(b5, 1, TAIL_PAD)                              # (1, 128) f32
    return (w1p, b1, w2p, b2, w3p, b3, w4p, b4p, w5p, b5p)


def _build_call(flat, TM, B_pad, single_buffer_weights):
    def resident(a):
        # Whole array, same block every grid step -> loaded once, stays in VMEM.
        if single_buffer_weights:
            return pl.BlockSpec(a.shape, lambda i, nd=a.ndim: (0,) * nd,
                                pipeline_mode=pl.Buffered(1))
        return pl.BlockSpec(a.shape, lambda i, nd=a.ndim: (0,) * nd)

    return pl.pallas_call(
        mlp_kernel,
        out_shape=jax.ShapeDtypeStruct((B_pad, TAIL_PAD), jnp.float32),
        grid=(B_pad // TM,),
        in_specs=[pl.BlockSpec((TM, IN_DIM), lambda i: (i, 0))]
                 + [resident(a) for a in flat],
        out_specs=pl.BlockSpec((TM, TAIL_PAD), lambda i: (i, 0)),
        compiler_params=pltpu.CompilerParams(
            dimension_semantics=("parallel",)),  # v7x: shard batch tiles over 2 TCs
    )


def _choose_tile(B):
    TM = min(512, _round_up(B, 16))      # 16-row multiple (bf16 sublane packing)
    B_pad = _round_up(B, TM)
    # Keep >= 2 grid steps when the batch is large enough, so both v7x
    # TensorCores get work (a single-step grid parks one core).
    if B_pad // TM < 2 and B_pad >= 256:
        TM = _round_up(pl.cdiv(B_pad, 2), 16)
        B_pad = _round_up(B, TM)
    return TM, B_pad


def mlp_forward(x, params):
    """x: (B, 1, 28, 28) or (B, 784) float32. Returns (B, 10) float32."""
    x2d = x.reshape(-1, IN_DIM)                  # same as torch x.view(-1, 784)
    B = x2d.shape[0]

    TM, B_pad = _choose_tile(B)
    xp = x2d if B_pad == B else jnp.pad(x2d, ((0, B_pad - B), (0, 0)))
    flat = prepare_params(params)

    try:
        out_pad = _build_call(flat, TM, B_pad, single_buffer_weights=True)(xp, *flat)
        out_pad = jax.block_until_ready(out_pad)
    except Exception:
        # Fallback if this JAX build rejects pipeline_mode=pl.Buffered(1).
        out_pad = _build_call(flat, TM, B_pad, single_buffer_weights=False)(xp, *flat)

    return out_pad[:B, :10]


def init_params(key):
    """Deterministic params mirroring torch.nn.Linear init (uniform +-1/sqrt(fan_in)).

    Weights are stored transposed relative to PyTorch: (in_features, out_features),
    so the kernel computes y = x @ W + b, matching PyTorch's y = x @ W_pt.T + b.
    Biases are stored as (1, out_features).
    """
    dims = [784, 512, 256, 128, 64, 10]
    params = []
    for i in range(5):
        fan_in, fan_out = dims[i], dims[i + 1]
        key, kw, kb = jax.random.split(key, 3)
        bound = 1.0 / (fan_in ** 0.5)
        w = jax.random.uniform(kw, (fan_in, fan_out), jnp.float32, -bound, bound)
        b = jax.random.uniform(kb, (1, fan_out), jnp.float32, -bound, bound)
        params.append((w, b))
    return params


def reference_forward(x, params):
    """Pure-JAX reference mirroring the kernel's bf16 weights / f32 accumulation."""
    h = x.reshape(-1, IN_DIM).astype(jnp.bfloat16)
    for i, (w, b) in enumerate(params):
        y = jnp.dot(h, w.astype(jnp.bfloat16),
                    preferred_element_type=jnp.float32) + b
        if i < 4:
            h = jnp.maximum(y, 0.0).astype(jnp.bfloat16)
        else:
            h = y
    return h


if __name__ == "__main__":
    key = jax.random.PRNGKey(0)
    kx, kp = jax.random.split(key)

    # MNIST-like input: batch=8, NCHW (8, 1, 28, 28)
    x = jax.random.normal(kx, (8, 1, 28, 28), jnp.float32)
    params = init_params(kp)

    out = mlp_forward(x, params)
    out = jax.block_until_ready(out)

    ref = reference_forward(x, params)
    assert out.shape == (8, 10), out.shape
    assert jnp.allclose(out, ref, atol=2e-2, rtol=2e-2), "mismatch vs JAX reference"

    print("KERNEL_OK")
</pallas_src>

<mosaic_0001>
module attributes {stable_mosaic.version = 11 : i64} {
  func.func @mlp_kernel(%arg0: i32, %arg1: memref<16x784xf32, #tpu.memory_space<vmem>>, %arg2: memref<784x512xbf16, #tpu.memory_space<vmem>>, %arg3: memref<1x512xf32, #tpu.memory_space<vmem>>, %arg4: memref<512x256xbf16, #tpu.memory_space<vmem>>, %arg5: memref<1x256xf32, #tpu.memory_space<vmem>>, %arg6: memref<256x128xbf16, #tpu.memory_space<vmem>>, %arg7: memref<1x128xf32, #tpu.memory_space<vmem>>, %arg8: memref<128x128xbf16, #tpu.memory_space<vmem>>, %arg9: memref<1x128xf32, #tpu.memory_space<vmem>>, %arg10: memref<128x128xbf16, #tpu.memory_space<vmem>>, %arg11: memref<1x128xf32, #tpu.memory_space<vmem>>, %arg12: memref<16x128xf32, #tpu.memory_space<vmem>>) attributes {dimension_semantics = [#tpu.dimension_semantics<parallel>], iteration_bounds = array<i64: 1>, scalar_prefetch = 0 : i64, scratch_operands = 0 : i64, tpu.core_type = #tpu.core_type<tc>, window_params = [{transform_indices = @transform_0, window_bounds = array<i64: 16, 784>}, {pipeline_mode = #tpu.pipeline_mode<synchronous>, transform_indices = @transform_1, window_bounds = array<i64: 784, 512>}, {pipeline_mode = #tpu.pipeline_mode<synchronous>, transform_indices = @transform_2, window_bounds = array<i64: 1, 512>}, {pipeline_mode = #tpu.pipeline_mode<synchronous>, transform_indices = @transform_3, window_bounds = array<i64: 512, 256>}, {pipeline_mode = #tpu.pipeline_mode<synchronous>, transform_indices = @transform_4, window_bounds = array<i64: 1, 256>}, {pipeline_mode = #tpu.pipeline_mode<synchronous>, transform_indices = @transform_5, window_bounds = array<i64: 256, 128>}, {pipeline_mode = #tpu.pipeline_mode<synchronous>, transform_indices = @transform_6, window_bounds = array<i64: 1, 128>}, {pipeline_mode = #tpu.pipeline_mode<synchronous>, transform_indices = @transform_7, window_bounds = array<i64: 128, 128>}, {pipeline_mode = #tpu.pipeline_mode<synchronous>, transform_indices = @transform_8, window_bounds = array<i64: 1, 128>}, {pipeline_mode = #tpu.pipeline_mode<synchronous>, transform_indices = @transform_9, window_bounds = array<i64: 128, 128>}, {pipeline_mode = #tpu.pipeline_mode<synchronous>, transform_indices = @transform_10, window_bounds = array<i64: 1, 128>}, {transform_indices = @transform_11, window_bounds = array<i64: 16, 128>}]} {
    %c0 = arith.constant 0 : index
    %c0_0 = arith.constant 0 : index
    %0 = vector.load %arg1[%c0, %c0_0] : memref<16x784xf32, #tpu.memory_space<vmem>>, vector<16x784xf32>
    %1 = arith.truncf %0 : vector<16x784xf32> to vector<16x784xbf16>
    %c0_1 = arith.constant 0 : index
    %c0_2 = arith.constant 0 : index
    %2 = vector.load %arg2[%c0_1, %c0_2] : memref<784x512xbf16, #tpu.memory_space<vmem>>, vector<784x512xbf16>
    %cst = arith.constant dense<0.000000e+00> : vector<16x512xf32>
    %3 = tpu.matmul %1, %2, %cst {dimension_numbers = #tpu.dot_dimension_numbers<[1], [0], [0], [1], [0, 0, 1, 1], [], []>} : vector<16x784xbf16>, vector<784x512xbf16>, vector<16x512xf32> -> vector<16x512xf32>
    %c0_3 = arith.constant 0 : index
    %c0_4 = arith.constant 0 : index
    %4 = vector.load %arg3[%c0_3, %c0_4] : memref<1x512xf32, #tpu.memory_space<vmem>>, vector<1x512xf32>
    %5 = vector.broadcast %4 : vector<1x512xf32> to vector<16x512xf32>
    %6 = arith.addf %3, %5 : vector<16x512xf32>
    %cst_5 = arith.constant 0.000000e+00 : f32
    %7 = vector.broadcast %cst_5 : f32 to vector<16x512xf32>
    %8 = arith.maximumf %6, %7 : vector<16x512xf32>
    %9 = arith.truncf %8 : vector<16x512xf32> to vector<16x512xbf16>
    %c0_6 = arith.constant 0 : index
    %c0_7 = arith.constant 0 : index
    %10 = vector.load %arg4[%c0_6, %c0_7] : memref<512x256xbf16, #tpu.memory_space<vmem>>, vector<512x256xbf16>
    %cst_8 = arith.constant dense<0.000000e+00> : vector<16x256xf32>
    %11 = tpu.matmul %9, %10, %cst_8 {dimension_numbers = #tpu.dot_dimension_numbers<[1], [0], [0], [1], [0, 0, 1, 1], [], []>} : vector<16x512xbf16>, vector<512x256xbf16>, vector<16x256xf32> -> vector<16x256xf32>
    %c0_9 = arith.constant 0 : index
    %c0_10 = arith.constant 0 : index
    %12 = vector.load %arg5[%c0_9, %c0_10] : memref<1x256xf32, #tpu.memory_space<vmem>>, vector<1x256xf32>
    %13 = vector.broadcast %12 : vector<1x256xf32> to vector<16x256xf32>
    %14 = arith.addf %11, %13 : vector<16x256xf32>
    %cst_11 = arith.constant 0.000000e+00 : f32
    %15 = vector.broadcast %cst_11 : f32 to vector<16x256xf32>
    %16 = arith.maximumf %14, %15 : vector<16x256xf32>
    %17 = arith.truncf %16 : vector<16x256xf32> to vector<16x256xbf16>
    %c0_12 = arith.constant 0 : index
    %c0_13 = arith.constant 0 : index
    %18 = vector.load %arg6[%c0_12, %c0_13] : memref<256x128xbf16, #tpu.memory_space<vmem>>, vector<256x128xbf16>
    %cst_14 = arith.constant dense<0.000000e+00> : vector<16x128xf32>
    %19 = tpu.matmul %17, %18, %cst_14 {dimension_numbers = #tpu.dot_dimension_numbers<[1], [0], [0], [1], [0, 0, 1, 1], [], []>} : vector<16x256xbf16>, vector<256x128xbf16>, vector<16x128xf32> -> vector<16x128xf32>
    %c0_15 = arith.constant 0 : index
    %c0_16 = arith.constant 0 : index
    %20 = vector.load %arg7[%c0_15, %c0_16] : memref<1x128xf32, #tpu.memory_space<vmem>>, vector<1x128xf32>
    %21 = vector.broadcast %20 : vector<1x128xf32> to vector<16x128xf32>
    %22 = arith.addf %19, %21 : vector<16x128xf32>
    %cst_17 = arith.constant 0.000000e+00 : f32
    %23 = vector.broadcast %cst_17 : f32 to vector<16x128xf32>
    %24 = arith.maximumf %22, %23 : vector<16x128xf32>
    %25 = arith.truncf %24 : vector<16x128xf32> to vector<16x128xbf16>
    %c0_18 = arith.constant 0 : index
    %c0_19 = arith.constant 0 : index
    %26 = vector.load %arg8[%c0_18, %c0_19] : memref<128x128xbf16, #tpu.memory_space<vmem>>, vector<128x128xbf16>
    %cst_20 = arith.constant dense<0.000000e+00> : vector<16x128xf32>
    %27 = tpu.matmul %25, %26, %cst_20 {dimension_numbers = #tpu.dot_dimension_numbers<[1], [0], [0], [1], [0, 0, 1, 1], [], []>} : vector<16x128xbf16>, vector<128x128xbf16>, vector<16x128xf32> -> vector<16x128xf32>
    %c0_21 = arith.constant 0 : index
    %c0_22 = arith.constant 0 : index
    %28 = vector.load %arg9[%c0_21, %c0_22] : memref<1x128xf32, #tpu.memory_space<vmem>>, vector<1x128xf32>
    %29 = vector.broadcast %28 : vector<1x128xf32> to vector<16x128xf32>
    %30 = arith.addf %27, %29 : vector<16x128xf32>
    %cst_23 = arith.constant 0.000000e+00 : f32
    %31 = vector.broadcast %cst_23 : f32 to vector<16x128xf32>
    %32 = arith.maximumf %30, %31 : vector<16x128xf32>
    %33 = arith.truncf %32 : vector<16x128xf32> to vector<16x128xbf16>
    %c0_24 = arith.constant 0 : index
    %c0_25 = arith.constant 0 : index
    %34 = vector.load %arg10[%c0_24, %c0_25] : memref<128x128xbf16, #tpu.memory_space<vmem>>, vector<128x128xbf16>
    %cst_26 = arith.constant dense<0.000000e+00> : vector<16x128xf32>
    %35 = tpu.matmul %33, %34, %cst_26 {dimension_numbers = #tpu.dot_dimension_numbers<[1], [0], [0], [1], [0, 0, 1, 1], [], []>} : vector<16x128xbf16>, vector<128x128xbf16>, vector<16x128xf32> -> vector<16x128xf32>
    %c0_27 = arith.constant 0 : index
    %c0_28 = arith.constant 0 : index
    %36 = vector.load %arg11[%c0_27, %c0_28] : memref<1x128xf32, #tpu.memory_space<vmem>>, vector<1x128xf32>
    %37 = vector.broadcast %36 : vector<1x128xf32> to vector<16x128xf32>
    %38 = arith.addf %35, %37 : vector<16x128xf32>
    %c0_29 = arith.constant 0 : index
    %c0_30 = arith.constant 0 : index
    %39 = vector.load %arg12[%c0_29, %c0_30] : memref<16x128xf32, #tpu.memory_space<vmem>>, vector<16x128xf32>
    tpu.vector_store %arg12[%c0_29, %c0_30], %38 {strides = array<i32>} : memref<16x128xf32, #tpu.memory_space<vmem>>, vector<16x128xf32>,
    return
  }
  func.func @transform_0(%arg0: i32) -> (i32, i32) {
    %c0_i32 = arith.constant 0 : i32
    %c0_i32_0 = arith.constant 0 : i32
    return %arg0, %c0_i32 : i32, i32
  }
  func.func @transform_1(%arg0: i32) -> (i32, i32) {
    %c0_i32 = arith.constant 0 : i32
    %c0_i32_0 = arith.constant 0 : i32
    %c0_i32_1 = arith.constant 0 : i32
    return %c0_i32, %c0_i32_0 : i32, i32
  }
  func.func @transform_2(%arg0: i32) -> (i32, i32) {
    %c0_i32 = arith.constant 0 : i32
    %c0_i32_0 = arith.constant 0 : i32
    %c0_i32_1 = arith.constant 0 : i32
    return %c0_i32, %c0_i32_0 : i32, i32
  }
  func.func @transform_3(%arg0: i32) -> (i32, i32) {
    %c0_i32 = arith.constant 0 : i32
    %c0_i32_0 = arith.constant 0 : i32
    %c0_i32_1 = arith.constant 0 : i32
    return %c0_i32, %c0_i32_0 : i32, i32
  }
  func.func @transform_4(%arg0: i32) -> (i32, i32) {
    %c0_i32 = arith.constant 0 : i32
    %c0_i32_0 = arith.constant 0 : i32
    %c0_i32_1 = arith.constant 0 : i32
    return %c0_i32, %c0_i32_0 : i32, i32
  }
  func.func @transform_5(%arg0: i32) -> (i32, i32) {
    %c0_i32 = arith.constant 0 : i32
    %c0_i32_0 = arith.constant 0 : i32
    %c0_i32_1 = arith.constant 0 : i32
    return %c0_i32, %c0_i32_0 : i32, i32
  }
  func.func @transform_6(%arg0: i32) -> (i32, i32) {
    %c0_i32 = arith.constant 0 : i32
    %c0_i32_0 = arith.constant 0 : i32
    %c0_i32_1 = arith.constant 0 : i32
    return %c0_i32, %c0_i32_0 : i32, i32
  }
  func.func @transform_7(%arg0: i32) -> (i32, i32) {
    %c0_i32 = arith.constant 0 : i32
    %c0_i32_0 = arith.constant 0 : i32
    %c0_i32_1 = arith.constant 0 : i32
    return %c0_i32, %c0_i32_0 : i32, i32
  }
  func.func @transform_8(%arg0: i32) -> (i32, i32) {
    %c0_i32 = arith.constant 0 : i32
    %c0_i32_0 = arith.constant 0 : i32
    %c0_i32_1 = arith.constant 0 : i32
    return %c0_i32, %c0_i32_0 : i32, i32
  }
  func.func @transform_9(%arg0: i32) -> (i32, i32) {
    %c0_i32 = arith.constant 0 : i32
    %c0_i32_0 = arith.constant 0 : i32
    %c0_i32_1 = arith.constant 0 : i32
    return %c0_i32, %c0_i32_0 : i32, i32
  }
  func.func @transform_10(%arg0: i32) -> (i32, i32) {
    %c0_i32 = arith.constant 0 : i32
    %c0_i32_0 = arith.constant 0 : i32
    %c0_i32_1 = arith.constant 0 : i32
    return %c0_i32, %c0_i32_0 : i32, i32
  }
  func.func @transform_11(%arg0: i32) -> (i32, i32) {
    %c0_i32 = arith.constant 0 : i32
    %c0_i32_0 = arith.constant 0 : i32
    return %arg0, %c0_i32 : i32, i32
  }
}

module attributes {stable_mosaic.version = 11 : i64} {
  func.func @mlp_kernel(%arg0: i32, %arg1: memref<16x784xf32, #tpu.memory_space<vmem>>, %arg2: memref<784x512xbf16, #tpu.memory_space<vmem>>, %arg3: memref<1x512xf32, #tpu.memory_space<vmem>>, %arg4: memref<512x256xbf16, #tpu.memory_space<vmem>>, %arg5: memref<1x256xf32, #tpu.memory_space<vmem>>, %arg6: memref<256x128xbf16, #tpu.memory_space<vmem>>, %arg7: memref<1x128xf32, #tpu.memory_space<vmem>>, %arg8: memref<128x128xbf16, #tpu.memory_space<vmem>>, %arg9: memref<1x128xf32, #tpu.memory_space<vmem>>, %arg10: memref<128x128xbf16, #tpu.memory_space<vmem>>, %arg11: memref<1x128xf32, #tpu.memory_space<vmem>>, %arg12: memref<16x128xf32, #tpu.memory_space<vmem>>) attributes {dimension_semantics = [#tpu.dimension_semantics<parallel>], iteration_bounds = array<i64: 1>, scalar_prefetch = 0 : i64, scratch_operands = 0 : i64, tpu.core_type = #tpu.core_type<tc>, window_params = [{transform_indices = @transform_0, window_bounds = array<i64: 16, 784>}, {pipeline_mode = #tpu.pipeline_mode<synchronous>, transform_indices = @transform_1, window_bounds = array<i64: 784, 512>}, {pipeline_mode = #tpu.pipeline_mode<synchronous>, transform_indices = @transform_2, window_bounds = array<i64: 1, 512>}, {pipeline_mode = #tpu.pipeline_mode<synchronous>, transform_indices = @transform_3, window_bounds = array<i64: 512, 256>}, {pipeline_mode = #tpu.pipeline_mode<synchronous>, transform_indices = @transform_4, window_bounds = array<i64: 1, 256>}, {pipeline_mode = #tpu.pipeline_mode<synchronous>, transform_indices = @transform_5, window_bounds = array<i64: 256, 128>}, {pipeline_mode = #tpu.pipeline_mode<synchronous>, transform_indices = @transform_6, window_bounds = array<i64: 1, 128>}, {pipeline_mode = #tpu.pipeline_mode<synchronous>, transform_indices = @transform_7, window_bounds = array<i64: 128, 128>}, {pipeline_mode = #tpu.pipeline_mode<synchronous>, transform_indices = @transform_8, window_bounds = array<i64: 1, 128>}, {pipeline_mode = #tpu.pipeline_mode<synchronous>, transform_indices = @transform_9, window_bounds = array<i64: 128, 128>}, {pipeline_mode = #tpu.pipeline_mode<synchronous>, transform_indices = @transform_10, window_bounds = array<i64: 1, 128>}, {transform_indices = @transform_11, window_bounds = array<i64: 16, 128>}]} {
    %c0 = arith.constant 0 : index
    %c0_0 = arith.constant 0 : index
    %0 = vector.load %arg1[%c0, %c0_0] : memref<16x784xf32, #tpu.memory_space<vmem>>, vector<16x784xf32>
    %1 = arith.truncf %0 : vector<16x784xf32> to vector<16x784xbf16>
    %c0_1 = arith.constant 0 : index
    %c0_2 = arith.constant 0 : index
    %2 = vector.load %arg2[%c0_1, %c0_2] : memref<784x512xbf16, #tpu.memory_space<vmem>>, vector<784x512xbf16>
    %cst = arith.constant dense<0.000000e+00> : vector<16x512xf32>
    %3 = tpu.matmul %1, %2, %cst {dimension_numbers = #tpu.dot_dimension_numbers<[1], [0], [0], [1], [0, 0, 1, 1], [], []>} : vector<16x784xbf16>, vector<784x512xbf16>, vector<16x512xf32> -> vector<16x512xf32>
    %c0_3 = arith.constant 0 : index
    %c0_4 = arith.constant 0 : index
    %4 = vector.load %arg3[%c0_3, %c0_4] : memref<1x512xf32, #tpu.memory_space<vmem>>, vector<1x512xf32>
    %5 = vector.broadcast %4 : vector<1x512xf32> to vector<16x512xf32>
    %6 = arith.addf %3, %5 : vector<16x512xf32>
    %cst_5 = arith.constant 0.000000e+00 : f32
    %7 = vector.broadcast %cst_5 : f32 to vector<16x512xf32>
    %8 = arith.maximumf %6, %7 : vector<16x512xf32>
    %9 = arith.truncf %8 : vector<16x512xf32> to vector<16x512xbf16>
    %c0_6 = arith.constant 0 : index
    %c0_7 = arith.constant 0 : index
    %10 = vector.load %arg4[%c0_6, %c0_7] : memref<512x256xbf16, #tpu.memory_space<vmem>>, vector<512x256xbf16>
    %cst_8 = arith.constant dense<0.000000e+00> : vector<16x256xf32>
    %11 = tpu.matmul %9, %10, %cst_8 {dimension_numbers = #tpu.dot_dimension_numbers<[1], [0], [0], [1], [0, 0, 1, 1], [], []>} : vector<16x512xbf16>, vector<512x256xbf16>, vector<16x256xf32> -> vector<16x256xf32>
    %c0_9 = arith.constant 0 : index
    %c0_10 = arith.constant 0 : index
    %12 = vector.load %arg5[%c0_9, %c0_10] : memref<1x256xf32, #tpu.memory_space<vmem>>, vector<1x256xf32>
    %13 = vector.broadcast %12 : vector<1x256xf32> to vector<16x256xf32>
    %14 = arith.addf %11, %13 : vector<16x256xf32>
    %cst_11 = arith.constant 0.000000e+00 : f32
    %15 = vector.broadcast %cst_11 : f32 to vector<16x256xf32>
    %16 = arith.maximumf %14, %15 : vector<16x256xf32>
    %17 = arith.truncf %16 : vector<16x256xf32> to vector<16x256xbf16>
    %c0_12 = arith.constant 0 : index
    %c0_13 = arith.constant 0 : index
    %18 = vector.load %arg6[%c0_12, %c0_13] : memref<256x128xbf16, #tpu.memory_space<vmem>>, vector<256x128xbf16>
    %cst_14 = arith.constant dense<0.000000e+00> : vector<16x128xf32>
    %19 = tpu.matmul %17, %18, %cst_14 {dimension_numbers = #tpu.dot_dimension_numbers<[1], [0], [0], [1], [0, 0, 1, 1], [], []>} : vector<16x256xbf16>, vector<256x128xbf16>, vector<16x128xf32> -> vector<16x128xf32>
    %c0_15 = arith.constant 0 : index
    %c0_16 = arith.constant 0 : index
    %20 = vector.load %arg7[%c0_15, %c0_16] : memref<1x128xf32, #tpu.memory_space<vmem>>, vector<1x128xf32>
    %21 = vector.broadcast %20 : vector<1x128xf32> to vector<16x128xf32>
    %22 = arith.addf %19, %21 : vector<16x128xf32>
    %cst_17 = arith.constant 0.000000e+00 : f32
    %23 = vector.broadcast %cst_17 : f32 to vector<16x128xf32>
    %24 = arith.maximumf %22, %23 : vector<16x128xf32>
    %25 = arith.truncf %24 : vector<16x128xf32> to vector<16x128xbf16>
    %c0_18 = arith.constant 0 : index
    %c0_19 = arith.constant 0 : index
    %26 = vector.load %arg8[%c0_18, %c0_19] : memref<128x128xbf16, #tpu.memory_space<vmem>>, vector<128x128xbf16>
    %cst_20 = arith.constant dense<0.000000e+00> : vector<16x128xf32>
    %27 = tpu.matmul %25, %26, %cst_20 {dimension_numbers = #tpu.dot_dimension_numbers<[1], [0], [0], [1], [0, 0, 1, 1], [], []>} : vector<16x128xbf16>, vector<128x128xbf16>, vector<16x128xf32> -> vector<16x128xf32>
    %c0_21 = arith.constant 0 : index
    %c0_22 = arith.constant 0 : index
    %28 = vector.load %arg9[%c0_21, %c0_22] : memref<1x128xf32, #tpu.memory_space<vmem>>, vector<1x128xf32>
    %29 = vector.broadcast %28 : vector<1x128xf32> to vector<16x128xf32>
    %30 = arith.addf %27, %29 : vector<16x128xf32>
    %cst_23 = arith.constant 0.000000e+00 : f32
    %31 = vector.broadcast %cst_23 : f32 to vector<16x128xf32>
    %32 = arith.maximumf %30, %31 : vector<16x128xf32>
    %33 = arith.truncf %32 : vector<16x128xf32> to vector<16x128xbf16>
    %c0_24 = arith.constant 0 : index
    %c0_25 = arith.constant 0 : index
    %34 = vector.load %arg10[%c0_24, %c0_25] : memref<128x128xbf16, #tpu.memory_space<vmem>>, vector<128x128xbf16>
    %cst_26 = arith.constant dense<0.000000e+00> : vector<16x128xf32>
    %35 = tpu.matmul %33, %34, %cst_26 {dimension_numbers = #tpu.dot_dimension_numbers<[1], [0], [0], [1], [0, 0, 1, 1], [], []>} : vector<16x128xbf16>, vector<128x128xbf16>, vector<16x128xf32> -> vector<16x128xf32>
    %c0_27 = arith.constant 0 : index
    %c0_28 = arith.constant 0 : index
    %36 = vector.load %arg11[%c0_27, %c0_28] : memref<1x128xf32, #tpu.memory_space<vmem>>, vector<1x128xf32>
    %37 = vector.broadcast %36 : vector<1x128xf32> to vector<16x128xf32>
    %38 = arith.addf %35, %37 : vector<16x128xf32>
    %c0_29 = arith.constant 0 : index
    %c0_30 = arith.constant 0 : index
    %39 = vector.load %arg12[%c0_29, %c0_30] : memref<16x128xf32, #tpu.memory_space<vmem>>, vector<16x128xf32>
    tpu.vector_store %arg12[%c0_29, %c0_30], %38 {strides = array<i32>} : memref<16x128xf32, #tpu.memory_space<vmem>>, vector<16x128xf32>,
    return
  }
  func.func @transform_0(%arg0: i32) -> (i32, i32) {
    %c0_i32 = arith.constant 0 : i32
    %c0_i32_0 = arith.constant 0 : i32
    return %arg0, %c0_i32 : i32, i32
  }
  func.func @transform_1(%arg0: i32) -> (i32, i32) {
    %c0_i32 = arith.constant 0 : i32
    %c0_i32_0 = arith.constant 0 : i32
    %c0_i32_1 = arith.constant 0 : i32
    return %c0_i32, %c0_i32_0 : i32, i32
  }
  func.func @transform_2(%arg0: i32) -> (i32, i32) {
    %c0_i32 = arith.constant 0 : i32
    %c0_i32_0 = arith.constant 0 : i32
    %c0_i32_1 = arith.constant 0 : i32
    return %c0_i32, %c0_i32_0 : i32, i32
  }
  func.func @transform_3(%arg0: i32) -> (i32, i32) {
    %c0_i32 = arith.constant 0 : i32
    %c0_i32_0 = arith.constant 0 : i32
    %c0_i32_1 = arith.constant 0 : i32
    return %c0_i32, %c0_i32_0 : i32, i32
  }
  func.func @transform_4(%arg0: i32) -> (i32, i32) {
    %c0_i32 = arith.constant 0 : i32
    %c0_i32_0 = arith.constant 0 : i32
    %c0_i32_1 = arith.constant 0 : i32
    return %c0_i32, %c0_i32_0 : i32, i32
  }
  func.func @transform_5(%arg0: i32) -> (i32, i32) {
    %c0_i32 = arith.constant 0 : i32
    %c0_i32_0 = arith.constant 0 : i32
    %c0_i32_1 = arith.constant 0 : i32
    return %c0_i32, %c0_i32_0 : i32, i32
  }
  func.func @transform_6(%arg0: i32) -> (i32, i32) {
    %c0_i32 = arith.constant 0 : i32
    %c0_i32_0 = arith.constant 0 : i32
    %c0_i32_1 = arith.constant 0 : i32
    return %c0_i32, %c0_i32_0 : i32, i32
  }
  func.func @transform_7(%arg0: i32) -> (i32, i32) {
    %c0_i32 = arith.constant 0 : i32
    %c0_i32_0 = arith.constant 0 : i32
    %c0_i32_1 = arith.constant 0 : i32
    return %c0_i32, %c0_i32_0 : i32, i32
  }
  func.func @transform_8(%arg0: i32) -> (i32, i32) {
    %c0_i32 = arith.constant 0 : i32
    %c0_i32_0 = arith.constant 0 : i32
    %c0_i32_1 = arith.constant 0 : i32
    return %c0_i32, %c0_i32_0 : i32, i32
  }
  func.func @transform_9(%arg0: i32) -> (i32, i32) {
    %c0_i32 = arith.constant 0 : i32
    %c0_i32_0 = arith.constant 0 : i32
    %c0_i32_1 = arith.constant 0 : i32
    return %c0_i32, %c0_i32_0 : i32, i32
  }
  func.func @transform_10(%arg0: i32) -> (i32, i32) {
    %c0_i32 = arith.constant 0 : i32
    %c0_i32_0 = arith.constant 0 : i32
    %c0_i32_1 = arith.constant 0 : i32
    return %c0_i32, %c0_i32_0 : i32, i32
  }
  func.func @transform_11(%arg0: i32) -> (i32, i32) {
    %c0_i32 = arith.constant 0 : i32
    %c0_i32_0 = arith.constant 0 : i32
    return %arg0, %c0_i32 : i32, i32
  }
}

</mosaic_0001>

<llo_original>
// kernel: tpu_custom_call.1
$region0: #{tpu_custom_call.1}
  #allocation0 [shape = 'u32[]', space=smem, size = 0x4, offset = 0x4, fixed_abs, tag = 'smem constant byte address 0x4 - core index']
  #allocation1 [shape = 'u32[72,128]{1,0:T(1,128)}', space=vmem, size = 0x9000, scoped, tag = 'internal scratch']
  %s0 = inlined_call_operand.hbm [shape: f32[16,784], index: 0, kind: input, shape index: {}]
  %s1 = inlined_call_operand.hbm [shape: bf16[784,512], index: 1, kind: input, shape index: {}]
  %s2 = inlined_call_operand.hbm [shape: f32[1,512], index: 2, kind: input, shape index: {}]
  %s3 = inlined_call_operand.hbm [shape: bf16[512,256], index: 3, kind: input, shape index: {}]
  %s4 = inlined_call_operand.vmem [shape: f32[1,256], index: 4, kind: input, shape index: {}]
  %s5 = inlined_call_operand.hbm [shape: bf16[256,128], index: 5, kind: input, shape index: {}]
  %s6 = inlined_call_operand.vmem [shape: f32[1,128], index: 6, kind: input, shape index: {}]
  %s7 = inlined_call_operand.hbm [shape: bf16[128,128], index: 7, kind: input, shape index: {}]
  %s8 = inlined_call_operand.vmem [shape: f32[1,128], index: 8, kind: input, shape index: {}]
  %s9 = inlined_call_operand.hbm [shape: bf16[128,128], index: 9, kind: input, shape index: {}]
  %s10 = inlined_call_operand.vmem [shape: f32[1,128], index: 10, kind: input, shape index: {}]
  %s11 = inlined_call_operand.hbm [shape: f32[16,128], index: 11, kind: output, shape index: {}]
  %s12 = sld [smem:[#allocation0]]
  $region82: #{tpu_custom_call.1} parent=0
    _
  %s14 = ssub.s32 1, %s12
  %s15 = scalar_select 0, %s14, %s12
  $region1: #{tpu_custom_call.1} parent=0
    #allocation2 [shape = 'u8[57344]{0}', space=vmem, size = 0xe000, scoped, tag = 'input window, operand 0, single buffered']
    #allocation3 [shape = 's32[1]{0}', space=sflag, size = 0x4, scoped, tag = 'scoped memory for tpu_custom_call.1']
    #allocation4 [shape = 's32[1]{0}', space=sflag, size = 0x4, scoped, tag = 'scoped memory for tpu_custom_call.1']
    #allocation5 [shape = 'u8[802816]{0}', space=vmem, size = 0xc4000, scoped, tag = 'input window, operand 1, single buffered']
    #allocation6 [shape = 's32[1]{0}', space=sflag, size = 0x4, scoped, tag = 'scoped memory for tpu_custom_call.1']
    #allocation7 [shape = 'u8[2048]{0}', space=vmem, size = 0x800, scoped, tag = 'input window, operand 2, single buffered']
    #allocation8 [shape = 'u8[262144]{0}', space=vmem, size = 0x40000, scoped, tag = 'input window, operand 3, single buffered']
    #allocation9 [shape = 's32[1]{0}', space=sflag, size = 0x4, scoped, tag = 'scoped memory for tpu_custom_call.1']
    #allocation10 [shape = 'u8[65536]{0}', space=vmem, size = 0x10000, scoped, tag = 'input window, operand 5, single buffered']
    #allocation11 [shape = 'u8[32768]{0}', space=vmem, size = 0x8000, scoped, tag = 'input window, operand 7, single buffered']
    #allocation12 [shape = 's32[1]{0}', space=sflag, size = 0x4, scoped, tag = 'scoped memory for tpu_custom_call.1']
    #allocation13 [shape = 'u8[32768]{0}', space=vmem, size = 0x8000, scoped, tag = 'input window, operand 9, single buffered']
    #allocation14 [shape = 'u8[8192]{0}', space=vmem, size = 0x2000, scoped, tag = 'output window, operand 0, single buffered']
    %16 = vsyncpa [#allocation3], 0
    %17 = vsyncpa [#allocation6], 0
    %18 = vsyncpa [#allocation9], 0
    %19 = vsyncpa [#allocation12], 0
    %20 = vsyncpa [#allocation4], 0
    // Predicated region
    $region2: #{tpu_custom_call.1} parent=1 // pred_check
      _
    $region3: #{tpu_custom_call.1} parent=1 // pred_check_branch
      %22 = sbr.rel (0) target = $region5
    $region4: #{tpu_custom_call.1} parent=1 // pred_region
      %24 = vsyncadd [#allocation3], 0
      %s25 = sshll.u32 %s0, 4
      %s26 = int_to_ptr.hbm [resolvable:$true] %s25
      %s27 = sshll.u32 [#allocation2], 4
      %s28 = int_to_ptr.vmem [resolvable:$true] %s27
      %33 = dma.hbm_to_vmem [thread:$0]  %s26, 1792, %s28, [#allocation3], 896, 896, 56
    $region5: #{tpu_custom_call.1} parent=1 // pred_fallthru
      _
    // Predicated region
    $region6: #{tpu_custom_call.1} parent=1 // pred_check
      _
    $region7: #{tpu_custom_call.1} parent=1 // pred_check_branch
      %35 = sbr.rel (0) target = $region9
    $region8: #{tpu_custom_call.1} parent=1 // pred_region
      %37 = vsyncadd [#allocation6], 0
      %s38 = sshll.u32 %s1, 4
      %s39 = int_to_ptr.hbm [resolvable:$true] %s38
      %s40 = sshll.u32 [#allocation5], 4
      %s41 = int_to_ptr.vmem [resolvable:$true] %s40
      %46 = dma.hbm_to_vmem [thread:$0]  %s39, 25088, %s41, [#allocation6], 256, 256, 16
    $region9: #{tpu_custom_call.1} parent=1 // pred_fallthru
      _
    // Predicated region
    $region10: #{tpu_custom_call.1} parent=1 // pred_check
      _
    $region11: #{tpu_custom_call.1} parent=1 // pred_check_branch
      %48 = sbr.rel (0) target = $region13
    $region12: #{tpu_custom_call.1} parent=1 // pred_region
      %50 = vsyncadd [#allocation6], 0
      %s52 = sshll.u32 %s2, 4
      %s53 = int_to_ptr.hbm [resolvable:$true] %s52
      %s54 = sshll.u32 [#allocation7], 4
      %s55 = int_to_ptr.vmem [resolvable:$true] %s54
      %57 = dma.hbm_to_vmem [thread:$0]  %s53, 64, %s55, [#allocation6]
    $region13: #{tpu_custom_call.1} parent=1 // pred_fallthru
      _
    // Predicated region
    $region14: #{tpu_custom_call.1} parent=1 // pred_check
      _
    $region15: #{tpu_custom_call.1} parent=1 // pred_check_branch
      %59 = sbr.rel (0) target = $region17
    $region16: #{tpu_custom_call.1} parent=1 // pred_region
      %61 = vsyncadd [#allocation9], 0
      %s62 = sshll.u32 %s3, 4
      %s63 = int_to_ptr.hbm [resolvable:$true] %s62
      %s64 = sshll.u32 [#allocation8], 4
      %s65 = int_to_ptr.vmem [resolvable:$true] %s64
      %70 = dma.hbm_to_vmem [thread:$0]  %s63, 8192, %s65, [#allocation9], 128, 128, 8
    $region17: #{tpu_custom_call.1} parent=1 // pred_fallthru
      _
    // Predicated region
    $region18: #{tpu_custom_call.1} parent=1 // pred_check
      _
    $region19: #{tpu_custom_call.1} parent=1 // pred_check_branch
      %72 = sbr.rel (0) target = $region21
    $region20: #{tpu_custom_call.1} parent=1 // pred_region
      _
    $region21: #{tpu_custom_call.1} parent=1 // pred_fallthru
      _
    // Predicated region
    $region22: #{tpu_custom_call.1} parent=1 // pred_check
      _
    $region23: #{tpu_custom_call.1} parent=1 // pred_check_branch
      %74 = sbr.rel (0) target = $region25
    $region24: #{tpu_custom_call.1} parent=1 // pred_region
      %76 = vsyncadd [#allocation9], 0
      %s77 = sshll.u32 %s5, 4
      %s78 = int_to_ptr.hbm [resolvable:$true] %s77
      %s79 = sshll.u32 [#allocation10], 4
      %s80 = int_to_ptr.vmem [resolvable:$true] %s79
      %85 = dma.hbm_to_vmem [thread:$0]  %s78, 2048, %s80, [#allocation9], 64, 64, 4
    $region25: #{tpu_custom_call.1} parent=1 // pred_fallthru
      _
    // Predicated region
    $region26: #{tpu_custom_call.1} parent=1 // pred_check
      _
    $region27: #{tpu_custom_call.1} parent=1 // pred_check_branch
      %87 = sbr.rel (0) target = $region29
    $region28: #{tpu_custom_call.1} parent=1 // pred_region
      _
    $region29: #{tpu_custom_call.1} parent=1 // pred_fallthru
      _
    // Predicated region
    $region30: #{tpu_custom_call.1} parent=1 // pred_check
      _
    $region31: #{tpu_custom_call.1} parent=1 // pred_check_branch
      %89 = sbr.rel (0) target = $region33
    $region32: #{tpu_custom_call.1} parent=1 // pred_region
      %91 = vsyncadd [#allocation12], 0
      %s92 = sshll.u32 %s7, 4
      %s93 = int_to_ptr.hbm [resolvable:$true] %s92
      %s94 = sshll.u32 [#allocation11], 4
      %s95 = int_to_ptr.vmem [resolvable:$true] %s94
      %100 = dma.hbm_to_vmem [thread:$0]  %s93, 1024, %s95, [#allocation12], 64, 64, 4
    $region33: #{tpu_custom_call.1} parent=1 // pred_fallthru
      _
    // Predicated region
    $region34: #{tpu_custom_call.1} parent=1 // pred_check
      _
    $region35: #{tpu_custom_call.1} parent=1 // pred_check_branch
      %102 = sbr.rel (0) target = $region37
    $region36: #{tpu_custom_call.1} parent=1 // pred_region
      _
    $region37: #{tpu_custom_call.1} parent=1 // pred_fallthru
      _
    // Predicated region
    $region38: #{tpu_custom_call.1} parent=1 // pred_check
      _
    $region39: #{tpu_custom_call.1} parent=1 // pred_check_branch
      %104 = sbr.rel (0) target = $region41
    $region40: #{tpu_custom_call.1} parent=1 // pred_region
      %106 = vsyncadd [#allocation12], 0
      %s107 = sshll.u32 %s9, 4
      %s108 = int_to_ptr.hbm [resolvable:$true] %s107
      %s109 = sshll.u32 [#allocation13], 4
      %s110 = int_to_ptr.vmem [resolvable:$true] %s109
      %115 = dma.hbm_to_vmem [thread:$0]  %s108, 1024, %s110, [#allocation12], 64, 64, 4
    $region41: #{tpu_custom_call.1} parent=1 // pred_fallthru
      _
    // Predicated region
    $region42: #{tpu_custom_call.1} parent=1 // pred_check
      _
    $region43: #{tpu_custom_call.1} parent=1 // pred_check_branch
      %117 = sbr.rel (0) target = $region45
    $region44: #{tpu_custom_call.1} parent=1 // pred_region
      _
    $region45: #{tpu_custom_call.1} parent=1 // pred_fallthru
      _
    // Predicated region
    $region46: #{tpu_custom_call.1} parent=1 // pred_check
      _
    $region47: #{tpu_custom_call.1} parent=1 // pred_check_branch
      %119 = sbr.rel (0) target = $region49
    $region48: #{tpu_custom_call.1} parent=1 // pred_region
      %121 = dma.done [#allocation3], 1792
    $region49: #{tpu_custom_call.1} parent=1 // pred_fallthru
      _
    // Predicated region
    $region50: #{tpu_custom_call.1} parent=1 // pred_check
      _
    $region51: #{tpu_custom_call.1} parent=1 // pred_check_branch
      %123 = sbr.rel (0) target = $region53
    $region52: #{tpu_custom_call.1} parent=1 // pred_region
      %125 = dma.done [#allocation6], 25088
    $region53: #{tpu_custom_call.1} parent=1 // pred_fallthru
      _
    // Predicated region
    $region54: #{tpu_custom_call.1} parent=1 // pred_check
      _
    $region55: #{tpu_custom_call.1} parent=1 // pred_check_branch
      %127 = sbr.rel (0) target = $region57
    $region56: #{tpu_custom_call.1} parent=1 // pred_region
      %129 = dma.done [#allocation6], 64
    $region57: #{tpu_custom_call.1} parent=1 // pred_fallthru
      _
    // Predicated region
    $region58: #{tpu_custom_call.1} parent=1 // pred_check
      _
    $region59: #{tpu_custom_call.1} parent=1 // pred_check_branch
      %131 = sbr.rel (0) target = $region61
    $region60: #{tpu_custom_call.1} parent=1 // pred_region
      %133 = dma.done [#allocation9], 8192
    $region61: #{tpu_custom_call.1} parent=1 // pred_fallthru
      _
    // Predicated region
    $region62: #{tpu_custom_call.1} parent=1 // pred_check
      _
    $region63: #{tpu_custom_call.1} parent=1 // pred_check_branch
      %135 = sbr.rel (0) target = $region65
    $region64: #{tpu_custom_call.1} parent=1 // pred_region
      %137 = dma.done [#allocation9], 2048
    $region65: #{tpu_custom_call.1} parent=1 // pred_fallthru
      _
    // Predicated region
    $region66: #{tpu_custom_call.1} parent=1 // pred_check
      _
    $region67: #{tpu_custom_call.1} parent=1 // pred_check_branch
      %139 = sbr.rel (0) target = $region69
    $region68: #{tpu_custom_call.1} parent=1 // pred_region
      %141 = dma.done [#allocation12], 1024
    $region69: #{tpu_custom_call.1} parent=1 // pred_fallthru
      _
    // Predicated region
    $region70: #{tpu_custom_call.1} parent=1 // pred_check
      _
    $region71: #{tpu_custom_call.1} parent=1 // pred_check_branch
      %143 = sbr.rel (0) target = $region73
    $region72: #{tpu_custom_call.1} parent=1 // pred_region
      %145 = dma.done [#allocation12], 1024
    $region73: #{tpu_custom_call.1} parent=1 // pred_fallthru
      _
    %v147 = vld [vmem:[#allocation2] sm:$0xff]
    %v148 = vld [vmem:[#allocation2 + $0x8] sm:$0xff]
    %v149 = vld [vmem:[#allocation2 + $0x10] sm:$0xff]
    %v150 = vld [vmem:[#allocation2 + $0x18] sm:$0xff]
    %v151 = vld [vmem:[#allocation2 + $0x20] sm:$0xff]
    %v152 = vld [vmem:[#allocation2 + $0x28] sm:$0xff]
    %v153 = vld [vmem:[#allocation2 + $0x30] sm:$0xff]
    %v154 = vld [vmem:[#allocation2 + $0x38] sm:$0xff]
    %v155 = vld [vmem:[#allocation2 + $0x40] sm:$0xff]
    %v156 = vld [vmem:[#allocation2 + $0x48] sm:$0xff]
    %v157 = vld [vmem:[#allocation2 + $0x50] sm:$0xff]
    %v158 = vld [vmem:[#allocation2 + $0x58] sm:$0xff]
    %v159 = vld [vmem:[#allocation2 + $0x60] sm:$0xff]
    %v160 = vld [vmem:[#allocation2 + $0x68] sm:$0xff]
    %v161 = vpack.c.bf16 %v154, %v147
    %v162 = vpack.c.bf16 %v155, %v148
    %v163 = vpack.c.bf16 %v156, %v149
    %v164 = vpack.c.bf16 %v157, %v150
    %v165 = vpack.c.bf16 %v158, %v151
    %v166 = vpack.c.bf16 %v159, %v152
    %v167 = vpack.c.bf16 %v160, %v153
    %v168 = vld [vmem:[#allocation5] sm:$0xff]
    %v169 = vld [vmem:[#allocation5 + $0x8] sm:$0xff]
    %v170 = vld [vmem:[#allocation5 + $0x10] sm:$0xff]
    %v171 = vld [vmem:[#allocation5 + $0x18] sm:$0xff]
    %v172 = vld [vmem:[#allocation5 + $0x20] sm:$0xff]
    %v173 = vld [vmem:[#allocation5 + $0x28] sm:$0xff]
    %v174 = vld [vmem:[#allocation5 + $0x30] sm:$0xff]
    %v175 = vld [vmem:[#allocation5 + $0x38] sm:$0xff]
    %v176 = vld [vmem:[#allocation5 + $0x40] sm:$0xff]
    %v177 = vld [vmem:[#allocation5 + $0x48] sm:$0xff]
    %v178 = vld [vmem:[#allocation5 + $0x50] sm:$0xff]
    %v179 = vld [vmem:[#allocation5 + $0x58] sm:$0xff]
    %v180 = vld [vmem:[#allocation5 + $0x60] sm:$0xff]
    %v181 = vld [vmem:[#allocation5 + $0x68] sm:$0xff]
    %v182 = vld [vmem:[#allocation5 + $0x70] sm:$0xff]
    %v183 = vld [vmem:[#allocation5 + $0x78] sm:$0xff]
    %v184 = vld [vmem:[#allocation5 + $0x80] sm:$0xff]
    %v185 = vld [vmem:[#allocation5 + $0x88] sm:$0xff]
    %v186 = vld [vmem:[#allocation5 + $0x90] sm:$0xff]
    %v187 = vld [vmem:[#allocation5 + $0x98] sm:$0xff]
    %v188 = vld [vmem:[#allocation5 + $0xa0] sm:$0xff]
    %v189 = vld [vmem:[#allocation5 + $0xa8] sm:$0xff]
    %v190 = vld [vmem:[#allocation5 + $0xb0] sm:$0xff]
    %v191 = vld [vmem:[#allocation5 + $0xb8] sm:$0xff]
    %v192 = vld [vmem:[#allocation5 + $0xc0] sm:$0xff]
    %v193 = vld [vmem:[#allocation5 + $0xc8] sm:$0xff]
    %v194 = vld [vmem:[#allocation5 + $0xd0] sm:$0xff]
    %v195 = vld [vmem:[#allocation5 + $0xd8] sm:$0xff]
    %v196 = vld [vmem:[#allocation5 + $0xe0] sm:$0xff]
    %v197 = vld [vmem:[#allocation5 + $0xe8] sm:$0xff]
    %v198 = vld [vmem:[#allocation5 + $0xf0] sm:$0xff]
    %v199 = vld [vmem:[#allocation5 + $0xf8] sm:$0xff]
    %v200 = vld [vmem:[#allocation5 + $0x100] sm:$0xff]
    %v201 = vld [vmem:[#allocation5 + $0x108] sm:$0xff]
    %v202 = vld [vmem:[#allocation5 + $0x110] sm:$0xff]
    %v203 = vld [vmem:[#allocation5 + $0x118] sm:$0xff]
    %v204 = vld [vmem:[#allocation5 + $0x120] sm:$0xff]
    %v205 = vld [vmem:[#allocation5 + $0x128] sm:$0xff]
    %v206 = vld [vmem:[#allocation5 + $0x130] sm:$0xff]
    %v207 = vld [vmem:[#allocation5 + $0x138] sm:$0xff]
    %v208 = vld [vmem:[#allocation5 + $0x140] sm:$0xff]
    %v209 = vld [vmem:[#allocation5 + $0x148] sm:$0xff]
    %v210 = vld [vmem:[#allocation5 + $0x150] sm:$0xff]
    %v211 = vld [vmem:[#allocation5 + $0x158] sm:$0xff]
    %v212 = vld [vmem:[#allocation5 + $0x160] sm:$0xff]
    %v213 = vld [vmem:[#allocation5 + $0x168] sm:$0xff]
    %v214 = vld [vmem:[#allocation5 + $0x170] sm:$0xff]
    %v215 = vld [vmem:[#allocation5 + $0x178] sm:$0xff]
    %v216 = vld [vmem:[#allocation5 + $0x180] sm:$0xff]
    %v217 = vld [vmem:[#allocation5 + $0x188] sm:$0xff]
    %v218 = vld [vmem:[#allocation5 + $0x190] sm:$0xff]
    %v219 = vld [vmem:[#allocation5 + $0x198] sm:$0xff]
    %v220 = vld [vmem:[#allocation5 + $0x1a0] sm:$0xff]
    %v221 = vld [vmem:[#allocation5 + $0x1a8] sm:$0xff]
    %v222 = vld [vmem:[#allocation5 + $0x1b0] sm:$0xff]
    %v223 = vld [vmem:[#allocation5 + $0x1b8] sm:$0xff]
    %v224 = vld [vmem:[#allocation5 + $0x1c0] sm:$0xff]
    %v225 = vld [vmem:[#allocation5 + $0x1c8] sm:$0xff]
    %v226 = vld [vmem:[#allocation5 + $0x1d0] sm:$0xff]
    %v227 = vld [vmem:[#allocation5 + $0x1d8] sm:$0xff]
    %v228 = vld [vmem:[#allocation5 + $0x1e0] sm:$0xff]
    %v229 = vld [vmem:[#allocation5 + $0x1e8] sm:$0xff]
    %v230 = vld [vmem:[#allocation5 + $0x1f0] sm:$0xff]
    %v231 = vld [vmem:[#allocation5 + $0x1f8] sm:$0xff]
    %v232 = vld [vmem:[#allocation5 + $0x200] sm:$0xff]
    %v233 = vld [vmem:[#allocation5 + $0x208] sm:$0xff]
    %v234 = vld [vmem:[#allocation5 + $0x210] sm:$0xff]
    %v235 = vld [vmem:[#allocation5 + $0x218] sm:$0xff]
    %v236 = vld [vmem:[#allocation5 + $0x220] sm:$0xff]
    %v237 = vld [vmem:[#allocation5 + $0x228] sm:$0xff]
    %v238 = vld [vmem:[#allocation5 + $0x230] sm:$0xff]
    %v239 = vld [vmem:[#allocation5 + $0x238] sm:$0xff]
    %v240 = vld [vmem:[#allocation5 + $0x240] sm:$0xff]
    %v241 = vld [vmem:[#allocation5 + $0x248] sm:$0xff]
    %v242 = vld [vmem:[#allocation5 + $0x250] sm:$0xff]
    %v243 = vld [vmem:[#allocation5 + $0x258] sm:$0xff]
    %v244 = vld [vmem:[#allocation5 + $0x260] sm:$0xff]
    %v245 = vld [vmem:[#allocation5 + $0x268] sm:$0xff]
    %v246 = vld [vmem:[#allocation5 + $0x270] sm:$0xff]
    %v247 = vld [vmem:[#allocation5 + $0x278] sm:$0xff]
    %v248 = vld [vmem:[#allocation5 + $0x280] sm:$0xff]
    %v249 = vld [vmem:[#allocation5 + $0x288] sm:$0xff]
    %v250 = vld [vmem:[#allocation5 + $0x290] sm:$0xff]
    %v251 = vld [vmem:[#allocation5 + $0x298] sm:$0xff]
    %v252 = vld [vmem:[#allocation5 + $0x2a0] sm:$0xff]
    %v253 = vld [vmem:[#allocation5 + $0x2a8] sm:$0xff]
    %v254 = vld [vmem:[#allocation5 + $0x2b0] sm:$0xff]
    %v255 = vld [vmem:[#allocation5 + $0x2b8] sm:$0xff]
    %v256 = vld [vmem:[#allocation5 + $0x2c0] sm:$0xff]
    %v257 = vld [vmem:[#allocation5 + $0x2c8] sm:$0xff]
    %v258 = vld [vmem:[#allocation5 + $0x2d0] sm:$0xff]
    %v259 = vld [vmem:[#allocation5 + $0x2d8] sm:$0xff]
    %v260 = vld [vmem:[#allocation5 + $0x2e0] sm:$0xff]
    %v261 = vld [vmem:[#allocation5 + $0x2e8] sm:$0xff]
    %v262 = vld [vmem:[#allocation5 + $0x2f0] sm:$0xff]
    %v263 = vld [vmem:[#allocation5 + $0x2f8] sm:$0xff]
    %v264 = vld [vmem:[#allocation5 + $0x300] sm:$0xff]
    %v265 = vld [vmem:[#allocation5 + $0x308] sm:$0xff]
    %v266 = vld [vmem:[#allocation5 + $0x310] sm:$0xff]
    %v267 = vld [vmem:[#allocation5 + $0x318] sm:$0xff]
    %v268 = vld [vmem:[#allocation5 + $0x320] sm:$0xff]
    %v269 = vld [vmem:[#allocation5 + $0x328] sm:$0xff]
    %v270 = vld [vmem:[#allocation5 + $0x330] sm:$0xff]
    %v271 = vld [vmem:[#allocation5 + $0x338] sm:$0xff]
    %v272 = vld [vmem:[#allocation5 + $0x340] sm:$0xff]
    %v273 = vld [vmem:[#allocation5 + $0x348] sm:$0xff]
    %v274 = vld [vmem:[#allocation5 + $0x350] sm:$0xff]
    %v275 = vld [vmem:[#allocation5 + $0x358] sm:$0xff]
    %v276 = vld [vmem:[#allocation5 + $0x360] sm:$0xff]
    %v277 = vld [vmem:[#allocation5 + $0x368] sm:$0xff]
    %v278 = vld [vmem:[#allocation5 + $0x370] sm:$0xff]
    %v279 = vld [vmem:[#allocation5 + $0x378] sm:$0xff]
    %v280 = vld [vmem:[#allocation5 + $0x380] sm:$0xff]
    %v281 = vld [vmem:[#allocation5 + $0x388] sm:$0xff]
    %v282 = vld [vmem:[#allocation5 + $0x390] sm:$0xff]
    %v283 = vld [vmem:[#allocation5 + $0x398] sm:$0xff]
    %v284 = vld [vmem:[#allocation5 + $0x3a0] sm:$0xff]
    %v285 = vld [vmem:[#allocation5 + $0x3a8] sm:$0xff]
    %v286 = vld [vmem:[#allocation5 + $0x3b0] sm:$0xff]
    %v287 = vld [vmem:[#allocation5 + $0x3b8] sm:$0xff]
    %v288 = vld [vmem:[#allocation5 + $0x3c0] sm:$0xff]
    %v289 = vld [vmem:[#allocation5 + $0x3c8] sm:$0xff]
    %v290 = vld [vmem:[#allocation5 + $0x3d0] sm:$0xff]
    %v291 = vld [vmem:[#allocation5 + $0x3d8] sm:$0xff]
    %v292 = vld [vmem:[#allocation5 + $0x3e0] sm:$0xff]
    %v293 = vld [vmem:[#allocation5 + $0x3e8] sm:$0xff]
    %v294 = vld [vmem:[#allocation5 + $0x3f0] sm:$0xff]
    %v295 = vld [vmem:[#allocation5 + $0x3f8] sm:$0xff]
    %v296 = vld [vmem:[#allocation5 + $0x400] sm:$0xff]
    %v297 = vld [vmem:[#allocation5 + $0x408] sm:$0xff]
    %v298 = vld [vmem:[#allocation5 + $0x410] sm:$0xff]
    %v299 = vld [vmem:[#allocation5 + $0x418] sm:$0xff]
    %v300 = vld [vmem:[#allocation5 + $0x420] sm:$0xff]
    %v301 = vld [vmem:[#allocation5 + $0x428] sm:$0xff]
    %v302 = vld [vmem:[#allocation5 + $0x430] sm:$0xff]
    %v303 = vld [vmem:[#allocation5 + $0x438] sm:$0xff]
    %v304 = vld [vmem:[#allocation5 + $0x440] sm:$0xff]
    %v305 = vld [vmem:[#allocation5 + $0x448] sm:$0xff]
    %v306 = vld [vmem:[#allocation5 + $0x450] sm:$0xff]
    %v307 = vld [vmem:[#allocation5 + $0x458] sm:$0xff]
    %v308 = vld [vmem:[#allocation5 + $0x460] sm:$0xff]
    %v309 = vld [vmem:[#allocation5 + $0x468] sm:$0xff]
    %v310 = vld [vmem:[#allocation5 + $0x470] sm:$0xff]
    %v311 = vld [vmem:[#allocation5 + $0x478] sm:$0xff]
    %v312 = vld [vmem:[#allocation5 + $0x480] sm:$0xff]
    %v313 = vld [vmem:[#allocation5 + $0x488] sm:$0xff]
    %v314 = vld [vmem:[#allocation5 + $0x490] sm:$0xff]
    %v315 = vld [vmem:[#allocation5 + $0x498] sm:$0xff]
    %v316 = vld [vmem:[#allocation5 + $0x4a0] sm:$0xff]
    %v317 = vld [vmem:[#allocation5 + $0x4a8] sm:$0xff]
    %v318 = vld [vmem:[#allocation5 + $0x4b0] sm:$0xff]
    %v319 = vld [vmem:[#allocation5 + $0x4b8] sm:$0xff]
    %v320 = vld [vmem:[#allocation5 + $0x4c0] sm:$0xff]
    %v321 = vld [vmem:[#allocation5 + $0x4c8] sm:$0xff]
    %v322 = vld [vmem:[#allocation5 + $0x4d0] sm:$0xff]
    %v323 = vld [vmem:[#allocation5 + $0x4d8] sm:$0xff]
    %v324 = vld [vmem:[#allocation5 + $0x4e0] sm:$0xff]
    %v325 = vld [vmem:[#allocation5 + $0x4e8] sm:$0xff]
    %v326 = vld [vmem:[#allocation5 + $0x4f0] sm:$0xff]
    %v327 = vld [vmem:[#allocation5 + $0x4f8] sm:$0xff]
    %v328 = vld [vmem:[#allocation5 + $0x500] sm:$0xff]
    %v329 = vld [vmem:[#allocation5 + $0x508] sm:$0xff]
    %v330 = vld [vmem:[#allocation5 + $0x510] sm:$0xff]
    %v331 = vld [vmem:[#allocation5 + $0x518] sm:$0xff]
    %v332 = vld [vmem:[#allocation5 + $0x520] sm:$0xff]
    %v333 = vld [vmem:[#allocation5 + $0x528] sm:$0xff]
    %v334 = vld [vmem:[#allocation5 + $0x530] sm:$0xff]
    %v335 = vld [vmem:[#allocation5 + $0x538] sm:$0xff]
    %v336 = vld [vmem:[#allocation5 + $0x540] sm:$0xff]
    %v337 = vld [vmem:[#allocation5 + $0x548] sm:$0xff]
    %v338 = vld [vmem:[#allocation5 + $0x550] sm:$0xff]
    %v339 = vld [vmem:[#allocation5 + $0x558] sm:$0xff]
    %v340 = vld [vmem:[#allocation5 + $0x560] sm:$0xff]
    %v341 = vld [vmem:[#allocation5 + $0x568] sm:$0xff]
    %v342 = vld [vmem:[#allocation5 + $0x570] sm:$0xff]
    %v343 = vld [vmem:[#allocation5 + $0x578] sm:$0xff]
    %v344 = vld [vmem:[#allocation5 + $0x580] sm:$0xff]
    %v345 = vld [vmem:[#allocation5 + $0x588] sm:$0xff]
    %v346 = vld [vmem:[#allocation5 + $0x590] sm:$0xff]
    %v347 = vld [vmem:[#allocation5 + $0x598] sm:$0xff]
    %v348 = vld [vmem:[#allocation5 + $0x5a0] sm:$0xff]
    %v349 = vld [vmem:[#allocation5 + $0x5a8] sm:$0xff]
    %v350 = vld [vmem:[#allocation5 + $0x5b0] sm:$0xff]
    %v351 = vld [vmem:[#allocation5 + $0x5b8] sm:$0xff]
    %v352 = vld [vmem:[#allocation5 + $0x5c0] sm:$0xff]
    %v353 = vld [vmem:[#allocation5 + $0x5c8] sm:$0xff]
    %v354 = vld [vmem:[#allocation5 + $0x5d0] sm:$0xff]
    %v355 = vld [vmem:[#allocation5 + $0x5d8] sm:$0xff]
    %v356 = vld [vmem:[#allocation5 + $0x5e0] sm:$0xff]
    %v357 = vld [vmem:[#allocation5 + $0x5e8] sm:$0xff]
    %v358 = vld [vmem:[#allocation5 + $0x5f0] sm:$0xff]
    %v359 = vld [vmem:[#allocation5 + $0x5f8] sm:$0xff]
    %v360 = vld [vmem:[#allocation5 + $0x600] sm:$0xff]
    %v361 = vld [vmem:[#allocation5 + $0x608] sm:$0xff]
    %v362 = vld [vmem:[#allocation5 + $0x610] sm:$0xff]
    %v363 = vld [vmem:[#allocation5 + $0x618] sm:$0xff]
    %v364 = vld [vmem:[#allocation7] sm:$0xf]
    %v366 = vperm.slane %v364, 0
    %v367 = vperm.slane %v364, 1
    %v368 = vperm.slane %v364, 2
    %v369 = vperm.slane %v364, 3
    %v570 = vunpack.c.l.b16 %v168
    %v571 = vunpack.c.h.b16 %v168
    %v572 = vunpack.c.l.b16 %v169
    %v573 = vunpack.c.h.b16 %v169
    %v574 = vunpack.c.l.b16 %v170
    %v575 = vunpack.c.h.b16 %v170
    %v576 = vunpack.c.l.b16 %v171
    %v577 = vunpack.c.h.b16 %v171
    %v578 = vunpack.c.l.b16 %v172
    %v579 = vunpack.c.h.b16 %v172
    %v580 = vunpack.c.l.b16 %v173
    %v581 = vunpack.c.h.b16 %v173
    %v582 = vunpack.c.l.b16 %v174
    %v583 = vunpack.c.h.b16 %v174
    %v584 = vunpack.c.l.b16 %v175
    %v585 = vunpack.c.h.b16 %v175
    %v586 = vunpack.c.l.b16 %v176
    %v587 = vunpack.c.h.b16 %v176
    %v588 = vunpack.c.l.b16 %v177
    %v589 = vunpack.c.h.b16 %v177
    %v590 = vunpack.c.l.b16 %v178
    %v591 = vunpack.c.h.b16 %v178
    %v592 = vunpack.c.l.b16 %v179
    %v593 = vunpack.c.h.b16 %v179
    %v594 = vunpack.c.l.b16 %v180
    %v595 = vunpack.c.h.b16 %v180
    %v596 = vunpack.c.l.b16 %v181
    %v597 = vunpack.c.h.b16 %v181
    %v598 = vunpack.c.l.b16 %v182
    %v599 = vunpack.c.h.b16 %v182
    %v600 = vunpack.c.l.b16 %v183
    %v601 = vunpack.c.h.b16 %v183
    %v602 = vunpack.c.l.b16 %v184
    %v603 = vunpack.c.h.b16 %v184
    %v604 = vunpack.c.l.b16 %v185
    %v605 = vunpack.c.h.b16 %v185
    %v606 = vunpack.c.l.b16 %v186
    %v607 = vunpack.c.h.b16 %v186
    %v608 = vunpack.c.l.b16 %v187
    %v609 = vunpack.c.h.b16 %v187
    %v610 = vunpack.c.l.b16 %v188
    %v611 = vunpack.c.h.b16 %v188
    %v612 = vunpack.c.l.b16 %v189
    %v613 = vunpack.c.h.b16 %v189
    %v614 = vunpack.c.l.b16 %v190
    %v615 = vunpack.c.h.b16 %v190
    %v616 = vunpack.c.l.b16 %v191
    %v617 = vunpack.c.h.b16 %v191
    %v618 = vunpack.c.l.b16 %v192
    %v619 = vunpack.c.h.b16 %v192
    %v620 = vunpack.c.l.b16 %v193
    %v621 = vunpack.c.h.b16 %v193
    %v622 = vunpack.c.l.b16 %v194
    %v623 = vunpack.c.h.b16 %v194
    %v624 = vunpack.c.l.b16 %v195
    %v625 = vunpack.c.h.b16 %v195
    %v626 = vunpack.c.l.b16 %v196
    %v627 = vunpack.c.h.b16 %v196
    %v628 = vunpack.c.l.b16 %v197
    %v629 = vunpack.c.h.b16 %v197
    %v630 = vunpack.c.l.b16 %v198
    %v631 = vunpack.c.h.b16 %v198
    %v632 = vunpack.c.l.b16 %v199
    %v633 = vunpack.c.h.b16 %v199
    %v634 = vunpack.c.l.b16 %v200
    %v635 = vunpack.c.h.b16 %v200
    %v636 = vunpack.c.l.b16 %v201
    %v637 = vunpack.c.h.b16 %v201
    %v638 = vunpack.c.l.b16 %v202
    %v639 = vunpack.c.h.b16 %v202
    %v640 = vunpack.c.l.b16 %v203
    %v641 = vunpack.c.h.b16 %v203
    %v642 = vunpack.c.l.b16 %v204
    %v643 = vunpack.c.h.b16 %v204
    %v644 = vunpack.c.l.b16 %v205
    %v645 = vunpack.c.h.b16 %v205
    %v646 = vunpack.c.l.b16 %v206
    %v647 = vunpack.c.h.b16 %v206
    %v648 = vunpack.c.l.b16 %v207
    %v649 = vunpack.c.h.b16 %v207
    %v650 = vunpack.c.l.b16 %v208
    %v651 = vunpack.c.h.b16 %v208
    %v652 = vunpack.c.l.b16 %v209
    %v653 = vunpack.c.h.b16 %v209
    %v654 = vunpack.c.l.b16 %v210
    %v655 = vunpack.c.h.b16 %v210
    %v656 = vunpack.c.l.b16 %v211
    %v657 = vunpack.c.h.b16 %v211
    %v658 = vunpack.c.l.b16 %v212
    %v659 = vunpack.c.h.b16 %v212
    %v660 = vunpack.c.l.b16 %v213
    %v661 = vunpack.c.h.b16 %v213
    %v662 = vunpack.c.l.b16 %v214
    %v663 = vunpack.c.h.b16 %v214
    %v664 = vunpack.c.l.b16 %v215
    %v665 = vunpack.c.h.b16 %v215
    %v666 = vunpack.c.l.b16 %v216
    %v667 = vunpack.c.h.b16 %v216
    %v668 = vunpack.c.l.b16 %v217
    %v669 = vunpack.c.h.b16 %v217
    %v670 = vunpack.c.l.b16 %v218
    %v671 = vunpack.c.h.b16 %v218
    %v672 = vunpack.c.l.b16 %v219
    %v673 = vunpack.c.h.b16 %v219
    %v674 = vunpack.c.l.b16 %v220
    %v675 = vunpack.c.h.b16 %v220
    %v676 = vunpack.c.l.b16 %v221
    %v677 = vunpack.c.h.b16 %v221
    %v678 = vunpack.c.l.b16 %v222
    %v679 = vunpack.c.h.b16 %v222
    %v680 = vunpack.c.l.b16 %v223
    %v681 = vunpack.c.h.b16 %v223
    %v682 = vunpack.c.l.b16 %v224
    %v683 = vunpack.c.h.b16 %v224
    %v684 = vunpack.c.l.b16 %v225
    %v685 = vunpack.c.h.b16 %v225
    %v686 = vunpack.c.l.b16 %v226
    %v687 = vunpack.c.h.b16 %v226
    %v688 = vunpack.c.l.b16 %v227
    %v689 = vunpack.c.h.b16 %v227
    %v690 = vunpack.c.l.b16 %v228
    %v691 = vunpack.c.h.b16 %v228
    %v692 = vunpack.c.l.b16 %v229
    %v693 = vunpack.c.h.b16 %v229
    %v694 = vunpack.c.l.b16 %v230
    %v695 = vunpack.c.h.b16 %v230
    %v696 = vunpack.c.l.b16 %v231
    %v697 = vunpack.c.h.b16 %v231
    %v698 = vunpack.c.l.b16 %v232
    %v699 = vunpack.c.h.b16 %v232
    %v700 = vunpack.c.l.b16 %v233
    %v701 = vunpack.c.h.b16 %v233
    %v702 = vunpack.c.l.b16 %v234
    %v703 = vunpack.c.h.b16 %v234
    %v704 = vunpack.c.l.b16 %v235
    %v705 = vunpack.c.h.b16 %v235
    %v706 = vunpack.c.l.b16 %v236
    %v707 = vunpack.c.h.b16 %v236
    %v708 = vunpack.c.l.b16 %v237
    %v709 = vunpack.c.h.b16 %v237
    %v710 = vunpack.c.l.b16 %v238
    %v711 = vunpack.c.h.b16 %v238
    %v712 = vunpack.c.l.b16 %v239
    %v713 = vunpack.c.h.b16 %v239
    %v714 = vunpack.c.l.b16 %v240
    %v715 = vunpack.c.h.b16 %v240
    %v716 = vunpack.c.l.b16 %v241
    %v717 = vunpack.c.h.b16 %v241
    %v718 = vunpack.c.l.b16 %v242
    %v719 = vunpack.c.h.b16 %v242
    %v720 = vunpack.c.l.b16 %v243
    %v721 = vunpack.c.h.b16 %v243
    %v722 = vunpack.c.l.b16 %v244
    %v723 = vunpack.c.h.b16 %v244
    %v724 = vunpack.c.l.b16 %v245
    %v725 = vunpack.c.h.b16 %v245
    %v726 = vunpack.c.l.b16 %v246
    %v727 = vunpack.c.h.b16 %v246
    %v728 = vunpack.c.l.b16 %v247
    %v729 = vunpack.c.h.b16 %v247
    %v730 = vunpack.c.l.b16 %v248
    %v731 = vunpack.c.h.b16 %v248
    %v732 = vunpack.c.l.b16 %v249
    %v733 = vunpack.c.h.b16 %v249
    %v734 = vunpack.c.l.b16 %v250
    %v735 = vunpack.c.h.b16 %v250
    %v736 = vunpack.c.l.b16 %v251
    %v737 = vunpack.c.h.b16 %v251
    %v738 = vunpack.c.l.b16 %v252
    %v739 = vunpack.c.h.b16 %v252
    %v740 = vunpack.c.l.b16 %v253
    %v741 = vunpack.c.h.b16 %v253
    %v742 = vunpack.c.l.b16 %v254
    %v743 = vunpack.c.h.b16 %v254
    %v744 = vunpack.c.l.b16 %v255
    %v745 = vunpack.c.h.b16 %v255
    %v746 = vunpack.c.l.b16 %v256
    %v747 = vunpack.c.h.b16 %v256
    %v748 = vunpack.c.l.b16 %v257
    %v749 = vunpack.c.h.b16 %v257
    %v750 = vunpack.c.l.b16 %v258
    %v751 = vunpack.c.h.b16 %v258
    %v752 = vunpack.c.l.b16 %v259
    %v753 = vunpack.c.h.b16 %v259
    %v754 = vunpack.c.l.b16 %v260
    %v755 = vunpack.c.h.b16 %v260
    %v756 = vunpack.c.l.b16 %v261
    %v757 = vunpack.c.h.b16 %v261
    %v758 = vunpack.c.l.b16 %v262
    %v759 = vunpack.c.h.b16 %v262
    %v760 = vunpack.c.l.b16 %v263
    %v761 = vunpack.c.h.b16 %v263
    %v762 = vunpack.c.l.b16 %v264
    %v763 = vunpack.c.h.b16 %v264
    %v764 = vunpack.c.l.b16 %v265
    %v765 = vunpack.c.h.b16 %v265
    %v766 = vunpack.c.l.b16 %v266
    %v767 = vunpack.c.h.b16 %v266
    %v768 = vunpack.c.l.b16 %v267
    %v769 = vunpack.c.h.b16 %v267
    %v770 = vunpack.c.l.b16 %v268
    %v771 = vunpack.c.h.b16 %v268
    %v772 = vunpack.c.l.b16 %v269
    %v773 = vunpack.c.h.b16 %v269
    %v774 = vunpack.c.l.b16 %v270
    %v775 = vunpack.c.h.b16 %v270
    %v776 = vunpack.c.l.b16 %v271
    %v777 = vunpack.c.h.b16 %v271
    %v778 = vunpack.c.l.b16 %v272
    %v779 = vunpack.c.h.b16 %v272
    %v780 = vunpack.c.l.b16 %v273
    %v781 = vunpack.c.h.b16 %v273
    %v782 = vunpack.c.l.b16 %v274
    %v783 = vunpack.c.h.b16 %v274
    %v784 = vunpack.c.l.b16 %v275
    %v785 = vunpack.c.h.b16 %v275
    %v786 = vunpack.c.l.b16 %v276
    %v787 = vunpack.c.h.b16 %v276
    %v788 = vunpack.c.l.b16 %v277
    %v789 = vunpack.c.h.b16 %v277
    %v790 = vunpack.c.l.b16 %v278
    %v791 = vunpack.c.h.b16 %v278
    %v792 = vunpack.c.l.b16 %v279
    %v793 = vunpack.c.h.b16 %v279
    %v794 = vunpack.c.l.b16 %v280
    %v795 = vunpack.c.h.b16 %v280
    %v796 = vunpack.c.l.b16 %v281
    %v797 = vunpack.c.h.b16 %v281
    %v798 = vunpack.c.l.b16 %v282
    %v799 = vunpack.c.h.b16 %v282
    %v800 = vunpack.c.l.b16 %v283
    %v801 = vunpack.c.h.b16 %v283
    %v802 = vunpack.c.l.b16 %v284
    %v803 = vunpack.c.h.b16 %v284
    %v804 = vunpack.c.l.b16 %v285
    %v805 = vunpack.c.h.b16 %v285
    %v806 = vunpack.c.l.b16 %v286
    %v807 = vunpack.c.h.b16 %v286
    %v808 = vunpack.c.l.b16 %v287
    %v809 = vunpack.c.h.b16 %v287
    %v810 = vunpack.c.l.b16 %v288
    %v811 = vunpack.c.h.b16 %v288
    %v812 = vunpack.c.l.b16 %v289
    %v813 = vunpack.c.h.b16 %v289
    %v814 = vunpack.c.l.b16 %v290
    %v815 = vunpack.c.h.b16 %v290
    %v816 = vunpack.c.l.b16 %v291
    %v817 = vunpack.c.h.b16 %v291
    %v818 = vunpack.c.l.b16 %v292
    %v819 = vunpack.c.h.b16 %v292
    %v820 = vunpack.c.l.b16 %v293
    %v821 = vunpack.c.h.b16 %v293
    %v822 = vunpack.c.l.b16 %v294
    %v823 = vunpack.c.h.b16 %v294
    %v824 = vunpack.c.l.b16 %v295
    %v825 = vunpack.c.h.b16 %v295
    %v826 = vunpack.c.l.b16 %v296
    %v827 = vunpack.c.h.b16 %v296
    %v828 = vunpack.c.l.b16 %v297
    %v829 = vunpack.c.h.b16 %v297
    %v830 = vunpack.c.l.b16 %v298
    %v831 = vunpack.c.h.b16 %v298
    %v832 = vunpack.c.l.b16 %v299
    %v833 = vunpack.c.h.b16 %v299
    %v834 = vunpack.c.l.b16 %v300
    %v835 = vunpack.c.h.b16 %v300
    %v836 = vunpack.c.l.b16 %v301
    %v837 = vunpack.c.h.b16 %v301
    %v838 = vunpack.c.l.b16 %v302
    %v839 = vunpack.c.h.b16 %v302
    %v840 = vunpack.c.l.b16 %v303
    %v841 = vunpack.c.h.b16 %v303
    %v842 = vunpack.c.l.b16 %v304
    %v843 = vunpack.c.h.b16 %v304
    %v844 = vunpack.c.l.b16 %v305
    %v845 = vunpack.c.h.b16 %v305
    %v846 = vunpack.c.l.b16 %v306
    %v847 = vunpack.c.h.b16 %v306
    %v848 = vunpack.c.l.b16 %v307
    %v849 = vunpack.c.h.b16 %v307
    %v850 = vunpack.c.l.b16 %v308
    %v851 = vunpack.c.h.b16 %v308
    %v852 = vunpack.c.l.b16 %v309
    %v853 = vunpack.c.h.b16 %v309
    %v854 = vunpack.c.l.b16 %v310
    %v855 = vunpack.c.h.b16 %v310
    %v856 = vunpack.c.l.b16 %v311
    %v857 = vunpack.c.h.b16 %v311
    %v858 = vunpack.c.l.b16 %v312
    %v859 = vunpack.c.h.b16 %v312
    %v860 = vunpack.c.l.b16 %v313
    %v861 = vunpack.c.h.b16 %v313
    %v862 = vunpack.c.l.b16 %v314
    %v863 = vunpack.c.h.b16 %v314
    %v864 = vunpack.c.l.b16 %v315
    %v865 = vunpack.c.h.b16 %v315
    %v866 = vunpack.c.l.b16 %v316
    %v867 = vunpack.c.h.b16 %v316
    %v868 = vunpack.c.l.b16 %v317
    %v869 = vunpack.c.h.b16 %v317
    %v870 = vunpack.c.l.b16 %v318
    %v871 = vunpack.c.h.b16 %v318
    %v872 = vunpack.c.l.b16 %v319
    %v873 = vunpack.c.h.b16 %v319
    %v874 = vunpack.c.l.b16 %v320
    %v875 = vunpack.c.h.b16 %v320
    %v876 = vunpack.c.l.b16 %v321
    %v877 = vunpack.c.h.b16 %v321
    %v878 = vunpack.c.l.b16 %v322
    %v879 = vunpack.c.h.b16 %v322
    %v880 = vunpack.c.l.b16 %v323
    %v881 = vunpack.c.h.b16 %v323
    %v882 = vunpack.c.l.b16 %v324
    %v883 = vunpack.c.h.b16 %v324
    %v884 = vunpack.c.l.b16 %v325
    %v885 = vunpack.c.h.b16 %v325
    %v886 = vunpack.c.l.b16 %v326
    %v887 = vunpack.c.h.b16 %v326
    %v888 = vunpack.c.l.b16 %v327
    %v889 = vunpack.c.h.b16 %v327
    %v890 = vunpack.c.l.b16 %v328
    %v891 = vunpack.c.h.b16 %v328
    %v892 = vunpack.c.l.b16 %v329
    %v893 = vunpack.c.h.b16 %v329
    %v894 = vunpack.c.l.b16 %v330
    %v895 = vunpack.c.h.b16 %v330
    %v896 = vunpack.c.l.b16 %v331
    %v897 = vunpack.c.h.b16 %v331
    %v898 = vunpack.c.l.b16 %v332
    %v899 = vunpack.c.h.b16 %v332
    %v900 = vunpack.c.l.b16 %v333
    %v901 = vunpack.c.h.b16 %v333
    %v902 = vunpack.c.l.b16 %v334
    %v903 = vunpack.c.h.b16 %v334
    %v904 = vunpack.c.l.b16 %v335
    %v905 = vunpack.c.h.b16 %v335
    %v906 = vunpack.c.l.b16 %v336
    %v907 = vunpack.c.h.b16 %v336
    %v908 = vunpack.c.l.b16 %v337
    %v909 = vunpack.c.h.b16 %v337
    %v910 = vunpack.c.l.b16 %v338
    %v911 = vunpack.c.h.b16 %v338
    %v912 = vunpack.c.l.b16 %v339
    %v913 = vunpack.c.h.b16 %v339
    %v914 = vunpack.c.l.b16 %v340
    %v915 = vunpack.c.h.b16 %v340
    %v916 = vunpack.c.l.b16 %v341
    %v917 = vunpack.c.h.b16 %v341
    %v918 = vunpack.c.l.b16 %v342
    %v919 = vunpack.c.h.b16 %v342
    %v920 = vunpack.c.l.b16 %v343
    %v921 = vunpack.c.h.b16 %v343
    %v922 = vunpack.c.l.b16 %v344
    %v923 = vunpack.c.h.b16 %v344
    %v924 = vunpack.c.l.b16 %v345
    %v925 = vunpack.c.h.b16 %v345
    %v926 = vunpack.c.l.b16 %v346
    %v927 = vunpack.c.h.b16 %v346
    %v928 = vunpack.c.l.b16 %v347
    %v929 = vunpack.c.h.b16 %v347
    %v930 = vunpack.c.l.b16 %v348
    %v931 = vunpack.c.h.b16 %v348
    %v932 = vunpack.c.l.b16 %v349
    %v933 = vunpack.c.h.b16 %v349
    %v934 = vunpack.c.l.b16 %v350
    %v935 = vunpack.c.h.b16 %v350
    %v936 = vunpack.c.l.b16 %v351
    %v937 = vunpack.c.h.b16 %v351
    %v938 = vunpack.c.l.b16 %v352
    %v939 = vunpack.c.h.b16 %v352
    %v940 = vunpack.c.l.b16 %v353
    %v941 = vunpack.c.h.b16 %v353
    %v942 = vunpack.c.l.b16 %v354
    %v943 = vunpack.c.h.b16 %v354
    %v944 = vunpack.c.l.b16 %v355
    %v945 = vunpack.c.h.b16 %v355
    %v946 = vunpack.c.l.b16 %v356
    %v947 = vunpack.c.h.b16 %v356
    %v948 = vunpack.c.l.b16 %v357
    %v949 = vunpack.c.h.b16 %v357
    %v950 = vunpack.c.l.b16 %v358
    %v951 = vunpack.c.h.b16 %v358
    %v952 = vunpack.c.l.b16 %v359
    %v953 = vunpack.c.h.b16 %v359
    %v954 = vunpack.c.l.b16 %v360
    %v955 = vunpack.c.h.b16 %v360
    %v956 = vunpack.c.l.b16 %v361
    %v957 = vunpack.c.h.b16 %v361
    %v958 = vunpack.c.l.b16 %v362
    %v959 = vunpack.c.h.b16 %v362
    %v960 = vunpack.c.l.b16 %v363
    %v961 = vunpack.c.h.b16 %v363
    %v962 = vpack.c.b16 %v574, %v570
    %v963 = vpack.c.b16 %v575, %v571
    %v964 = vpack.c.b16 %v576, %v572
    %v965 = vpack.c.b16 %v577, %v573
    %v966 = vpack.c.b16 %v582, %v578
    %v967 = vpack.c.b16 %v583, %v579
    %v968 = vpack.c.b16 %v584, %v580
    %v969 = vpack.c.b16 %v585, %v581
    %v970 = vpack.c.b16 %v590, %v586
    %v971 = vpack.c.b16 %v591, %v587
    %v972 = vpack.c.b16 %v592, %v588
    %v973 = vpack.c.b16 %v593, %v589
    %v974 = vpack.c.b16 %v598, %v594
    %v975 = vpack.c.b16 %v599, %v595
    %v976 = vpack.c.b16 %v600, %v596
    %v977 = vpack.c.b16 %v601, %v597
    %v978 = vpack.c.b16 %v606, %v602
    %v979 = vpack.c.b16 %v607, %v603
    %v980 = vpack.c.b16 %v608, %v604
    %v981 = vpack.c.b16 %v609, %v605
    %v982 = vpack.c.b16 %v614, %v610
    %v983 = vpack.c.b16 %v615, %v611
    %v984 = vpack.c.b16 %v616, %v612
    %v985 = vpack.c.b16 %v617, %v613
    %v986 = vpack.c.b16 %v622, %v618
    %v987 = vpack.c.b16 %v623, %v619
    %v988 = vpack.c.b16 %v624, %v620
    %v989 = vpack.c.b16 %v625, %v621
    %v990 = vpack.c.b16 %v630, %v626
    %v991 = vpack.c.b16 %v631, %v627
    %v992 = vpack.c.b16 %v632, %v628
    %v993 = vpack.c.b16 %v633, %v629
    %v994 = vpack.c.b16 %v638, %v634
    %v995 = vpack.c.b16 %v639, %v635
    %v996 = vpack.c.b16 %v640, %v636
    %v997 = vpack.c.b16 %v641, %v637
    %v998 = vpack.c.b16 %v646, %v642
    %v999 = vpack.c.b16 %v647, %v643
    %v1000 = vpack.c.b16 %v648, %v644
    %v1001 = vpack.c.b16 %v649, %v645
    %v1002 = vpack.c.b16 %v654, %v650
    %v1003 = vpack.c.b16 %v655, %v651
    %v1004 = vpack.c.b16 %v656, %v652
    %v1005 = vpack.c.b16 %v657, %v653
    %v1006 = vpack.c.b16 %v662, %v658
    %v1007 = vpack.c.b16 %v663, %v659
    %v1008 = vpack.c.b16 %v664, %v660
    %v1009 = vpack.c.b16 %v665, %v661
    %v1010 = vpack.c.b16 %v670, %v666
    %v1011 = vpack.c.b16 %v671, %v667
    %v1012 = vpack.c.b16 %v672, %v668
    %v1013 = vpack.c.b16 %v673, %v669
    %v1014 = vpack.c.b16 %v678, %v674
    %v1015 = vpack.c.b16 %v679, %v675
    %v1016 = vpack.c.b16 %v680, %v676
    %v1017 = vpack.c.b16 %v681, %v677
    %v1018 = vpack.c.b16 %v686, %v682
    %v1019 = vpack.c.b16 %v687, %v683
    %v1020 = vpack.c.b16 %v688, %v684
    %v1021 = vpack.c.b16 %v689, %v685
    %v1022 = vpack.c.b16 %v694, %v690
    %v1023 = vpack.c.b16 %v695, %v691
    %v1024 = vpack.c.b16 %v696, %v692
    %v1025 = vpack.c.b16 %v697, %v693
    %v1026 = vpack.c.b16 %v702, %v698
    %v1027 = vpack.c.b16 %v703, %v699
    %v1028 = vpack.c.b16 %v704, %v700
    %v1029 = vpack.c.b16 %v705, %v701
    %v1030 = vpack.c.b16 %v710, %v706
    %v1031 = vpack.c.b16 %v711, %v707
    %v1032 = vpack.c.b16 %v712, %v708
    %v1033 = vpack.c.b16 %v713, %v709
    %v1034 = vpack.c.b16 %v718, %v714
    %v1035 = vpack.c.b16 %v719, %v715
    %v1036 = vpack.c.b16 %v720, %v716
    %v1037 = vpack.c.b16 %v721, %v717
    %v1038 = vpack.c.b16 %v726, %v722
    %v1039 = vpack.c.b16 %v727, %v723
    %v1040 = vpack.c.b16 %v728, %v724
    %v1041 = vpack.c.b16 %v729, %v725
    %v1042 = vpack.c.b16 %v734, %v730
    %v1043 = vpack.c.b16 %v735, %v731
    %v1044 = vpack.c.b16 %v736, %v732
    %v1045 = vpack.c.b16 %v737, %v733
    %v1046 = vpack.c.b16 %v742, %v738
    %v1047 = vpack.c.b16 %v743, %v739
    %v1048 = vpack.c.b16 %v744, %v740
    %v1049 = vpack.c.b16 %v745, %v741
    %v1050 = vpack.c.b16 %v750, %v746
    %v1051 = vpack.c.b16 %v751, %v747
    %v1052 = vpack.c.b16 %v752, %v748
    %v1053 = vpack.c.b16 %v753, %v749
    %v1054 = vpack.c.b16 %v758, %v754
    %v1055 = vpack.c.b16 %v759, %v755
    %v1056 = vpack.c.b16 %v760, %v756
    %v1057 = vpack.c.b16 %v761, %v757
    %v1058 = vpack.c.b16 %v766, %v762
    %v1059 = vpack.c.b16 %v767, %v763
    %v1060 = vpack.c.b16 %v768, %v764
    %v1061 = vpack.c.b16 %v769, %v765
    %v1062 = vpack.c.b16 %v774, %v770
    %v1063 = vpack.c.b16 %v775, %v771
    %v1064 = vpack.c.b16 %v776, %v772
    %v1065 = vpack.c.b16 %v777, %v773
    %v1066 = vpack.c.b16 %v782, %v778
    %v1067 = vpack.c.b16 %v783, %v779
    %v1068 = vpack.c.b16 %v784, %v780
    %v1069 = vpack.c.b16 %v785, %v781
    %v1070 = vpack.c.b16 %v790, %v786
    %v1071 = vpack.c.b16 %v791, %v787
    %v1072 = vpack.c.b16 %v792, %v788
    %v1073 = vpack.c.b16 %v793, %v789
    %v1074 = vpack.c.b16 %v798, %v794
    %v1075 = vpack.c.b16 %v799, %v795
    %v1076 = vpack.c.b16 %v800, %v796
    %v1077 = vpack.c.b16 %v801, %v797
    %v1078 = vpack.c.b16 %v806, %v802
    %v1079 = vpack.c.b16 %v807, %v803
    %v1080 = vpack.c.b16 %v808, %v804
    %v1081 = vpack.c.b16 %v809, %v805
    %v1082 = vpack.c.b16 %v814, %v810
    %v1083 = vpack.c.b16 %v815, %v811
    %v1084 = vpack.c.b16 %v816, %v812
    %v1085 = vpack.c.b16 %v817, %v813
    %v1086 = vpack.c.b16 %v822, %v818
    %v1087 = vpack.c.b16 %v823, %v819
    %v1088 = vpack.c.b16 %v824, %v820
    %v1089 = vpack.c.b16 %v825, %v821
    %v1090 = vpack.c.b16 %v830, %v826
    %v1091 = vpack.c.b16 %v831, %v827
    %v1092 = vpack.c.b16 %v832, %v828
    %v1093 = vpack.c.b16 %v833, %v829
    %v1094 = vpack.c.b16 %v838, %v834
    %v1095 = vpack.c.b16 %v839, %v835
    %v1096 = vpack.c.b16 %v840, %v836
    %v1097 = vpack.c.b16 %v841, %v837
    %v1098 = vpack.c.b16 %v846, %v842
    %v1099 = vpack.c.b16 %v847, %v843
    %v1100 = vpack.c.b16 %v848, %v844
    %v1101 = vpack.c.b16 %v849, %v845
    %v1102 = vpack.c.b16 %v854, %v850
    %v1103 = vpack.c.b16 %v855, %v851
    %v1104 = vpack.c.b16 %v856, %v852
    %v1105 = vpack.c.b16 %v857, %v853
    %v1106 = vpack.c.b16 %v862, %v858
    %v1107 = vpack.c.b16 %v863, %v859
    %v1108 = vpack.c.b16 %v864, %v860
    %v1109 = vpack.c.b16 %v865, %v861
    %v1110 = vpack.c.b16 %v870, %v866
    %v1111 = vpack.c.b16 %v871, %v867
    %v1112 = vpack.c.b16 %v872, %v868
    %v1113 = vpack.c.b16 %v873, %v869
    %v1114 = vpack.c.b16 %v878, %v874
    %v1115 = vpack.c.b16 %v879, %v875
    %v1116 = vpack.c.b16 %v880, %v876
    %v1117 = vpack.c.b16 %v881, %v877
    %v1118 = vpack.c.b16 %v886, %v882
    %v1119 = vpack.c.b16 %v887, %v883
    %v1120 = vpack.c.b16 %v888, %v884
    %v1121 = vpack.c.b16 %v889, %v885
    %v1122 = vpack.c.b16 %v894, %v890
    %v1123 = vpack.c.b16 %v895, %v891
    %v1124 = vpack.c.b16 %v896, %v892
    %v1125 = vpack.c.b16 %v897, %v893
    %v1126 = vpack.c.b16 %v902, %v898
    %v1127 = vpack.c.b16 %v903, %v899
    %v1128 = vpack.c.b16 %v904, %v900
    %v1129 = vpack.c.b16 %v905, %v901
    %v1130 = vpack.c.b16 %v910, %v906
    %v1131 = vpack.c.b16 %v911, %v907
    %v1132 = vpack.c.b16 %v912, %v908
    %v1133 = vpack.c.b16 %v913, %v909
    %v1134 = vpack.c.b16 %v918, %v914
    %v1135 = vpack.c.b16 %v919, %v915
    %v1136 = vpack.c.b16 %v920, %v916
    %v1137 = vpack.c.b16 %v921, %v917
    %v1138 = vpack.c.b16 %v926, %v922
    %v1139 = vpack.c.b16 %v927, %v923
    %v1140 = vpack.c.b16 %v928, %v924
    %v1141 = vpack.c.b16 %v929, %v925
    %v1142 = vpack.c.b16 %v934, %v930
    %v1143 = vpack.c.b16 %v935, %v931
    %v1144 = vpack.c.b16 %v936, %v932
    %v1145 = vpack.c.b16 %v937, %v933
    %v1146 = vpack.c.b16 %v942, %v938
    %v1147 = vpack.c.b16 %v943, %v939
    %v1148 = vpack.c.b16 %v944, %v940
    %v1149 = vpack.c.b16 %v945, %v941
    %v1150 = vpack.c.b16 %v950, %v946
    %v1151 = vpack.c.b16 %v951, %v947
    %v1152 = vpack.c.b16 %v952, %v948
    %v1153 = vpack.c.b16 %v953, %v949
    %v1154 = vpack.c.b16 %v958, %v954
    %v1155 = vpack.c.b16 %v959, %v955
    %v1156 = vpack.c.b16 %v960, %v956
    %v1157 = vpack.c.b16 %v961, %v957
    %vm1354 = vcmask 130048
    %v1356 = vsel %vm1354, %v167, 0
    %1358 = vmatpush.bf16.msra.mxu0 %v990
    %1359 = vmatpush.bf16.msra.mxu0 %v986
    %1360 = vmatpush.bf16.msra.mxu0 %v982
    %1361 = vmatpush.bf16.msra.mxu0 %v978
    %1362 = vmatpush.bf16.msra.mxu0 %v974
    %1363 = vmatpush.bf16.msra.mxu0 %v970
    %1364 = vmatpush.bf16.msra.mxu0 %v966
    %1365 = vmatpush.bf16.msra.mxu0 %v962
    %1366 = vmatmul.bf16.gmra.mxu0 %v161
    %v1367 = vpop.f32.mrf.mxu0
    %v1368 = vadd.f32 %v366, %v1367
    %v1369 = vpop.f32.mrf.mxu0
    %v1370 = vadd.f32 %v366, %v1369
    %1371 = vdwg.mxu0
    %1372 = vmatpush.bf16.msra.mxu0 %v1022
    %1373 = vmatpush.bf16.msra.mxu0 %v1018
    %1374 = vmatpush.bf16.msra.mxu0 %v1014
    %1375 = vmatpush.bf16.msra.mxu0 %v1010
    %1376 = vmatpush.bf16.msra.mxu0 %v1006
    %1377 = vmatpush.bf16.msra.mxu0 %v1002
    %1378 = vmatpush.bf16.msra.mxu0 %v998
    %1379 = vmatpush.bf16.msra.mxu0 %v994
    %1380 = vmatmul.bf16.gmra.mxu0 %v162
    %v1381 = vpop.f32.mrf.mxu0
    %v1382 = vadd.f32 %v1368, %v1381
    %v1383 = vpop.f32.mrf.mxu0
    %v1384 = vadd.f32 %v1370, %v1383
    %1385 = vdwg.mxu0
    %1386 = vmatpush.bf16.msra.mxu0 %v1054
    %1387 = vmatpush.bf16.msra.mxu0 %v1050
    %1388 = vmatpush.bf16.msra.mxu0 %v1046
    %1389 = vmatpush.bf16.msra.mxu0 %v1042
    %1390 = vmatpush.bf16.msra.mxu0 %v1038
    %1391 = vmatpush.bf16.msra.mxu0 %v1034
    %1392 = vmatpush.bf16.msra.mxu0 %v1030
    %1393 = vmatpush.bf16.msra.mxu0 %v1026
    %1394 = vmatmul.bf16.gmra.mxu0 %v163
    %v1395 = vpop.f32.mrf.mxu0
    %v1396 = vadd.f32 %v1382, %v1395
    %v1397 = vpop.f32.mrf.mxu0
    %v1398 = vadd.f32 %v1384, %v1397
    %1399 = vdwg.mxu0
    %1400 = vmatpush.bf16.msra.mxu0 %v1086
    %1401 = vmatpush.bf16.msra.mxu0 %v1082
    %1402 = vmatpush.bf16.msra.mxu0 %v1078
    %1403 = vmatpush.bf16.msra.mxu0 %v1074
    %1404 = vmatpush.bf16.msra.mxu0 %v1070
    %1405 = vmatpush.bf16.msra.mxu0 %v1066
    %1406 = vmatpush.bf16.msra.mxu0 %v1062
    %1407 = vmatpush.bf16.msra.mxu0 %v1058
    %1408 = vmatmul.bf16.gmra.mxu0 %v164
    %v1409 = vpop.f32.mrf.mxu0
    %v1410 = vadd.f32 %v1396, %v1409
    %v1411 = vpop.f32.mrf.mxu0
    %v1412 = vadd.f32 %v1398, %v1411
    %1413 = vdwg.mxu0
    %1414 = vmatpush.bf16.msra.mxu0 %v1118
    %1415 = vmatpush.bf16.msra.mxu0 %v1114
    %1416 = vmatpush.bf16.msra.mxu0 %v1110
    %1417 = vmatpush.bf16.msra.mxu0 %v1106
    %1418 = vmatpush.bf16.msra.mxu0 %v1102
    %1419 = vmatpush.bf16.msra.mxu0 %v1098
    %1420 = vmatpush.bf16.msra.mxu0 %v1094
    %1421 = vmatpush.bf16.msra.mxu0 %v1090
    %1422 = vmatmul.bf16.gmra.mxu0 %v165
    %v1423 = vpop.f32.mrf.mxu0
    %v1424 = vadd.f32 %v1410, %v1423
    %v1425 = vpop.f32.mrf.mxu0
    %v1426 = vadd.f32 %v1412, %v1425
    %1427 = vdwg.mxu0
    %1428 = vmatpush.bf16.msra.mxu0 %v1150
    %1429 = vmatpush.bf16.msra.mxu0 %v1146
    %1430 = vmatpush.bf16.msra.mxu0 %v1142
    %1431 = vmatpush.bf16.msra.mxu0 %v1138
    %1432 = vmatpush.bf16.msra.mxu0 %v1134
    %1433 = vmatpush.bf16.msra.mxu0 %v1130
    %1434 = vmatpush.bf16.msra.mxu0 %v1126
    %1435 = vmatpush.bf16.msra.mxu0 %v1122
    %1436 = vmatmul.bf16.gmra.mxu0 %v166
    %v1437 = vpop.f32.mrf.mxu0
    %v1438 = vadd.f32 %v1424, %v1437
    %v1439 = vpop.f32.mrf.mxu0
    %v1440 = vadd.f32 %v1426, %v1439
    %1441 = vdwg.mxu0
    %1442 = vmatpush.bf16.msra.mxu0 0
    %1443 = vmatpush.bf16.msra.mxu0 0
    %1444 = vmatpush.bf16.msra.mxu0 0
    %1445 = vmatpush.bf16.msra.mxu0 0
    %1446 = vmatpush.bf16.msra.mxu0 0
    %1447 = vmatpush.bf16.msra.mxu0 0
    %1448 = vmatpush.bf16.msra.mxu0 0
    %1449 = vmatpush.bf16.msra.mxu0 %v1154
    %1450 = vmatmul.bf16.gmra.mxu0 %v1356
    %v1451 = vpop.f32.mrf.mxu0
    %v1452 = vadd.f32 %v1438, %v1451
    %v1453 = vpop.f32.mrf.mxu0
    %v1454 = vadd.f32 %v1440, %v1453
    %1455 = vdwg.mxu0
    %1456 = vmatpush.bf16.msra.mxu0 %v991
    %1457 = vmatpush.bf16.msra.mxu0 %v987
    %1458 = vmatpush.bf16.msra.mxu0 %v983
    %1459 = vmatpush.bf16.msra.mxu0 %v979
    %1460 = vmatpush.bf16.msra.mxu0 %v975
    %1461 = vmatpush.bf16.msra.mxu0 %v971
    %1462 = vmatpush.bf16.msra.mxu0 %v967
    %1463 = vmatpush.bf16.msra.mxu0 %v963
    %1464 = vmatmul.bf16.gmra.mxu0 %v161
    %v1465 = vpop.f32.mrf.mxu0
    %v1466 = vadd.f32 %v367, %v1465
    %v1467 = vpop.f32.mrf.mxu0
    %v1468 = vadd.f32 %v367, %v1467
    %1469 = vdwg.mxu0
    %1470 = vmatpush.bf16.msra.mxu0 %v1023
    %1471 = vmatpush.bf16.msra.mxu0 %v1019
    %1472 = vmatpush.bf16.msra.mxu0 %v1015
    %1473 = vmatpush.bf16.msra.mxu0 %v1011
    %1474 = vmatpush.bf16.msra.mxu0 %v1007
    %1475 = vmatpush.bf16.msra.mxu0 %v1003
    %1476 = vmatpush.bf16.msra.mxu0 %v999
    %1477 = vmatpush.bf16.msra.mxu0 %v995
    %1478 = vmatmul.bf16.gmra.mxu0 %v162
    %v1479 = vpop.f32.mrf.mxu0
    %v1480 = vadd.f32 %v1466, %v1479
    %v1481 = vpop.f32.mrf.mxu0
    %v1482 = vadd.f32 %v1468, %v1481
    %1483 = vdwg.mxu0
    %1484 = vmatpush.bf16.msra.mxu0 %v1055
    %1485 = vmatpush.bf16.msra.mxu0 %v1051
    %1486 = vmatpush.bf16.msra.mxu0 %v1047
    %1487 = vmatpush.bf16.msra.mxu0 %v1043
    %1488 = vmatpush.bf16.msra.mxu0 %v1039
    %1489 = vmatpush.bf16.msra.mxu0 %v1035
    %1490 = vmatpush.bf16.msra.mxu0 %v1031
    %1491 = vmatpush.bf16.msra.mxu0 %v1027
    %1492 = vmatmul.bf16.gmra.mxu0 %v163
    %v1493 = vpop.f32.mrf.mxu0
    %v1494 = vadd.f32 %v1480, %v1493
    %v1495 = vpop.f32.mrf.mxu0
    %v1496 = vadd.f32 %v1482, %v1495
    %1497 = vdwg.mxu0
    %1498 = vmatpush.bf16.msra.mxu0 %v1087
    %1499 = vmatpush.bf16.msra.mxu0 %v1083
    %1500 = vmatpush.bf16.msra.mxu0 %v1079
    %1501 = vmatpush.bf16.msra.mxu0 %v1075
    %1502 = vmatpush.bf16.msra.mxu0 %v1071
    %1503 = vmatpush.bf16.msra.mxu0 %v1067
    %1504 = vmatpush.bf16.msra.mxu0 %v1063
    %1505 = vmatpush.bf16.msra.mxu0 %v1059
    %1506 = vmatmul.bf16.gmra.mxu0 %v164
    %v1507 = vpop.f32.mrf.mxu0
    %v1508 = vadd.f32 %v1494, %v1507
    %v1509 = vpop.f32.mrf.mxu0
    %v1510 = vadd.f32 %v1496, %v1509
    %1511 = vdwg.mxu0
    %1512 = vmatpush.bf16.msra.mxu0 %v1119
    %1513 = vmatpush.bf16.msra.mxu0 %v1115
    %1514 = vmatpush.bf16.msra.mxu0 %v1111
    %1515 = vmatpush.bf16.msra.mxu0 %v1107
    %1516 = vmatpush.bf16.msra.mxu0 %v1103
    %1517 = vmatpush.bf16.msra.mxu0 %v1099
    %1518 = vmatpush.bf16.msra.mxu0 %v1095
    %1519 = vmatpush.bf16.msra.mxu0 %v1091
    %1520 = vmatmul.bf16.gmra.mxu0 %v165
    %v1521 = vpop.f32.mrf.mxu0
    %v1522 = vadd.f32 %v1508, %v1521
    %v1523 = vpop.f32.mrf.mxu0
    %v1524 = vadd.f32 %v1510, %v1523
    %1525 = vdwg.mxu0
    %1526 = vmatpush.bf16.msra.mxu0 %v1151
    %1527 = vmatpush.bf16.msra.mxu0 %v1147
    %1528 = vmatpush.bf16.msra.mxu0 %v1143
    %1529 = vmatpush.bf16.msra.mxu0 %v1139
    %1530 = vmatpush.bf16.msra.mxu0 %v1135
    %1531 = vmatpush.bf16.msra.mxu0 %v1131
    %1532 = vmatpush.bf16.msra.mxu0 %v1127
    %1533 = vmatpush.bf16.msra.mxu0 %v1123
    %1534 = vmatmul.bf16.gmra.mxu0 %v166
    %v1535 = vpop.f32.mrf.mxu0
    %v1536 = vadd.f32 %v1522, %v1535
    %v1537 = vpop.f32.mrf.mxu0
    %v1538 = vadd.f32 %v1524, %v1537
    %1539 = vdwg.mxu0
    %1540 = vmatpush.bf16.msra.mxu0 0
    %1541 = vmatpush.bf16.msra.mxu0 0
    %1542 = vmatpush.bf16.msra.mxu0 0
    %1543 = vmatpush.bf16.msra.mxu0 0
    %1544 = vmatpush.bf16.msra.mxu0 0
    %1545 = vmatpush.bf16.msra.mxu0 0
    %1546 = vmatpush.bf16.msra.mxu0 0
    %1547 = vmatpush.bf16.msra.mxu0 %v1155
    %1548 = vmatmul.bf16.gmra.mxu0 %v1356
    %v1549 = vpop.f32.mrf.mxu0
    %v1550 = vadd.f32 %v1536, %v1549
    %v1551 = vpop.f32.mrf.mxu0
    %v1552 = vadd.f32 %v1538, %v1551
    %1553 = vdwg.mxu0
    %1554 = vmatpush.bf16.msra.mxu0 %v992
    %1555 = vmatpush.bf16.msra.mxu0 %v988
    %1556 = vmatpush.bf16.msra.mxu0 %v984
    %1557 = vmatpush.bf16.msra.mxu0 %v980
    %1558 = vmatpush.bf16.msra.mxu0 %v976
    %1559 = vmatpush.bf16.msra.mxu0 %v972
    %1560 = vmatpush.bf16.msra.mxu0 %v968
    %1561 = vmatpush.bf16.msra.mxu0 %v964
    %1562 = vmatmul.bf16.gmra.mxu0 %v161
    %v1563 = vpop.f32.mrf.mxu0
    %v1564 = vadd.f32 %v368, %v1563
    %v1565 = vpop.f32.mrf.mxu0
    %v1566 = vadd.f32 %v368, %v1565
    %1567 = vdwg.mxu0
    %1568 = vmatpush.bf16.msra.mxu0 %v1024
    %1569 = vmatpush.bf16.msra.mxu0 %v1020
    %1570 = vmatpush.bf16.msra.mxu0 %v1016
    %1571 = vmatpush.bf16.msra.mxu0 %v1012
    %1572 = vmatpush.bf16.msra.mxu0 %v1008
    %1573 = vmatpush.bf16.msra.mxu0 %v1004
    %1574 = vmatpush.bf16.msra.mxu0 %v1000
    %1575 = vmatpush.bf16.msra.mxu0 %v996
    %1576 = vmatmul.bf16.gmra.mxu0 %v162
    %v1577 = vpop.f32.mrf.mxu0
    %v1578 = vadd.f32 %v1564, %v1577
    %v1579 = vpop.f32.mrf.mxu0
    %v1580 = vadd.f32 %v1566, %v1579
    %1581 = vdwg.mxu0
    %1582 = vmatpush.bf16.msra.mxu0 %v1056
    %1583 = vmatpush.bf16.msra.mxu0 %v1052
    %1584 = vmatpush.bf16.msra.mxu0 %v1048
    %1585 = vmatpush.bf16.msra.mxu0 %v1044
    %1586 = vmatpush.bf16.msra.mxu0 %v1040
    %1587 = vmatpush.bf16.msra.mxu0 %v1036
    %1588 = vmatpush.bf16.msra.mxu0 %v1032
    %1589 = vmatpush.bf16.msra.mxu0 %v1028
    %1590 = vmatmul.bf16.gmra.mxu0 %v163
    %v1591 = vpop.f32.mrf.mxu0
    %v1592 = vadd.f32 %v1578, %v1591
    %v1593 = vpop.f32.mrf.mxu0
    %v1594 = vadd.f32 %v1580, %v1593
    %1595 = vdwg.mxu0
    %1596 = vmatpush.bf16.msra.mxu0 %v1088
    %1597 = vmatpush.bf16.msra.mxu0 %v1084
    %1598 = vmatpush.bf16.msra.mxu0 %v1080
    %1599 = vmatpush.bf16.msra.mxu0 %v1076
    %1600 = vmatpush.bf16.msra.mxu0 %v1072
    %1601 = vmatpush.bf16.msra.mxu0 %v1068
    %1602 = vmatpush.bf16.msra.mxu0 %v1064
    %1603 = vmatpush.bf16.msra.mxu0 %v1060
    %1604 = vmatmul.bf16.gmra.mxu0 %v164
    %v1605 = vpop.f32.mrf.mxu0
    %v1606 = vadd.f32 %v1592, %v1605
    %v1607 = vpop.f32.mrf.mxu0
    %v1608 = vadd.f32 %v1594, %v1607
    %1609 = vdwg.mxu0
    %1610 = vmatpush.bf16.msra.mxu0 %v1120
    %1611 = vmatpush.bf16.msra.mxu0 %v1116
    %1612 = vmatpush.bf16.msra.mxu0 %v1112
    %1613 = vmatpush.bf16.msra.mxu0 %v1108
    %1614 = vmatpush.bf16.msra.mxu0 %v1104
    %1615 = vmatpush.bf16.msra.mxu0 %v1100
    %1616 = vmatpush.bf16.msra.mxu0 %v1096
    %1617 = vmatpush.bf16.msra.mxu0 %v1092
    %1618 = vmatmul.bf16.gmra.mxu0 %v165
    %v1619 = vpop.f32.mrf.mxu0
    %v1620 = vadd.f32 %v1606, %v1619
    %v1621 = vpop.f32.mrf.mxu0
    %v1622 = vadd.f32 %v1608, %v1621
    %1623 = vdwg.mxu0
    %1624 = vmatpush.bf16.msra.mxu0 %v1152
    %1625 = vmatpush.bf16.msra.mxu0 %v1148
    %1626 = vmatpush.bf16.msra.mxu0 %v1144
    %1627 = vmatpush.bf16.msra.mxu0 %v1140
    %1628 = vmatpush.bf16.msra.mxu0 %v1136
    %1629 = vmatpush.bf16.msra.mxu0 %v1132
    %1630 = vmatpush.bf16.msra.mxu0 %v1128
    %1631 = vmatpush.bf16.msra.mxu0 %v1124
    %1632 = vmatmul.bf16.gmra.mxu0 %v166
    %v1633 = vpop.f32.mrf.mxu0
    %v1634 = vadd.f32 %v1620, %v1633
    %v1635 = vpop.f32.mrf.mxu0
    %v1636 = vadd.f32 %v1622, %v1635
    %1637 = vdwg.mxu0
    %1638 = vmatpush.bf16.msra.mxu0 0
    %1639 = vmatpush.bf16.msra.mxu0 0
    %1640 = vmatpush.bf16.msra.mxu0 0
    %1641 = vmatpush.bf16.msra.mxu0 0
    %1642 = vmatpush.bf16.msra.mxu0 0
    %1643 = vmatpush.bf16.msra.mxu0 0
    %1644 = vmatpush.bf16.msra.mxu0 0
    %1645 = vmatpush.bf16.msra.mxu0 %v1156
    %1646 = vmatmul.bf16.gmra.mxu0 %v1356
    %v1647 = vpop.f32.mrf.mxu0
    %v1648 = vadd.f32 %v1634, %v1647
    %v1649 = vpop.f32.mrf.mxu0
    %v1650 = vadd.f32 %v1636, %v1649
    %1651 = vdwg.mxu0
    %1652 = vmatpush.bf16.msra.mxu0 %v993
    %1653 = vmatpush.bf16.msra.mxu0 %v989
    %1654 = vmatpush.bf16.msra.mxu0 %v985
    %1655 = vmatpush.bf16.msra.mxu0 %v981
    %1656 = vmatpush.bf16.msra.mxu0 %v977
    %1657 = vmatpush.bf16.msra.mxu0 %v973
    %1658 = vmatpush.bf16.msra.mxu0 %v969
    %1659 = vmatpush.bf16.msra.mxu0 %v965
    %1660 = vmatmul.bf16.gmra.mxu0 %v161
    %v1661 = vpop.f32.mrf.mxu0
    %v1662 = vadd.f32 %v369, %v1661
    %v1663 = vpop.f32.mrf.mxu0
    %v1664 = vadd.f32 %v369, %v1663
    %1665 = vdwg.mxu0
    %1666 = vmatpush.bf16.msra.mxu0 %v1025
    %1667 = vmatpush.bf16.msra.mxu0 %v1021
    %1668 = vmatpush.bf16.msra.mxu0 %v1017
    %1669 = vmatpush.bf16.msra.mxu0 %v1013
    %1670 = vmatpush.bf16.msra.mxu0 %v1009
    %1671 = vmatpush.bf16.msra.mxu0 %v1005
    %1672 = vmatpush.bf16.msra.mxu0 %v1001
    %1673 = vmatpush.bf16.msra.mxu0 %v997
    %1674 = vmatmul.bf16.gmra.mxu0 %v162
    %v1675 = vpop.f32.mrf.mxu0
    %v1676 = vadd.f32 %v1662, %v1675
    %v1677 = vpop.f32.mrf.mxu0
    %v1678 = vadd.f32 %v1664, %v1677
    %1679 = vdwg.mxu0
    %1680 = vmatpush.bf16.msra.mxu0 %v1057
    %1681 = vmatpush.bf16.msra.mxu0 %v1053
    %1682 = vmatpush.bf16.msra.mxu0 %v1049
    %1683 = vmatpush.bf16.msra.mxu0 %v1045
    %1684 = vmatpush.bf16.msra.mxu0 %v1041
    %1685 = vmatpush.bf16.msra.mxu0 %v1037
    %1686 = vmatpush.bf16.msra.mxu0 %v1033
    %1687 = vmatpush.bf16.msra.mxu0 %v1029
    %1688 = vmatmul.bf16.gmra.mxu0 %v163
    %v1689 = vpop.f32.mrf.mxu0
    %v1690 = vadd.f32 %v1676, %v1689
    %v1691 = vpop.f32.mrf.mxu0
    %v1692 = vadd.f32 %v1678, %v1691
    %1693 = vdwg.mxu0
    %1694 = vmatpush.bf16.msra.mxu0 %v1089
    %1695 = vmatpush.bf16.msra.mxu0 %v1085
    %1696 = vmatpush.bf16.msra.mxu0 %v1081
    %1697 = vmatpush.bf16.msra.mxu0 %v1077
    %1698 = vmatpush.bf16.msra.mxu0 %v1073
    %1699 = vmatpush.bf16.msra.mxu0 %v1069
    %1700 = vmatpush.bf16.msra.mxu0 %v1065
    %1701 = vmatpush.bf16.msra.mxu0 %v1061
    %1702 = vmatmul.bf16.gmra.mxu0 %v164
    %v1703 = vpop.f32.mrf.mxu0
    %v1704 = vadd.f32 %v1690, %v1703
    %v1705 = vpop.f32.mrf.mxu0
    %v1706 = vadd.f32 %v1692, %v1705
    %1707 = vdwg.mxu0
    %1708 = vmatpush.bf16.msra.mxu0 %v1121
    %1709 = vmatpush.bf16.msra.mxu0 %v1117
    %1710 = vmatpush.bf16.msra.mxu0 %v1113
    %1711 = vmatpush.bf16.msra.mxu0 %v1109
    %1712 = vmatpush.bf16.msra.mxu0 %v1105
    %1713 = vmatpush.bf16.msra.mxu0 %v1101
    %1714 = vmatpush.bf16.msra.mxu0 %v1097
    %1715 = vmatpush.bf16.msra.mxu0 %v1093
    %1716 = vmatmul.bf16.gmra.mxu0 %v165
    %v1717 = vpop.f32.mrf.mxu0
    %v1718 = vadd.f32 %v1704, %v1717
    %v1719 = vpop.f32.mrf.mxu0
    %v1720 = vadd.f32 %v1706, %v1719
    %1721 = vdwg.mxu0
    %1722 = vmatpush.bf16.msra.mxu0 %v1153
    %1723 = vmatpush.bf16.msra.mxu0 %v1149
    %1724 = vmatpush.bf16.msra.mxu0 %v1145
    %1725 = vmatpush.bf16.msra.mxu0 %v1141
    %1726 = vmatpush.bf16.msra.mxu0 %v1137
    %1727 = vmatpush.bf16.msra.mxu0 %v1133
    %1728 = vmatpush.bf16.msra.mxu0 %v1129
    %1729 = vmatpush.bf16.msra.mxu0 %v1125
    %1730 = vmatmul.bf16.gmra.mxu0 %v166
    %v1731 = vpop.f32.mrf.mxu0
    %v1732 = vadd.f32 %v1718, %v1731
    %v1733 = vpop.f32.mrf.mxu0
    %v1734 = vadd.f32 %v1720, %v1733
    %1735 = vdwg.mxu0
    %1736 = vmatpush.bf16.msra.mxu0 0
    %1737 = vmatpush.bf16.msra.mxu0 0
    %1738 = vmatpush.bf16.msra.mxu0 0
    %1739 = vmatpush.bf16.msra.mxu0 0
    %1740 = vmatpush.bf16.msra.mxu0 0
    %1741 = vmatpush.bf16.msra.mxu0 0
    %1742 = vmatpush.bf16.msra.mxu0 0
    %1743 = vmatpush.bf16.msra.mxu0 %v1157
    %1744 = vmatmul.bf16.gmra.mxu0 %v1356
    %v1745 = vpop.f32.mrf.mxu0
    %v1746 = vadd.f32 %v1732, %v1745
    %v1747 = vpop.f32.mrf.mxu0
    %v1748 = vadd.f32 %v1734, %v1747
    %1749 = vdwg.mxu0
    %v1750 = vmax.f32 %v1452, 0.0
    %v1751 = vmax.f32 %v1550, 0.0
    %v1752 = vmax.f32 %v1648, 0.0
    %v1753 = vmax.f32 %v1746, 0.0
    %v1754 = vmax.f32 %v1454, 0.0
    %v1755 = vmax.f32 %v1552, 0.0
    %v1756 = vmax.f32 %v1650, 0.0
    %v1757 = vmax.f32 %v1748, 0.0
    %v1758 = vpack.c.bf16 %v1754, %v1750
    %v1759 = vpack.c.bf16 %v1755, %v1751
    %v1760 = vpack.c.bf16 %v1756, %v1752
    %v1761 = vpack.c.bf16 %v1757, %v1753
    %v1762 = vld [vmem:[#allocation8] sm:$0xff]
    %v1763 = vld [vmem:[#allocation8 + $0x8] sm:$0xff]
    %v1764 = vld [vmem:[#allocation8 + $0x10] sm:$0xff]
    %v1765 = vld [vmem:[#allocation8 + $0x18] sm:$0xff]
    %v1766 = vld [vmem:[#allocation8 + $0x20] sm:$0xff]
    %v1767 = vld [vmem:[#allocation8 + $0x28] sm:$0xff]
    %v1768 = vld [vmem:[#allocation8 + $0x30] sm:$0xff]
    %v1769 = vld [vmem:[#allocation8 + $0x38] sm:$0xff]
    %v1770 = vld [vmem:[#allocation8 + $0x40] sm:$0xff]
    %v1771 = vld [vmem:[#allocation8 + $0x48] sm:$0xff]
    %v1772 = vld [vmem:[#allocation8 + $0x50] sm:$0xff]
    %v1773 = vld [vmem:[#allocation8 + $0x58] sm:$0xff]
    %v1774 = vld [vmem:[#allocation8 + $0x60] sm:$0xff]
    %v1775 = vld [vmem:[#allocation8 + $0x68] sm:$0xff]
    %v1776 = vld [vmem:[#allocation8 + $0x70] sm:$0xff]
    %v1777 = vld [vmem:[#allocation8 + $0x78] sm:$0xff]
    %v1778 = vld [vmem:[#allocation8 + $0x80] sm:$0xff]
    %v1779 = vld [vmem:[#allocation8 + $0x88] sm:$0xff]
    %v1780 = vld [vmem:[#allocation8 + $0x90] sm:$0xff]
    %v1781 = vld [vmem:[#allocation8 + $0x98] sm:$0xff]
    %v1782 = vld [vmem:[#allocation8 + $0xa0] sm:$0xff]
    %v1783 = vld [vmem:[#allocation8 + $0xa8] sm:$0xff]
    %v1784 = vld [vmem:[#allocation8 + $0xb0] sm:$0xff]
    %v1785 = vld [vmem:[#allocation8 + $0xb8] sm:$0xff]
    %v1786 = vld [vmem:[#allocation8 + $0xc0] sm:$0xff]
    %v1787 = vld [vmem:[#allocation8 + $0xc8] sm:$0xff]
    %v1788 = vld [vmem:[#allocation8 + $0xd0] sm:$0xff]
    %v1789 = vld [vmem:[#allocation8 + $0xd8] sm:$0xff]
    %v1790 = vld [vmem:[#allocation8 + $0xe0] sm:$0xff]
    %v1791 = vld [vmem:[#allocation8 + $0xe8] sm:$0xff]
    %v1792 = vld [vmem:[#allocation8 + $0xf0] sm:$0xff]
    %v1793 = vld [vmem:[#allocation8 + $0xf8] sm:$0xff]
    %v1794 = vld [vmem:[#allocation8 + $0x100] sm:$0xff]
    %v1795 = vld [vmem:[#allocation8 + $0x108] sm:$0xff]
    %v1796 = vld [vmem:[#allocation8 + $0x110] sm:$0xff]
    %v1797 = vld [vmem:[#allocation8 + $0x118] sm:$0xff]
    %v1798 = vld [vmem:[#allocation8 + $0x120] sm:$0xff]
    %v1799 = vld [vmem:[#allocation8 + $0x128] sm:$0xff]
    %v1800 = vld [vmem:[#allocation8 + $0x130] sm:$0xff]
    %v1801 = vld [vmem:[#allocation8 + $0x138] sm:$0xff]
    %v1802 = vld [vmem:[#allocation8 + $0x140] sm:$0xff]
    %v1803 = vld [vmem:[#allocation8 + $0x148] sm:$0xff]
    %v1804 = vld [vmem:[#allocation8 + $0x150] sm:$0xff]
    %v1805 = vld [vmem:[#allocation8 + $0x158] sm:$0xff]
    %v1806 = vld [vmem:[#allocation8 + $0x160] sm:$0xff]
    %v1807 = vld [vmem:[#allocation8 + $0x168] sm:$0xff]
    %v1808 = vld [vmem:[#allocation8 + $0x170] sm:$0xff]
    %v1809 = vld [vmem:[#allocation8 + $0x178] sm:$0xff]
    %v1810 = vld [vmem:[#allocation8 + $0x180] sm:$0xff]
    %v1811 = vld [vmem:[#allocation8 + $0x188] sm:$0xff]
    %v1812 = vld [vmem:[#allocation8 + $0x190] sm:$0xff]
    %v1813 = vld [vmem:[#allocation8 + $0x198] sm:$0xff]
    %v1814 = vld [vmem:[#allocation8 + $0x1a0] sm:$0xff]
    %v1815 = vld [vmem:[#allocation8 + $0x1a8] sm:$0xff]
    %v1816 = vld [vmem:[#allocation8 + $0x1b0] sm:$0xff]
    %v1817 = vld [vmem:[#allocation8 + $0x1b8] sm:$0xff]
    %v1818 = vld [vmem:[#allocation8 + $0x1c0] sm:$0xff]
    %v1819 = vld [vmem:[#allocation8 + $0x1c8] sm:$0xff]
    %v1820 = vld [vmem:[#allocation8 + $0x1d0] sm:$0xff]
    %v1821 = vld [vmem:[#allocation8 + $0x1d8] sm:$0xff]
    %v1822 = vld [vmem:[#allocation8 + $0x1e0] sm:$0xff]
    %v1823 = vld [vmem:[#allocation8 + $0x1e8] sm:$0xff]
    %v1824 = vld [vmem:[#allocation8 + $0x1f0] sm:$0xff]
    %v1825 = vld [vmem:[#allocation8 + $0x1f8] sm:$0xff]
    %v1826 = vld [vmem:[%s4] sm:$0x3]
    %v1828 = vperm.slane %v1826, 0
    %v1829 = vperm.slane %v1826, 1
    %v1896 = vunpack.c.l.b16 %v1762
    %v1897 = vunpack.c.h.b16 %v1762
    %v1898 = vunpack.c.l.b16 %v1763
    %v1899 = vunpack.c.h.b16 %v1763
    %v1900 = vunpack.c.l.b16 %v1764
    %v1901 = vunpack.c.h.b16 %v1764
    %v1902 = vunpack.c.l.b16 %v1765
    %v1903 = vunpack.c.h.b16 %v1765
    %v1904 = vunpack.c.l.b16 %v1766
    %v1905 = vunpack.c.h.b16 %v1766
    %v1906 = vunpack.c.l.b16 %v1767
    %v1907 = vunpack.c.h.b16 %v1767
    %v1908 = vunpack.c.l.b16 %v1768
    %v1909 = vunpack.c.h.b16 %v1768
    %v1910 = vunpack.c.l.b16 %v1769
    %v1911 = vunpack.c.h.b16 %v1769
    %v1912 = vunpack.c.l.b16 %v1770
    %v1913 = vunpack.c.h.b16 %v1770
    %v1914 = vunpack.c.l.b16 %v1771
    %v1915 = vunpack.c.h.b16 %v1771
    %v1916 = vunpack.c.l.b16 %v1772
    %v1917 = vunpack.c.h.b16 %v1772
    %v1918 = vunpack.c.l.b16 %v1773
    %v1919 = vunpack.c.h.b16 %v1773
    %v1920 = vunpack.c.l.b16 %v1774
    %v1921 = vunpack.c.h.b16 %v1774
    %v1922 = vunpack.c.l.b16 %v1775
    %v1923 = vunpack.c.h.b16 %v1775
    %v1924 = vunpack.c.l.b16 %v1776
    %v1925 = vunpack.c.h.b16 %v1776
    %v1926 = vunpack.c.l.b16 %v1777
    %v1927 = vunpack.c.h.b16 %v1777
    %v1928 = vunpack.c.l.b16 %v1778
    %v1929 = vunpack.c.h.b16 %v1778
    %v1930 = vunpack.c.l.b16 %v1779
    %v1931 = vunpack.c.h.b16 %v1779
    %v1932 = vunpack.c.l.b16 %v1780
    %v1933 = vunpack.c.h.b16 %v1780
    %v1934 = vunpack.c.l.b16 %v1781
    %v1935 = vunpack.c.h.b16 %v1781
    %v1936 = vunpack.c.l.b16 %v1782
    %v1937 = vunpack.c.h.b16 %v1782
    %v1938 = vunpack.c.l.b16 %v1783
    %v1939 = vunpack.c.h.b16 %v1783
    %v1940 = vunpack.c.l.b16 %v1784
    %v1941 = vunpack.c.h.b16 %v1784
    %v1942 = vunpack.c.l.b16 %v1785
    %v1943 = vunpack.c.h.b16 %v1785
    %v1944 = vunpack.c.l.b16 %v1786
    %v1945 = vunpack.c.h.b16 %v1786
    %v1946 = vunpack.c.l.b16 %v1787
    %v1947 = vunpack.c.h.b16 %v1787
    %v1948 = vunpack.c.l.b16 %v1788
    %v1949 = vunpack.c.h.b16 %v1788
    %v1950 = vunpack.c.l.b16 %v1789
    %v1951 = vunpack.c.h.b16 %v1789
    %v1952 = vunpack.c.l.b16 %v1790
    %v1953 = vunpack.c.h.b16 %v1790
    %v1954 = vunpack.c.l.b16 %v1791
    %v1955 = vunpack.c.h.b16 %v1791
    %v1956 = vunpack.c.l.b16 %v1792
    %v1957 = vunpack.c.h.b16 %v1792
    %v1958 = vunpack.c.l.b16 %v1793
    %v1959 = vunpack.c.h.b16 %v1793
    %v1960 = vunpack.c.l.b16 %v1794
    %v1961 = vunpack.c.h.b16 %v1794
    %v1962 = vunpack.c.l.b16 %v1795
    %v1963 = vunpack.c.h.b16 %v1795
    %v1964 = vunpack.c.l.b16 %v1796
    %v1965 = vunpack.c.h.b16 %v1796
    %v1966 = vunpack.c.l.b16 %v1797
    %v1967 = vunpack.c.h.b16 %v1797
    %v1968 = vunpack.c.l.b16 %v1798
    %v1969 = vunpack.c.h.b16 %v1798
    %v1970 = vunpack.c.l.b16 %v1799
    %v1971 = vunpack.c.h.b16 %v1799
    %v1972 = vunpack.c.l.b16 %v1800
    %v1973 = vunpack.c.h.b16 %v1800
    %v1974 = vunpack.c.l.b16 %v1801
    %v1975 = vunpack.c.h.b16 %v1801
    %v1976 = vunpack.c.l.b16 %v1802
    %v1977 = vunpack.c.h.b16 %v1802
    %v1978 = vunpack.c.l.b16 %v1803
    %v1979 = vunpack.c.h.b16 %v1803
    %v1980 = vunpack.c.l.b16 %v1804
    %v1981 = vunpack.c.h.b16 %v1804
    %v1982 = vunpack.c.l.b16 %v1805
    %v1983 = vunpack.c.h.b16 %v1805
    %v1984 = vunpack.c.l.b16 %v1806
    %v1985 = vunpack.c.h.b16 %v1806
    %v1986 = vunpack.c.l.b16 %v1807
    %v1987 = vunpack.c.h.b16 %v1807
    %v1988 = vunpack.c.l.b16 %v1808
    %v1989 = vunpack.c.h.b16 %v1808
    %v1990 = vunpack.c.l.b16 %v1809
    %v1991 = vunpack.c.h.b16 %v1809
    %v1992 = vunpack.c.l.b16 %v1810
    %v1993 = vunpack.c.h.b16 %v1810
    %v1994 = vunpack.c.l.b16 %v1811
    %v1995 = vunpack.c.h.b16 %v1811
    %v1996 = vunpack.c.l.b16 %v1812
    %v1997 = vunpack.c.h.b16 %v1812
    %v1998 = vunpack.c.l.b16 %v1813
    %v1999 = vunpack.c.h.b16 %v1813
    %v2000 = vunpack.c.l.b16 %v1814
    %v2001 = vunpack.c.h.b16 %v1814
    %v2002 = vunpack.c.l.b16 %v1815
    %v2003 = vunpack.c.h.b16 %v1815
    %v2004 = vunpack.c.l.b16 %v1816
    %v2005 = vunpack.c.h.b16 %v1816
    %v2006 = vunpack.c.l.b16 %v1817
    %v2007 = vunpack.c.h.b16 %v1817
    %v2008 = vunpack.c.l.b16 %v1818
    %v2009 = vunpack.c.h.b16 %v1818
    %v2010 = vunpack.c.l.b16 %v1819
    %v2011 = vunpack.c.h.b16 %v1819
    %v2012 = vunpack.c.l.b16 %v1820
    %v2013 = vunpack.c.h.b16 %v1820
    %v2014 = vunpack.c.l.b16 %v1821
    %v2015 = vunpack.c.h.b16 %v1821
    %v2016 = vunpack.c.l.b16 %v1822
    %v2017 = vunpack.c.h.b16 %v1822
    %v2018 = vunpack.c.l.b16 %v1823
    %v2019 = vunpack.c.h.b16 %v1823
    %v2020 = vunpack.c.l.b16 %v1824
    %v2021 = vunpack.c.h.b16 %v1824
    %v2022 = vunpack.c.l.b16 %v1825
    %v2023 = vunpack.c.h.b16 %v1825
    %v2024 = vpack.c.b16 %v1898, %v1896
    %v2025 = vpack.c.b16 %v1899, %v1897
    %v2026 = vpack.c.b16 %v1902, %v1900
    %v2027 = vpack.c.b16 %v1903, %v1901
    %v2028 = vpack.c.b16 %v1906, %v1904
    %v2029 = vpack.c.b16 %v1907, %v1905
    %v2030 = vpack.c.b16 %v1910, %v1908
    %v2031 = vpack.c.b16 %v1911, %v1909
    %v2032 = vpack.c.b16 %v1914, %v1912
    %v2033 = vpack.c.b16 %v1915, %v1913
    %v2034 = vpack.c.b16 %v1918, %v1916
    %v2035 = vpack.c.b16 %v1919, %v1917
    %v2036 = vpack.c.b16 %v1922, %v1920
    %v2037 = vpack.c.b16 %v1923, %v1921
    %v2038 = vpack.c.b16 %v1926, %v1924
    %v2039 = vpack.c.b16 %v1927, %v1925
    %v2040 = vpack.c.b16 %v1930, %v1928
    %v2041 = vpack.c.b16 %v1931, %v1929
    %v2042 = vpack.c.b16 %v1934, %v1932
    %v2043 = vpack.c.b16 %v1935, %v1933
    %v2044 = vpack.c.b16 %v1938, %v1936
    %v2045 = vpack.c.b16 %v1939, %v1937
    %v2046 = vpack.c.b16 %v1942, %v1940
    %v2047 = vpack.c.b16 %v1943, %v1941
    %v2048 = vpack.c.b16 %v1946, %v1944
    %v2049 = vpack.c.b16 %v1947, %v1945
    %v2050 = vpack.c.b16 %v1950, %v1948
    %v2051 = vpack.c.b16 %v1951, %v1949
    %v2052 = vpack.c.b16 %v1954, %v1952
    %v2053 = vpack.c.b16 %v1955, %v1953
    %v2054 = vpack.c.b16 %v1958, %v1956
    %v2055 = vpack.c.b16 %v1959, %v1957
    %v2056 = vpack.c.b16 %v1962, %v1960
    %v2057 = vpack.c.b16 %v1963, %v1961
    %v2058 = vpack.c.b16 %v1966, %v1964
    %v2059 = vpack.c.b16 %v1967, %v1965
    %v2060 = vpack.c.b16 %v1970, %v1968
    %v2061 = vpack.c.b16 %v1971, %v1969
    %v2062 = vpack.c.b16 %v1974, %v1972
    %v2063 = vpack.c.b16 %v1975, %v1973
    %v2064 = vpack.c.b16 %v1978, %v1976
    %v2065 = vpack.c.b16 %v1979, %v1977
    %v2066 = vpack.c.b16 %v1982, %v1980
    %v2067 = vpack.c.b16 %v1983, %v1981
    %v2068 = vpack.c.b16 %v1986, %v1984
    %v2069 = vpack.c.b16 %v1987, %v1985
    %v2070 = vpack.c.b16 %v1990, %v1988
    %v2071 = vpack.c.b16 %v1991, %v1989
    %v2072 = vpack.c.b16 %v1994, %v1992
    %v2073 = vpack.c.b16 %v1995, %v1993
    %v2074 = vpack.c.b16 %v1998, %v1996
    %v2075 = vpack.c.b16 %v1999, %v1997
    %v2076 = vpack.c.b16 %v2002, %v2000
    %v2077 = vpack.c.b16 %v2003, %v2001
    %v2078 = vpack.c.b16 %v2006, %v2004
    %v2079 = vpack.c.b16 %v2007, %v2005
    %v2080 = vpack.c.b16 %v2010, %v2008
    %v2081 = vpack.c.b16 %v2011, %v2009
    %v2082 = vpack.c.b16 %v2014, %v2012
    %v2083 = vpack.c.b16 %v2015, %v2013
    %v2084 = vpack.c.b16 %v2018, %v2016
    %v2085 = vpack.c.b16 %v2019, %v2017
    %v2086 = vpack.c.b16 %v2022, %v2020
    %v2087 = vpack.c.b16 %v2023, %v2021
    %2152 = vmatpush.bf16.msra.mxu0 %v2038
    %2153 = vmatpush.bf16.msra.mxu0 %v2036
    %2154 = vmatpush.bf16.msra.mxu0 %v2034
    %2155 = vmatpush.bf16.msra.mxu0 %v2032
    %2156 = vmatpush.bf16.msra.mxu0 %v2030
    %2157 = vmatpush.bf16.msra.mxu0 %v2028
    %2158 = vmatpush.bf16.msra.mxu0 %v2026
    %2159 = vmatpush.bf16.msra.mxu0 %v2024
    %2160 = vmatmul.bf16.gmra.mxu0 %v1758
    %v2161 = vpop.f32.mrf.mxu0
    %v2162 = vadd.f32 %v1828, %v2161
    %v2163 = vpop.f32.mrf.mxu0
    %v2164 = vadd.f32 %v1828, %v2163
    %2165 = vdwg.mxu0
    %2166 = vmatpush.bf16.msra.mxu0 %v2054
    %2167 = vmatpush.bf16.msra.mxu0 %v2052
    %2168 = vmatpush.bf16.msra.mxu0 %v2050
    %2169 = vmatpush.bf16.msra.mxu0 %v2048
    %2170 = vmatpush.bf16.msra.mxu0 %v2046
    %2171 = vmatpush.bf16.msra.mxu0 %v2044
    %2172 = vmatpush.bf16.msra.mxu0 %v2042
    %2173 = vmatpush.bf16.msra.mxu0 %v2040
    %2174 = vmatmul.bf16.gmra.mxu0 %v1759
    %v2175 = vpop.f32.mrf.mxu0
    %v2176 = vadd.f32 %v2162, %v2175
    %v2177 = vpop.f32.mrf.mxu0
    %v2178 = vadd.f32 %v2164, %v2177
    %2179 = vdwg.mxu0
    %2180 = vmatpush.bf16.msra.mxu0 %v2070
    %2181 = vmatpush.bf16.msra.mxu0 %v2068
    %2182 = vmatpush.bf16.msra.mxu0 %v2066
    %2183 = vmatpush.bf16.msra.mxu0 %v2064
    %2184 = vmatpush.bf16.msra.mxu0 %v2062
    %2185 = vmatpush.bf16.msra.mxu0 %v2060
    %2186 = vmatpush.bf16.msra.mxu0 %v2058
    %2187 = vmatpush.bf16.msra.mxu0 %v2056
    %2188 = vmatmul.bf16.gmra.mxu0 %v1760
    %v2189 = vpop.f32.mrf.mxu0
    %v2190 = vadd.f32 %v2176, %v2189
    %v2191 = vpop.f32.mrf.mxu0
    %v2192 = vadd.f32 %v2178, %v2191
    %2193 = vdwg.mxu0
    %2194 = vmatpush.bf16.msra.mxu0 %v2086
    %2195 = vmatpush.bf16.msra.mxu0 %v2084
    %2196 = vmatpush.bf16.msra.mxu0 %v2082
    %2197 = vmatpush.bf16.msra.mxu0 %v2080
    %2198 = vmatpush.bf16.msra.mxu0 %v2078
    %2199 = vmatpush.bf16.msra.mxu0 %v2076
    %2200 = vmatpush.bf16.msra.mxu0 %v2074
    %2201 = vmatpush.bf16.msra.mxu0 %v2072
    %2202 = vmatmul.bf16.gmra.mxu0 %v1761
    %v2203 = vpop.f32.mrf.mxu0
    %v2204 = vadd.f32 %v2190, %v2203
    %v2205 = vpop.f32.mrf.mxu0
    %v2206 = vadd.f32 %v2192, %v2205
    %2207 = vdwg.mxu0
    %2208 = vmatpush.bf16.msra.mxu0 %v2039
    %2209 = vmatpush.bf16.msra.mxu0 %v2037
    %2210 = vmatpush.bf16.msra.mxu0 %v2035
    %2211 = vmatpush.bf16.msra.mxu0 %v2033
    %2212 = vmatpush.bf16.msra.mxu0 %v2031
    %2213 = vmatpush.bf16.msra.mxu0 %v2029
    %2214 = vmatpush.bf16.msra.mxu0 %v2027
    %2215 = vmatpush.bf16.msra.mxu0 %v2025
    %2216 = vmatmul.bf16.gmra.mxu0 %v1758
    %v2217 = vpop.f32.mrf.mxu0
    %v2218 = vadd.f32 %v1829, %v2217
    %v2219 = vpop.f32.mrf.mxu0
    %v2220 = vadd.f32 %v1829, %v2219
    %2221 = vdwg.mxu0
    %2222 = vmatpush.bf16.msra.mxu0 %v2055
    %2223 = vmatpush.bf16.msra.mxu0 %v2053
    %2224 = vmatpush.bf16.msra.mxu0 %v2051
    %2225 = vmatpush.bf16.msra.mxu0 %v2049
    %2226 = vmatpush.bf16.msra.mxu0 %v2047
    %2227 = vmatpush.bf16.msra.mxu0 %v2045
    %2228 = vmatpush.bf16.msra.mxu0 %v2043
    %2229 = vmatpush.bf16.msra.mxu0 %v2041
    %2230 = vmatmul.bf16.gmra.mxu0 %v1759
    %v2231 = vpop.f32.mrf.mxu0
    %v2232 = vadd.f32 %v2218, %v2231
    %v2233 = vpop.f32.mrf.mxu0
    %v2234 = vadd.f32 %v2220, %v2233
    %2235 = vdwg.mxu0
    %2236 = vmatpush.bf16.msra.mxu0 %v2071
    %2237 = vmatpush.bf16.msra.mxu0 %v2069
    %2238 = vmatpush.bf16.msra.mxu0 %v2067
    %2239 = vmatpush.bf16.msra.mxu0 %v2065
    %2240 = vmatpush.bf16.msra.mxu0 %v2063
    %2241 = vmatpush.bf16.msra.mxu0 %v2061
    %2242 = vmatpush.bf16.msra.mxu0 %v2059
    %2243 = vmatpush.bf16.msra.mxu0 %v2057
    %2244 = vmatmul.bf16.gmra.mxu0 %v1760
    %v2245 = vpop.f32.mrf.mxu0
    %v2246 = vadd.f32 %v2232, %v2245
    %v2247 = vpop.f32.mrf.mxu0
    %v2248 = vadd.f32 %v2234, %v2247
    %2249 = vdwg.mxu0
    %2250 = vmatpush.bf16.msra.mxu0 %v2087
    %2251 = vmatpush.bf16.msra.mxu0 %v2085
    %2252 = vmatpush.bf16.msra.mxu0 %v2083
    %2253 = vmatpush.bf16.msra.mxu0 %v2081
    %2254 = vmatpush.bf16.msra.mxu0 %v2079
    %2255 = vmatpush.bf16.msra.mxu0 %v2077
    %2256 = vmatpush.bf16.msra.mxu0 %v2075
    %2257 = vmatpush.bf16.msra.mxu0 %v2073
    %2258 = vmatmul.bf16.gmra.mxu0 %v1761
    %v2259 = vpop.f32.mrf.mxu0
    %v2260 = vadd.f32 %v2246, %v2259
    %v2261 = vpop.f32.mrf.mxu0
    %v2262 = vadd.f32 %v2248, %v2261
    %2263 = vdwg.mxu0
    %v2264 = vmax.f32 %v2204, 0.0
    %v2265 = vmax.f32 %v2260, 0.0
    %v2266 = vmax.f32 %v2206, 0.0
    %v2267 = vmax.f32 %v2262, 0.0
    %v2268 = vpack.c.bf16 %v2266, %v2264
    %v2269 = vpack.c.bf16 %v2267, %v2265
    %v2270 = vld [vmem:[#allocation10] sm:$0xf]
    %v2271 = vld [vmem:[#allocation10 + $0x4] sm:$0xf]
    %v2272 = vld [vmem:[#allocation10 + $0x8] sm:$0xf]
    %v2273 = vld [vmem:[#allocation10 + $0xc] sm:$0xf]
    %v2274 = vld [vmem:[#allocation10 + $0x10] sm:$0xf]
    %v2275 = vld [vmem:[#allocation10 + $0x14] sm:$0xf]
    %v2276 = vld [vmem:[#allocation10 + $0x18] sm:$0xf]
    %v2277 = vld [vmem:[#allocation10 + $0x1c] sm:$0xf]
    %v2278 = vld [vmem:[#allocation10 + $0x20] sm:$0xf]
    %v2279 = vld [vmem:[#allocation10 + $0x24] sm:$0xf]
    %v2280 = vld [vmem:[#allocation10 + $0x28] sm:$0xf]
    %v2281 = vld [vmem:[#allocation10 + $0x2c] sm:$0xf]
    %v2282 = vld [vmem:[#allocation10 + $0x30] sm:$0xf]
    %v2283 = vld [vmem:[#allocation10 + $0x34] sm:$0xf]
    %v2284 = vld [vmem:[#allocation10 + $0x38] sm:$0xf]
    %v2285 = vld [vmem:[#allocation10 + $0x3c] sm:$0xf]
    %v2286 = vld [vmem:[#allocation10 + $0x40] sm:$0xf]
    %v2287 = vld [vmem:[#allocation10 + $0x44] sm:$0xf]
    %v2288 = vld [vmem:[#allocation10 + $0x48] sm:$0xf]
    %v2289 = vld [vmem:[#allocation10 + $0x4c] sm:$0xf]
    %v2290 = vld [vmem:[#allocation10 + $0x50] sm:$0xf]
    %v2291 = vld [vmem:[#allocation10 + $0x54] sm:$0xf]
    %v2292 = vld [vmem:[#allocation10 + $0x58] sm:$0xf]
    %v2293 = vld [vmem:[#allocation10 + $0x5c] sm:$0xf]
    %v2294 = vld [vmem:[#allocation10 + $0x60] sm:$0xf]
    %v2295 = vld [vmem:[#allocation10 + $0x64] sm:$0xf]
    %v2296 = vld [vmem:[#allocation10 + $0x68] sm:$0xf]
    %v2297 = vld [vmem:[#allocation10 + $0x6c] sm:$0xf]
    %v2298 = vld [vmem:[#allocation10 + $0x70] sm:$0xf]
    %v2299 = vld [vmem:[#allocation10 + $0x74] sm:$0xf]
    %v2300 = vld [vmem:[#allocation10 + $0x78] sm:$0xf]
    %v2301 = vld [vmem:[#allocation10 + $0x7c] sm:$0xf]
    %v2302 = vld [vmem:[%s6] sm:$0x1]
    %v2304 = vperm.slane %v2302, 0
    %v2338 = vunpack.c.l.b16 %v2270
    %v2339 = vunpack.c.l.b16 %v2271
    %v2340 = vunpack.c.l.b16 %v2272
    %v2341 = vunpack.c.l.b16 %v2273
    %v2342 = vunpack.c.l.b16 %v2274
    %v2343 = vunpack.c.l.b16 %v2275
    %v2344 = vunpack.c.l.b16 %v2276
    %v2345 = vunpack.c.l.b16 %v2277
    %v2346 = vunpack.c.l.b16 %v2278
    %v2347 = vunpack.c.l.b16 %v2279
    %v2348 = vunpack.c.l.b16 %v2280
    %v2349 = vunpack.c.l.b16 %v2281
    %v2350 = vunpack.c.l.b16 %v2282
    %v2351 = vunpack.c.l.b16 %v2283
    %v2352 = vunpack.c.l.b16 %v2284
    %v2353 = vunpack.c.l.b16 %v2285
    %v2354 = vunpack.c.l.b16 %v2286
    %v2355 = vunpack.c.l.b16 %v2287
    %v2356 = vunpack.c.l.b16 %v2288
    %v2357 = vunpack.c.l.b16 %v2289
    %v2358 = vunpack.c.l.b16 %v2290
    %v2359 = vunpack.c.l.b16 %v2291
    %v2360 = vunpack.c.l.b16 %v2292
    %v2361 = vunpack.c.l.b16 %v2293
    %v2362 = vunpack.c.l.b16 %v2294
    %v2363 = vunpack.c.l.b16 %v2295
    %v2364 = vunpack.c.l.b16 %v2296
    %v2365 = vunpack.c.l.b16 %v2297
    %v2366 = vunpack.c.l.b16 %v2298
    %v2367 = vunpack.c.l.b16 %v2299
    %v2368 = vunpack.c.l.b16 %v2300
    %v2369 = vunpack.c.l.b16 %v2301
    %v2370 = vpack.c.b16 %v2339, %v2338
    %v2371 = vpack.c.b16 %v2341, %v2340
    %v2372 = vpack.c.b16 %v2343, %v2342
    %v2373 = vpack.c.b16 %v2345, %v2344
    %v2374 = vpack.c.b16 %v2347, %v2346
    %v2375 = vpack.c.b16 %v2349, %v2348
    %v2376 = vpack.c.b16 %v2351, %v2350
    %v2377 = vpack.c.b16 %v2353, %v2352
    %v2378 = vpack.c.b16 %v2355, %v2354
    %v2379 = vpack.c.b16 %v2357, %v2356
    %v2380 = vpack.c.b16 %v2359, %v2358
    %v2381 = vpack.c.b16 %v2361, %v2360
    %v2382 = vpack.c.b16 %v2363, %v2362
    %v2383 = vpack.c.b16 %v2365, %v2364
    %v2384 = vpack.c.b16 %v2367, %v2366
    %v2385 = vpack.c.b16 %v2369, %v2368
    %2402 = vmatpush.bf16.msra.mxu0 %v2377
    %2403 = vmatpush.bf16.msra.mxu0 %v2376
    %2404 = vmatpush.bf16.msra.mxu0 %v2375
    %2405 = vmatpush.bf16.msra.mxu0 %v2374
    %2406 = vmatpush.bf16.msra.mxu0 %v2373
    %2407 = vmatpush.bf16.msra.mxu0 %v2372
    %2408 = vmatpush.bf16.msra.mxu0 %v2371
    %2409 = vmatpush.bf16.msra.mxu0 %v2370
    %2410 = vmatmul.bf16.gmra.mxu0 %v2268
    %v2411 = vpop.f32.mrf.mxu0
    %v2412 = vadd.f32 %v2304, %v2411
    %v2413 = vpop.f32.mrf.mxu0
    %v2414 = vadd.f32 %v2304, %v2413
    %2415 = vdwg.mxu0
    %2416 = vmatpush.bf16.msra.mxu0 %v2385
    %2417 = vmatpush.bf16.msra.mxu0 %v2384
    %2418 = vmatpush.bf16.msra.mxu0 %v2383
    %2419 = vmatpush.bf16.msra.mxu0 %v2382
    %2420 = vmatpush.bf16.msra.mxu0 %v2381
    %2421 = vmatpush.bf16.msra.mxu0 %v2380
    %2422 = vmatpush.bf16.msra.mxu0 %v2379
    %2423 = vmatpush.bf16.msra.mxu0 %v2378
    %2424 = vmatmul.bf16.gmra.mxu0 %v2269
    %v2425 = vpop.f32.mrf.mxu0
    %v2426 = vadd.f32 %v2412, %v2425
    %v2427 = vpop.f32.mrf.mxu0
    %v2428 = vadd.f32 %v2414, %v2427
    %2429 = vdwg.mxu0
    %v2430 = vmax.f32 %v2426, 0.0
    %v2431 = vmax.f32 %v2428, 0.0
    %v2432 = vpack.c.bf16 %v2431, %v2430
    %v2433 = vld [vmem:[#allocation11] sm:$0xf]
    %v2434 = vld [vmem:[#allocation11 + $0x4] sm:$0xf]
    %v2435 = vld [vmem:[#allocation11 + $0x8] sm:$0xf]
    %v2436 = vld [vmem:[#allocation11 + $0xc] sm:$0xf]
    %v2437 = vld [vmem:[#allocation11 + $0x10] sm:$0xf]
    %v2438 = vld [vmem:[#allocation11 + $0x14] sm:$0xf]
    %v2439 = vld [vmem:[#allocation11 + $0x18] sm:$0xf]
    %v2440 = vld [vmem:[#allocation11 + $0x1c] sm:$0xf]
    %v2441 = vld [vmem:[#allocation11 + $0x20] sm:$0xf]
    %v2442 = vld [vmem:[#allocation11 + $0x24] sm:$0xf]
    %v2443 = vld [vmem:[#allocation11 + $0x28] sm:$0xf]
    %v2444 = vld [vmem:[#allocation11 + $0x2c] sm:$0xf]
    %v2445 = vld [vmem:[#allocation11 + $0x30] sm:$0xf]
    %v2446 = vld [vmem:[#allocation11 + $0x34] sm:$0xf]
    %v2447 = vld [vmem:[#allocation11 + $0x38] sm:$0xf]
    %v2448 = vld [vmem:[#allocation11 + $0x3c] sm:$0xf]
    %v2449 = vld [vmem:[%s8] sm:$0x1]
    %v2451 = vperm.slane %v2449, 0
    %v2469 = vunpack.c.l.b16 %v2433
    %v2470 = vunpack.c.l.b16 %v2434
    %v2471 = vunpack.c.l.b16 %v2435
    %v2472 = vunpack.c.l.b16 %v2436
    %v2473 = vunpack.c.l.b16 %v2437
    %v2474 = vunpack.c.l.b16 %v2438
    %v2475 = vunpack.c.l.b16 %v2439
    %v2476 = vunpack.c.l.b16 %v2440
    %v2477 = vunpack.c.l.b16 %v2441
    %v2478 = vunpack.c.l.b16 %v2442
    %v2479 = vunpack.c.l.b16 %v2443
    %v2480 = vunpack.c.l.b16 %v2444
    %v2481 = vunpack.c.l.b16 %v2445
    %v2482 = vunpack.c.l.b16 %v2446
    %v2483 = vunpack.c.l.b16 %v2447
    %v2484 = vunpack.c.l.b16 %v2448
    %v2485 = vpack.c.b16 %v2470, %v2469
    %v2486 = vpack.c.b16 %v2472, %v2471
    %v2487 = vpack.c.b16 %v2474, %v2473
    %v2488 = vpack.c.b16 %v2476, %v2475
    %v2489 = vpack.c.b16 %v2478, %v2477
    %v2490 = vpack.c.b16 %v2480, %v2479
    %v2491 = vpack.c.b16 %v2482, %v2481
    %v2492 = vpack.c.b16 %v2484, %v2483
    %2501 = vmatpush.bf16.msra.mxu0 %v2492
    %2502 = vmatpush.bf16.msra.mxu0 %v2491
    %2503 = vmatpush.bf16.msra.mxu0 %v2490
    %2504 = vmatpush.bf16.msra.mxu0 %v2489
    %2505 = vmatpush.bf16.msra.mxu0 %v2488
    %2506 = vmatpush.bf16.msra.mxu0 %v2487
    %2507 = vmatpush.bf16.msra.mxu0 %v2486
    %2508 = vmatpush.bf16.msra.mxu0 %v2485
    %2509 = vmatmul.bf16.gmra.mxu0 %v2432
    %v2510 = vpop.f32.mrf.mxu0
    %v2511 = vadd.f32 %v2451, %v2510
    %v2512 = vpop.f32.mrf.mxu0
    %v2513 = vadd.f32 %v2451, %v2512
    %2514 = vdwg.mxu0
    %v2515 = vmax.f32 %v2511, 0.0
    %v2516 = vmax.f32 %v2513, 0.0
    %v2517 = vpack.c.bf16 %v2516, %v2515
    %v2518 = vld [vmem:[#allocation13] sm:$0xf]
    %v2519 = vld [vmem:[#allocation13 + $0x4] sm:$0xf]
    %v2520 = vld [vmem:[#allocation13 + $0x8] sm:$0xf]
    %v2521 = vld [vmem:[#allocation13 + $0xc] sm:$0xf]
    %v2522 = vld [vmem:[#allocation13 + $0x10] sm:$0xf]
    %v2523 = vld [vmem:[#allocation13 + $0x14] sm:$0xf]
    %v2524 = vld [vmem:[#allocation13 + $0x18] sm:$0xf]
    %v2525 = vld [vmem:[#allocation13 + $0x1c] sm:$0xf]
    %v2526 = vld [vmem:[#allocation13 + $0x20] sm:$0xf]
    %v2527 = vld [vmem:[#allocation13 + $0x24] sm:$0xf]
    %v2528 = vld [vmem:[#allocation13 + $0x28] sm:$0xf]
    %v2529 = vld [vmem:[#allocation13 + $0x2c] sm:$0xf]
    %v2530 = vld [vmem:[#allocation13 + $0x30] sm:$0xf]
    %v2531 = vld [vmem:[#allocation13 + $0x34] sm:$0xf]
    %v2532 = vld [vmem:[#allocation13 + $0x38] sm:$0xf]
    %v2533 = vld [vmem:[#allocation13 + $0x3c] sm:$0xf]
    %v2534 = vld [vmem:[%s10] sm:$0x1]
    %v2536 = vperm.slane %v2534, 0
    %v2554 = vunpack.c.l.b16 %v2518
    %v2555 = vunpack.c.l.b16 %v2519
    %v2556 = vunpack.c.l.b16 %v2520
    %v2557 = vunpack.c.l.b16 %v2521
    %v2558 = vunpack.c.l.b16 %v2522
    %v2559 = vunpack.c.l.b16 %v2523
    %v2560 = vunpack.c.l.b16 %v2524
    %v2561 = vunpack.c.l.b16 %v2525
    %v2562 = vunpack.c.l.b16 %v2526
    %v2563 = vunpack.c.l.b16 %v2527
    %v2564 = vunpack.c.l.b16 %v2528
    %v2565 = vunpack.c.l.b16 %v2529
    %v2566 = vunpack.c.l.b16 %v2530
    %v2567 = vunpack.c.l.b16 %v2531
    %v2568 = vunpack.c.l.b16 %v2532
    %v2569 = vunpack.c.l.b16 %v2533
    %v2570 = vpack.c.b16 %v2555, %v2554
    %v2571 = vpack.c.b16 %v2557, %v2556
    %v2572 = vpack.c.b16 %v2559, %v2558
    %v2573 = vpack.c.b16 %v2561, %v2560
    %v2574 = vpack.c.b16 %v2563, %v2562
    %v2575 = vpack.c.b16 %v2565, %v2564
    %v2576 = vpack.c.b16 %v2567, %v2566
    %v2577 = vpack.c.b16 %v2569, %v2568
    %2586 = vmatpush.bf16.msra.mxu0 %v2577
    %2587 = vmatpush.bf16.msra.mxu0 %v2576
    %2588 = vmatpush.bf16.msra.mxu0 %v2575
    %2589 = vmatpush.bf16.msra.mxu0 %v2574
    %2590 = vmatpush.bf16.msra.mxu0 %v2573
    %2591 = vmatpush.bf16.msra.mxu0 %v2572
    %2592 = vmatpush.bf16.msra.mxu0 %v2571
    %2593 = vmatpush.bf16.msra.mxu0 %v2570
    %2594 = vmatmul.bf16.gmra.mxu0 %v2517
    %v2595 = vpop.f32.mrf.mxu0
    %v2596 = vadd.f32 %v2536, %v2595
    %v2597 = vpop.f32.mrf.mxu0
    %v2598 = vadd.f32 %v2536, %v2597
    %2599 = vdwg.mxu0
    %2600 = vst [vmem:[#allocation14] sm:$0xff] %v2596
    %2601 = vst [vmem:[#allocation14 + $0x8] sm:$0xff] %v2598
    // Predicated region
    $region74: #{tpu_custom_call.1} parent=1 // pred_check
      _
    $region75: #{tpu_custom_call.1} parent=1 // pred_check_branch
      %2603 = sbr.rel (0) target = $region77
    $region76: #{tpu_custom_call.1} parent=1 // pred_region
      %2605 = vsyncadd [#allocation4], 0
      %s2606 = sshll.u32 [#allocation14], 4
      %s2607 = int_to_ptr.vmem [resolvable:$true] %s2606
      %s2608 = sshll.u32 %s11, 4
      %s2609 = int_to_ptr.hbm [resolvable:$true] %s2608
      %2614 = dma.vmem_to_hbm [thread:$0]  %s2607, 256, %s2609, [#allocation4], 128, 128, 8
    $region77: #{tpu_custom_call.1} parent=1 // pred_fallthru
      _
    // Predicated region
    $region78: #{tpu_custom_call.1} parent=1 // pred_check
      _
    $region79: #{tpu_custom_call.1} parent=1 // pred_check_branch
      %2616 = sbr.rel (0) target = $region81
    $region80: #{tpu_custom_call.1} parent=1 // pred_region
      %2618 = dma.done [#allocation4], 256
    $region81: #{tpu_custom_call.1} parent=1 // pred_fallthru
      _
    %2619 = vsyncpa [#allocation3], 1
    %2620 = vsyncpa [#allocation6], 1
    %2621 = vsyncpa [#allocation9], 1
    %2622 = vsyncpa [#allocation12], 1
    %2623 = vsyncpa [#allocation4], 1

// kernel: tpu_custom_call.1
$region0: #{tpu_custom_call.1}
  #allocation0 [shape = 'u32[]', space=smem, size = 0x4, offset = 0x4, fixed_abs, tag = 'smem constant byte address 0x4 - core index']
  #allocation1 [shape = 'u32[72,128]{1,0:T(1,128)}', space=vmem, size = 0x9000, scoped, tag = 'internal scratch']
  %s0 = inlined_call_operand.hbm [shape: f32[16,784], index: 0, kind: input, shape index: {}]
  %s1 = inlined_call_operand.hbm [shape: bf16[784,512], index: 1, kind: input, shape index: {}]
  %s2 = inlined_call_operand.hbm [shape: f32[1,512], index: 2, kind: input, shape index: {}]
  %s3 = inlined_call_operand.hbm [shape: bf16[512,256], index: 3, kind: input, shape index: {}]
  %s4 = inlined_call_operand.vmem [shape: f32[1,256], index: 4, kind: input, shape index: {}]
  %s5 = inlined_call_operand.hbm [shape: bf16[256,128], index: 5, kind: input, shape index: {}]
  %s6 = inlined_call_operand.vmem [shape: f32[1,128], index: 6, kind: input, shape index: {}]
  %s7 = inlined_call_operand.hbm [shape: bf16[128,128], index: 7, kind: input, shape index: {}]
  %s8 = inlined_call_operand.vmem [shape: f32[1,128], index: 8, kind: input, shape index: {}]
  %s9 = inlined_call_operand.hbm [shape: bf16[128,128], index: 9, kind: input, shape index: {}]
  %s10 = inlined_call_operand.vmem [shape: f32[1,128], index: 10, kind: input, shape index: {}]
  %s11 = inlined_call_operand.hbm [shape: f32[16,128], index: 11, kind: output, shape index: {}]
  %s12 = sld [smem:[#allocation0]]
  $region82: #{tpu_custom_call.1} parent=0
    _
  %s14 = ssub.s32 1, %s12
  %s15 = scalar_select 0, %s14, %s12
  $region1: #{tpu_custom_call.1} parent=0
    #allocation2 [shape = 'u8[57344]{0}', space=vmem, size = 0xe000, scoped, tag = 'input window, operand 0, single buffered']
    #allocation3 [shape = 's32[1]{0}', space=sflag, size = 0x4, scoped, tag = 'scoped memory for tpu_custom_call.1']
    #allocation4 [shape = 's32[1]{0}', space=sflag, size = 0x4, scoped, tag = 'scoped memory for tpu_custom_call.1']
    #allocation5 [shape = 'u8[802816]{0}', space=vmem, size = 0xc4000, scoped, tag = 'input window, operand 1, single buffered']
    #allocation6 [shape = 's32[1]{0}', space=sflag, size = 0x4, scoped, tag = 'scoped memory for tpu_custom_call.1']
    #allocation7 [shape = 'u8[2048]{0}', space=vmem, size = 0x800, scoped, tag = 'input window, operand 2, single buffered']
    #allocation8 [shape = 'u8[262144]{0}', space=vmem, size = 0x40000, scoped, tag = 'input window, operand 3, single buffered']
    #allocation9 [shape = 's32[1]{0}', space=sflag, size = 0x4, scoped, tag = 'scoped memory for tpu_custom_call.1']
    #allocation10 [shape = 'u8[65536]{0}', space=vmem, size = 0x10000, scoped, tag = 'input window, operand 5, single buffered']
    #allocation11 [shape = 'u8[32768]{0}', space=vmem, size = 0x8000, scoped, tag = 'input window, operand 7, single buffered']
    #allocation12 [shape = 's32[1]{0}', space=sflag, size = 0x4, scoped, tag = 'scoped memory for tpu_custom_call.1']
    #allocation13 [shape = 'u8[32768]{0}', space=vmem, size = 0x8000, scoped, tag = 'input window, operand 9, single buffered']
    #allocation14 [shape = 'u8[8192]{0}', space=vmem, size = 0x2000, scoped, tag = 'output window, operand 0, single buffered']
    %16 = vsyncpa [#allocation3], 0
    %17 = vsyncpa [#allocation6], 0
    %18 = vsyncpa [#allocation9], 0
    %19 = vsyncpa [#allocation12], 0
    %20 = vsyncpa [#allocation4], 0
    // Predicated region
    $region2: #{tpu_custom_call.1} parent=1 // pred_check
      _
    $region3: #{tpu_custom_call.1} parent=1 // pred_check_branch
      %22 = sbr.rel (0) target = $region5
    $region4: #{tpu_custom_call.1} parent=1 // pred_region
      %24 = vsyncadd [#allocation3], 0
      %s25 = sshll.u32 %s0, 4
      %s26 = int_to_ptr.hbm [resolvable:$true] %s25
      %s27 = sshll.u32 [#allocation2], 4
      %s28 = int_to_ptr.vmem [resolvable:$true] %s27
      %33 = dma.hbm_to_vmem [thread:$0]  %s26, 1792, %s28, [#allocation3], 896, 896, 56
    $region5: #{tpu_custom_call.1} parent=1 // pred_fallthru
      _
    // Predicated region
    $region6: #{tpu_custom_call.1} parent=1 // pred_check
      _
    $region7: #{tpu_custom_call.1} parent=1 // pred_check_branch
      %35 = sbr.rel (0) target = $region9
    $region8: #{tpu_custom_call.1} parent=1 // pred_region
      %37 = vsyncadd [#allocation6], 0
      %s38 = sshll.u32 %s1, 4
      %s39 = int_to_ptr.hbm [resolvable:$true] %s38
      %s40 = sshll.u32 [#allocation5], 4
      %s41 = int_to_ptr.vmem [resolvable:$true] %s40
      %46 = dma.hbm_to_vmem [thread:$0]  %s39, 25088, %s41, [#allocation6], 256, 256, 16
    $region9: #{tpu_custom_call.1} parent=1 // pred_fallthru
      _
    // Predicated region
    $region10: #{tpu_custom_call.1} parent=1 // pred_check
      _
    $region11: #{tpu_custom_call.1} parent=1 // pred_check_branch
      %48 = sbr.rel (0) target = $region13
    $region12: #{tpu_custom_call.1} parent=1 // pred_region
      %50 = vsyncadd [#allocation6], 0
      %s52 = sshll.u32 %s2, 4
      %s53 = int_to_ptr.hbm [resolvable:$true] %s52
      %s54 = sshll.u32 [#allocation7], 4
      %s55 = int_to_ptr.vmem [resolvable:$true] %s54
      %57 = dma.hbm_to_vmem [thread:$0]  %s53, 64, %s55, [#allocation6]
    $region13: #{tpu_custom_call.1} parent=1 // pred_fallthru
      _
    // Predicated region
    $region14: #{tpu_custom_call.1} parent=1 // pred_check
      _
    $region15: #{tpu_custom_call.1} parent=1 // pred_check_branch
      %59 = sbr.rel (0) target = $region17
    $region16: #{tpu_custom_call.1} parent=1 // pred_region
      %61 = vsyncadd [#allocation9], 0
      %s62 = sshll.u32 %s3, 4
      %s63 = int_to_ptr.hbm [resolvable:$true] %s62
      %s64 = sshll.u32 [#allocation8], 4
      %s65 = int_to_ptr.vmem [resolvable:$true] %s64
      %70 = dma.hbm_to_vmem [thread:$0]  %s63, 8192, %s65, [#allocation9], 128, 128, 8
    $region17: #{tpu_custom_call.1} parent=1 // pred_fallthru
      _
    // Predicated region
    $region18: #{tpu_custom_call.1} parent=1 // pred_check
      _
    $region19: #{tpu_custom_call.1} parent=1 // pred_check_branch
      %72 = sbr.rel (0) target = $region21
    $region20: #{tpu_custom_call.1} parent=1 // pred_region
      _
    $region21: #{tpu_custom_call.1} parent=1 // pred_fallthru
      _
    // Predicated region
    $region22: #{tpu_custom_call.1} parent=1 // pred_check
      _
    $region23: #{tpu_custom_call.1} parent=1 // pred_check_branch
      %74 = sbr.rel (0) target = $region25
    $region24: #{tpu_custom_call.1} parent=1 // pred_region
      %76 = vsyncadd [#allocation9], 0
      %s77 = sshll.u32 %s5, 4
      %s78 = int_to_ptr.hbm [resolvable:$true] %s77
      %s79 = sshll.u32 [#allocation10], 4
      %s80 = int_to_ptr.vmem [resolvable:$true] %s79
      %85 = dma.hbm_to_vmem [thread:$0]  %s78, 2048, %s80, [#allocation9], 64, 64, 4
    $region25: #{tpu_custom_call.1} parent=1 // pred_fallthru
      _
    // Predicated region
    $region26: #{tpu_custom_call.1} parent=1 // pred_check
      _
    $region27: #{tpu_custom_call.1} parent=1 // pred_check_branch
      %87 = sbr.rel (0) target = $region29
    $region28: #{tpu_custom_call.1} parent=1 // pred_region
      _
    $region29: #{tpu_custom_call.1} parent=1 // pred_fallthru
      _
    // Predicated region
    $region30: #{tpu_custom_call.1} parent=1 // pred_check
      _
    $region31: #{tpu_custom_call.1} parent=1 // pred_check_branch
      %89 = sbr.rel (0) target = $region33
    $region32: #{tpu_custom_call.1} parent=1 // pred_region
      %91 = vsyncadd [#allocation12], 0
      %s92 = sshll.u32 %s7, 4
      %s93 = int_to_ptr.hbm [resolvable:$true] %s92
      %s94 = sshll.u32 [#allocation11], 4
      %s95 = int_to_ptr.vmem [resolvable:$true] %s94
      %100 = dma.hbm_to_vmem [thread:$0]  %s93, 1024, %s95, [#allocation12], 64, 64, 4
    $region33: #{tpu_custom_call.1} parent=1 // pred_fallthru
      _
    // Predicated region
    $region34: #{tpu_custom_call.1} parent=1 // pred_check
      _
    $region35: #{tpu_custom_call.1} parent=1 // pred_check_branch
      %102 = sbr.rel (0) target = $region37
    $region36: #{tpu_custom_call.1} parent=1 // pred_region
      _
    $region37: #{tpu_custom_call.1} parent=1 // pred_fallthru
      _
    // Predicated region
    $region38: #{tpu_custom_call.1} parent=1 // pred_check
      _
    $region39: #{tpu_custom_call.1} parent=1 // pred_check_branch
      %104 = sbr.rel (0) target = $region41
    $region40: #{tpu_custom_call.1} parent=1 // pred_region
      %106 = vsyncadd [#allocation12], 0
      %s107 = sshll.u32 %s9, 4
      %s108 = int_to_ptr.hbm [resolvable:$true] %s107
      %s109 = sshll.u32 [#allocation13], 4
      %s110 = int_to_ptr.vmem [resolvable:$true] %s109
      %115 = dma.hbm_to_vmem [thread:$0]  %s108, 1024, %s110, [#allocation12], 64, 64, 4
    $region41: #{tpu_custom_call.1} parent=1 // pred_fallthru
      _
    // Predicated region
    $region42: #{tpu_custom_call.1} parent=1 // pred_check
      _
    $region43: #{tpu_custom_call.1} parent=1 // pred_check_branch
      %117 = sbr.rel (0) target = $region45
    $region44: #{tpu_custom_call.1} parent=1 // pred_region
      _
    $region45: #{tpu_custom_call.1} parent=1 // pred_fallthru
      _
    // Predicated region
    $region46: #{tpu_custom_call.1} parent=1 // pred_check
      _
    $region47: #{tpu_custom_call.1} parent=1 // pred_check_branch
      %119 = sbr.rel (0) target = $region49
    $region48: #{tpu_custom_call.1} parent=1 // pred_region
      %121 = dma.done [#allocation3], 1792
    $region49: #{tpu_custom_call.1} parent=1 // pred_fallthru
      _
    // Predicated region
    $region50: #{tpu_custom_call.1} parent=1 // pred_check
      _
    $region51: #{tpu_custom_call.1} parent=1 // pred_check_branch
      %123 = sbr.rel (0) target = $region53
    $region52: #{tpu_custom_call.1} parent=1 // pred_region
      %125 = dma.done [#allocation6], 25088
    $region53: #{tpu_custom_call.1} parent=1 // pred_fallthru
      _
    // Predicated region
    $region54: #{tpu_custom_call.1} parent=1 // pred_check
      _
    $region55: #{tpu_custom_call.1} parent=1 // pred_check_branch
      %127 = sbr.rel (0) target = $region57
    $region56: #{tpu_custom_call.1} parent=1 // pred_region
      %129 = dma.done [#allocation6], 64
    $region57: #{tpu_custom_call.1} parent=1 // pred_fallthru
      _
    // Predicated region
    $region58: #{tpu_custom_call.1} parent=1 // pred_check
      _
    $region59: #{tpu_custom_call.1} parent=1 // pred_check_branch
      %131 = sbr.rel (0) target = $region61
    $region60: #{tpu_custom_call.1} parent=1 // pred_region
      %133 = dma.done [#allocation9], 8192
    $region61: #{tpu_custom_call.1} parent=1 // pred_fallthru
      _
    // Predicated region
    $region62: #{tpu_custom_call.1} parent=1 // pred_check
      _
    $region63: #{tpu_custom_call.1} parent=1 // pred_check_branch
      %135 = sbr.rel (0) target = $region65
    $region64: #{tpu_custom_call.1} parent=1 // pred_region
      %137 = dma.done [#allocation9], 2048
    $region65: #{tpu_custom_call.1} parent=1 // pred_fallthru
      _
    // Predicated region
    $region66: #{tpu_custom_call.1} parent=1 // pred_check
      _
    $region67: #{tpu_custom_call.1} parent=1 // pred_check_branch
      %139 = sbr.rel (0) target = $region69
    $region68: #{tpu_custom_call.1} parent=1 // pred_region
      %141 = dma.done [#allocation12], 1024
    $region69: #{tpu_custom_call.1} parent=1 // pred_fallthru
      _
    // Predicated region
    $region70: #{tpu_custom_call.1} parent=1 // pred_check
      _
    $region71: #{tpu_custom_call.1} parent=1 // pred_check_branch
      %143 = sbr.rel (0) target = $region73
    $region72: #{tpu_custom_call.1} parent=1 // pred_region
      %145 = dma.done [#allocation12], 1024
    $region73: #{tpu_custom_call.1} parent=1 // pred_fallthru
      _
    %v147 = vld [vmem:[#allocation2] sm:$0xff]
    %v148 = vld [vmem:[#allocation2 + $0x8] sm:$0xff]
    %v149 = vld [vmem:[#allocation2 + $0x10] sm:$0xff]
    %v150 = vld [vmem:[#allocation2 + $0x18] sm:$0xff]
    %v151 = vld [vmem:[#allocation2 + $0x20] sm:$0xff]
    %v152 = vld [vmem:[#allocation2 + $0x28] sm:$0xff]
    %v153 = vld [vmem:[#allocation2 + $0x30] sm:$0xff]
    %v154 = vld [vmem:[#allocation2 + $0x38] sm:$0xff]
    %v155 = vld [vmem:[#allocation2 + $0x40] sm:$0xff]
    %v156 = vld [vmem:[#allocation2 + $0x48] sm:$0xff]
    %v157 = vld [vmem:[#allocation2 + $0x50] sm:$0xff]
    %v158 = vld [vmem:[#allocation2 + $0x58] sm:$0xff]
    %v159 = vld [vmem:[#allocation2 + $0x60] sm:$0xff]
    %v160 = vld [vmem:[#allocation2 + $0x68] sm:$0xff]
    %v161 = vpack.c.bf16 %v154, %v147
    %v162 = vpack.c.bf16 %v155, %v148
    %v163 = vpack.c.bf16 %v156, %v149
    %v164 = vpack.c.bf16 %v157, %v150
    %v165 = vpack.c.bf16 %v158, %v151
    %v166 = vpack.c.bf16 %v159, %v152
    %v167 = vpack.c.bf16 %v160, %v153
    %v168 = vld [vmem:[#allocation5] sm:$0xff]
    %v169 = vld [vmem:[#allocation5 + $0x8] sm:$0xff]
    %v170 = vld [vmem:[#allocation5 + $0x10] sm:$0xff]
    %v171 = vld [vmem:[#allocation5 + $0x18] sm:$0xff]
    %v172 = vld [vmem:[#allocation5 + $0x20] sm:$0xff]
    %v173 = vld [vmem:[#allocation5 + $0x28] sm:$0xff]
    %v174 = vld [vmem:[#allocation5 + $0x30] sm:$0xff]
    %v175 = vld [vmem:[#allocation5 + $0x38] sm:$0xff]
    %v176 = vld [vmem:[#allocation5 + $0x40] sm:$0xff]
    %v177 = vld [vmem:[#allocation5 + $0x48] sm:$0xff]
    %v178 = vld [vmem:[#allocation5 + $0x50] sm:$0xff]
    %v179 = vld [vmem:[#allocation5 + $0x58] sm:$0xff]
    %v180 = vld [vmem:[#allocation5 + $0x60] sm:$0xff]
    %v181 = vld [vmem:[#allocation5 + $0x68] sm:$0xff]
    %v182 = vld [vmem:[#allocation5 + $0x70] sm:$0xff]
    %v183 = vld [vmem:[#allocation5 + $0x78] sm:$0xff]
    %v184 = vld [vmem:[#allocation5 + $0x80] sm:$0xff]
    %v185 = vld [vmem:[#allocation5 + $0x88] sm:$0xff]
    %v186 = vld [vmem:[#allocation5 + $0x90] sm:$0xff]
    %v187 = vld [vmem:[#allocation5 + $0x98] sm:$0xff]
    %v188 = vld [vmem:[#allocation5 + $0xa0] sm:$0xff]
    %v189 = vld [vmem:[#allocation5 + $0xa8] sm:$0xff]
    %v190 = vld [vmem:[#allocation5 + $0xb0] sm:$0xff]
    %v191 = vld [vmem:[#allocation5 + $0xb8] sm:$0xff]
    %v192 = vld [vmem:[#allocation5 + $0xc0] sm:$0xff]
    %v193 = vld [vmem:[#allocation5 + $0xc8] sm:$0xff]
    %v194 = vld [vmem:[#allocation5 + $0xd0] sm:$0xff]
    %v195 = vld [vmem:[#allocation5 + $0xd8] sm:$0xff]
    %v196 = vld [vmem:[#allocation5 + $0xe0] sm:$0xff]
    %v197 = vld [vmem:[#allocation5 + $0xe8] sm:$0xff]
    %v198 = vld [vmem:[#allocation5 + $0xf0] sm:$0xff]
    %v199 = vld [vmem:[#allocation5 + $0xf8] sm:$0xff]
    %v200 = vld [vmem:[#allocation5 + $0x100] sm:$0xff]
    %v201 = vld [vmem:[#allocation5 + $0x108] sm:$0xff]
    %v202 = vld [vmem:[#allocation5 + $0x110] sm:$0xff]
    %v203 = vld [vmem:[#allocation5 + $0x118] sm:$0xff]
    %v204 = vld [vmem:[#allocation5 + $0x120] sm:$0xff]
    %v205 = vld [vmem:[#allocation5 + $0x128] sm:$0xff]
    %v206 = vld [vmem:[#allocation5 + $0x130] sm:$0xff]
    %v207 = vld [vmem:[#allocation5 + $0x138] sm:$0xff]
    %v208 = vld [vmem:[#allocation5 + $0x140] sm:$0xff]
    %v209 = vld [vmem:[#allocation5 + $0x148] sm:$0xff]
    %v210 = vld [vmem:[#allocation5 + $0x150] sm:$0xff]
    %v211 = vld [vmem:[#allocation5 + $0x158] sm:$0xff]
    %v212 = vld [vmem:[#allocation5 + $0x160] sm:$0xff]
    %v213 = vld [vmem:[#allocation5 + $0x168] sm:$0xff]
    %v214 = vld [vmem:[#allocation5 + $0x170] sm:$0xff]
    %v215 = vld [vmem:[#allocation5 + $0x178] sm:$0xff]
    %v216 = vld [vmem:[#allocation5 + $0x180] sm:$0xff]
    %v217 = vld [vmem:[#allocation5 + $0x188] sm:$0xff]
    %v218 = vld [vmem:[#allocation5 + $0x190] sm:$0xff]
    %v219 = vld [vmem:[#allocation5 + $0x198] sm:$0xff]
    %v220 = vld [vmem:[#allocation5 + $0x1a0] sm:$0xff]
    %v221 = vld [vmem:[#allocation5 + $0x1a8] sm:$0xff]
    %v222 = vld [vmem:[#allocation5 + $0x1b0] sm:$0xff]
    %v223 = vld [vmem:[#allocation5 + $0x1b8] sm:$0xff]
    %v224 = vld [vmem:[#allocation5 + $0x1c0] sm:$0xff]
    %v225 = vld [vmem:[#allocation5 + $0x1c8] sm:$0xff]
    %v226 = vld [vmem:[#allocation5 + $0x1d0] sm:$0xff]
    %v227 = vld [vmem:[#allocation5 + $0x1d8] sm:$0xff]
    %v228 = vld [vmem:[#allocation5 + $0x1e0] sm:$0xff]
    %v229 = vld [vmem:[#allocation5 + $0x1e8] sm:$0xff]
    %v230 = vld [vmem:[#allocation5 + $0x1f0] sm:$0xff]
    %v231 = vld [vmem:[#allocation5 + $0x1f8] sm:$0xff]
    %v232 = vld [vmem:[#allocation5 + $0x200] sm:$0xff]
    %v233 = vld [vmem:[#allocation5 + $0x208] sm:$0xff]
    %v234 = vld [vmem:[#allocation5 + $0x210] sm:$0xff]
    %v235 = vld [vmem:[#allocation5 + $0x218] sm:$0xff]
    %v236 = vld [vmem:[#allocation5 + $0x220] sm:$0xff]
    %v237 = vld [vmem:[#allocation5 + $0x228] sm:$0xff]
    %v238 = vld [vmem:[#allocation5 + $0x230] sm:$0xff]
    %v239 = vld [vmem:[#allocation5 + $0x238] sm:$0xff]
    %v240 = vld [vmem:[#allocation5 + $0x240] sm:$0xff]
    %v241 = vld [vmem:[#allocation5 + $0x248] sm:$0xff]
    %v242 = vld [vmem:[#allocation5 + $0x250] sm:$0xff]
    %v243 = vld [vmem:[#allocation5 + $0x258] sm:$0xff]
    %v244 = vld [vmem:[#allocation5 + $0x260] sm:$0xff]
    %v245 = vld [vmem:[#allocation5 + $0x268] sm:$0xff]
    %v246 = vld [vmem:[#allocation5 + $0x270] sm:$0xff]
    %v247 = vld [vmem:[#allocation5 + $0x278] sm:$0xff]
    %v248 = vld [vmem:[#allocation5 + $0x280] sm:$0xff]
    %v249 = vld [vmem:[#allocation5 + $0x288] sm:$0xff]
    %v250 = vld [vmem:[#allocation5 + $0x290] sm:$0xff]
    %v251 = vld [vmem:[#allocation5 + $0x298] sm:$0xff]
    %v252 = vld [vmem:[#allocation5 + $0x2a0] sm:$0xff]
    %v253 = vld [vmem:[#allocation5 + $0x2a8] sm:$0xff]
    %v254 = vld [vmem:[#allocation5 + $0x2b0] sm:$0xff]
    %v255 = vld [vmem:[#allocation5 + $0x2b8] sm:$0xff]
    %v256 = vld [vmem:[#allocation5 + $0x2c0] sm:$0xff]
    %v257 = vld [vmem:[#allocation5 + $0x2c8] sm:$0xff]
    %v258 = vld [vmem:[#allocation5 + $0x2d0] sm:$0xff]
    %v259 = vld [vmem:[#allocation5 + $0x2d8] sm:$0xff]
    %v260 = vld [vmem:[#allocation5 + $0x2e0] sm:$0xff]
    %v261 = vld [vmem:[#allocation5 + $0x2e8] sm:$0xff]
    %v262 = vld [vmem:[#allocation5 + $0x2f0] sm:$0xff]
    %v263 = vld [vmem:[#allocation5 + $0x2f8] sm:$0xff]
    %v264 = vld [vmem:[#allocation5 + $0x300] sm:$0xff]
    %v265 = vld [vmem:[#allocation5 + $0x308] sm:$0xff]
    %v266 = vld [vmem:[#allocation5 + $0x310] sm:$0xff]
    %v267 = vld [vmem:[#allocation5 + $0x318] sm:$0xff]
    %v268 = vld [vmem:[#allocation5 + $0x320] sm:$0xff]
    %v269 = vld [vmem:[#allocation5 + $0x328] sm:$0xff]
    %v270 = vld [vmem:[#allocation5 + $0x330] sm:$0xff]
    %v271 = vld [vmem:[#allocation5 + $0x338] sm:$0xff]
    %v272 = vld [vmem:[#allocation5 + $0x340] sm:$0xff]
    %v273 = vld [vmem:[#allocation5 + $0x348] sm:$0xff]
    %v274 = vld [vmem:[#allocation5 + $0x350] sm:$0xff]
    %v275 = vld [vmem:[#allocation5 + $0x358] sm:$0xff]
    %v276 = vld [vmem:[#allocation5 + $0x360] sm:$0xff]
    %v277 = vld [vmem:[#allocation5 + $0x368] sm:$0xff]
    %v278 = vld [vmem:[#allocation5 + $0x370] sm:$0xff]
    %v279 = vld [vmem:[#allocation5 + $0x378] sm:$0xff]
    %v280 = vld [vmem:[#allocation5 + $0x380] sm:$0xff]
    %v281 = vld [vmem:[#allocation5 + $0x388] sm:$0xff]
    %v282 = vld [vmem:[#allocation5 + $0x390] sm:$0xff]
    %v283 = vld [vmem:[#allocation5 + $0x398] sm:$0xff]
    %v284 = vld [vmem:[#allocation5 + $0x3a0] sm:$0xff]
    %v285 = vld [vmem:[#allocation5 + $0x3a8] sm:$0xff]
    %v286 = vld [vmem:[#allocation5 + $0x3b0] sm:$0xff]
    %v287 = vld [vmem:[#allocation5 + $0x3b8] sm:$0xff]
    %v288 = vld [vmem:[#allocation5 + $0x3c0] sm:$0xff]
    %v289 = vld [vmem:[#allocation5 + $0x3c8] sm:$0xff]
    %v290 = vld [vmem:[#allocation5 + $0x3d0] sm:$0xff]
    %v291 = vld [vmem:[#allocation5 + $0x3d8] sm:$0xff]
    %v292 = vld [vmem:[#allocation5 + $0x3e0] sm:$0xff]
    %v293 = vld [vmem:[#allocation5 + $0x3e8] sm:$0xff]
    %v294 = vld [vmem:[#allocation5 + $0x3f0] sm:$0xff]
    %v295 = vld [vmem:[#allocation5 + $0x3f8] sm:$0xff]
    %v296 = vld [vmem:[#allocation5 + $0x400] sm:$0xff]
    %v297 = vld [vmem:[#allocation5 + $0x408] sm:$0xff]
    %v298 = vld [vmem:[#allocation5 + $0x410] sm:$0xff]
    %v299 = vld [vmem:[#allocation5 + $0x418] sm:$0xff]
    %v300 = vld [vmem:[#allocation5 + $0x420] sm:$0xff]
    %v301 = vld [vmem:[#allocation5 + $0x428] sm:$0xff]
    %v302 = vld [vmem:[#allocation5 + $0x430] sm:$0xff]
    %v303 = vld [vmem:[#allocation5 + $0x438] sm:$0xff]
    %v304 = vld [vmem:[#allocation5 + $0x440] sm:$0xff]
    %v305 = vld [vmem:[#allocation5 + $0x448] sm:$0xff]
    %v306 = vld [vmem:[#allocation5 + $0x450] sm:$0xff]
    %v307 = vld [vmem:[#allocation5 + $0x458] sm:$0xff]
    %v308 = vld [vmem:[#allocation5 + $0x460] sm:$0xff]
    %v309 = vld [vmem:[#allocation5 + $0x468] sm:$0xff]
    %v310 = vld [vmem:[#allocation5 + $0x470] sm:$0xff]
    %v311 = vld [vmem:[#allocation5 + $0x478] sm:$0xff]
    %v312 = vld [vmem:[#allocation5 + $0x480] sm:$0xff]
    %v313 = vld [vmem:[#allocation5 + $0x488] sm:$0xff]
    %v314 = vld [vmem:[#allocation5 + $0x490] sm:$0xff]
    %v315 = vld [vmem:[#allocation5 + $0x498] sm:$0xff]
    %v316 = vld [vmem:[#allocation5 + $0x4a0] sm:$0xff]
    %v317 = vld [vmem:[#allocation5 + $0x4a8] sm:$0xff]
    %v318 = vld [vmem:[#allocation5 + $0x4b0] sm:$0xff]
    %v319 = vld [vmem:[#allocation5 + $0x4b8] sm:$0xff]
    %v320 = vld [vmem:[#allocation5 + $0x4c0] sm:$0xff]
    %v321 = vld [vmem:[#allocation5 + $0x4c8] sm:$0xff]
    %v322 = vld [vmem:[#allocation5 + $0x4d0] sm:$0xff]
    %v323 = vld [vmem:[#allocation5 + $0x4d8] sm:$0xff]
    %v324 = vld [vmem:[#allocation5 + $0x4e0] sm:$0xff]
    %v325 = vld [vmem:[#allocation5 + $0x4e8] sm:$0xff]
    %v326 = vld [vmem:[#allocation5 + $0x4f0] sm:$0xff]
    %v327 = vld [vmem:[#allocation5 + $0x4f8] sm:$0xff]
    %v328 = vld [vmem:[#allocation5 + $0x500] sm:$0xff]
    %v329 = vld [vmem:[#allocation5 + $0x508] sm:$0xff]
    %v330 = vld [vmem:[#allocation5 + $0x510] sm:$0xff]
    %v331 = vld [vmem:[#allocation5 + $0x518] sm:$0xff]
    %v332 = vld [vmem:[#allocation5 + $0x520] sm:$0xff]
    %v333 = vld [vmem:[#allocation5 + $0x528] sm:$0xff]
    %v334 = vld [vmem:[#allocation5 + $0x530] sm:$0xff]
    %v335 = vld [vmem:[#allocation5 + $0x538] sm:$0xff]
    %v336 = vld [vmem:[#allocation5 + $0x540] sm:$0xff]
    %v337 = vld [vmem:[#allocation5 + $0x548] sm:$0xff]
    %v338 = vld [vmem:[#allocation5 + $0x550] sm:$0xff]
    %v339 = vld [vmem:[#allocation5 + $0x558] sm:$0xff]
    %v340 = vld [vmem:[#allocation5 + $0x560] sm:$0xff]
    %v341 = vld [vmem:[#allocation5 + $0x568] sm:$0xff]
    %v342 = vld [vmem:[#allocation5 + $0x570] sm:$0xff]
    %v343 = vld [vmem:[#allocation5 + $0x578] sm:$0xff]
    %v344 = vld [vmem:[#allocation5 + $0x580] sm:$0xff]
    %v345 = vld [vmem:[#allocation5 + $0x588] sm:$0xff]
    %v346 = vld [vmem:[#allocation5 + $0x590] sm:$0xff]
    %v347 = vld [vmem:[#allocation5 + $0x598] sm:$0xff]
    %v348 = vld [vmem:[#allocation5 + $0x5a0] sm:$0xff]
    %v349 = vld [vmem:[#allocation5 + $0x5a8] sm:$0xff]
    %v350 = vld [vmem:[#allocation5 + $0x5b0] sm:$0xff]
    %v351 = vld [vmem:[#allocation5 + $0x5b8] sm:$0xff]
    %v352 = vld [vmem:[#allocation5 + $0x5c0] sm:$0xff]
    %v353 = vld [vmem:[#allocation5 + $0x5c8] sm:$0xff]
    %v354 = vld [vmem:[#allocation5 + $0x5d0] sm:$0xff]
    %v355 = vld [vmem:[#allocation5 + $0x5d8] sm:$0xff]
    %v356 = vld [vmem:[#allocation5 + $0x5e0] sm:$0xff]
    %v357 = vld [vmem:[#allocation5 + $0x5e8] sm:$0xff]
    %v358 = vld [vmem:[#allocation5 + $0x5f0] sm:$0xff]
    %v359 = vld [vmem:[#allocation5 + $0x5f8] sm:$0xff]
    %v360 = vld [vmem:[#allocation5 + $0x600] sm:$0xff]
    %v361 = vld [vmem:[#allocation5 + $0x608] sm:$0xff]
    %v362 = vld [vmem:[#allocation5 + $0x610] sm:$0xff]
    %v363 = vld [vmem:[#allocation5 + $0x618] sm:$0xff]
    %v364 = vld [vmem:[#allocation7] sm:$0xf]
    %v366 = vperm.slane %v364, 0
    %v367 = vperm.slane %v364, 1
    %v368 = vperm.slane %v364, 2
    %v369 = vperm.slane %v364, 3
    %v570 = vunpack.c.l.b16 %v168
    %v571 = vunpack.c.h.b16 %v168
    %v572 = vunpack.c.l.b16 %v169
    %v573 = vunpack.c.h.b16 %v169
    %v574 = vunpack.c.l.b16 %v170
    %v575 = vunpack.c.h.b16 %v170
    %v576 = vunpack.c.l.b16 %v171
    %v577 = vunpack.c.h.b16 %v171
    %v578 = vunpack.c.l.b16 %v172
    %v579 = vunpack.c.h.b16 %v172
    %v580 = vunpack.c.l.b16 %v173
    %v581 = vunpack.c.h.b16 %v173
    %v582 = vunpack.c.l.b16 %v174
    %v583 = vunpack.c.h.b16 %v174
    %v584 = vunpack.c.l.b16 %v175
    %v585 = vunpack.c.h.b16 %v175
    %v586 = vunpack.c.l.b16 %v176
    %v587 = vunpack.c.h.b16 %v176
    %v588 = vunpack.c.l.b16 %v177
    %v589 = vunpack.c.h.b16 %v177
    %v590 = vunpack.c.l.b16 %v178
    %v591 = vunpack.c.h.b16 %v178
    %v592 = vunpack.c.l.b16 %v179
    %v593 = vunpack.c.h.b16 %v179
    %v594 = vunpack.c.l.b16 %v180
    %v595 = vunpack.c.h.b16 %v180
    %v596 = vunpack.c.l.b16 %v181
    %v597 = vunpack.c.h.b16 %v181
    %v598 = vunpack.c.l.b16 %v182
    %v599 = vunpack.c.h.b16 %v182
    %v600 = vunpack.c.l.b16 %v183
    %v601 = vunpack.c.h.b16 %v183
    %v602 = vunpack.c.l.b16 %v184
    %v603 = vunpack.c.h.b16 %v184
    %v604 = vunpack.c.l.b16 %v185
    %v605 = vunpack.c.h.b16 %v185
    %v606 = vunpack.c.l.b16 %v186
    %v607 = vunpack.c.h.b16 %v186
    %v608 = vunpack.c.l.b16 %v187
    %v609 = vunpack.c.h.b16 %v187
    %v610 = vunpack.c.l.b16 %v188
    %v611 = vunpack.c.h.b16 %v188
    %v612 = vunpack.c.l.b16 %v189
    %v613 = vunpack.c.h.b16 %v189
    %v614 = vunpack.c.l.b16 %v190
    %v615 = vunpack.c.h.b16 %v190
    %v616 = vunpack.c.l.b16 %v191
    %v617 = vunpack.c.h.b16 %v191
    %v618 = vunpack.c.l.b16 %v192
    %v619 = vunpack.c.h.b16 %v192
    %v620 = vunpack.c.l.b16 %v193
    %v621 = vunpack.c.h.b16 %v193
    %v622 = vunpack.c.l.b16 %v194
    %v623 = vunpack.c.h.b16 %v194
    %v624 = vunpack.c.l.b16 %v195
    %v625 = vunpack.c.h.b16 %v195
    %v626 = vunpack.c.l.b16 %v196
    %v627 = vunpack.c.h.b16 %v196
    %v628 = vunpack.c.l.b16 %v197
    %v629 = vunpack.c.h.b16 %v197
    %v630 = vunpack.c.l.b16 %v198
    %v631 = vunpack.c.h.b16 %v198
    %v632 = vunpack.c.l.b16 %v199
    %v633 = vunpack.c.h.b16 %v199
    %v634 = vunpack.c.l.b16 %v200
    %v635 = vunpack.c.h.b16 %v200
    %v636 = vunpack.c.l.b16 %v201
    %v637 = vunpack.c.h.b16 %v201
    %v638 = vunpack.c.l.b16 %v202
    %v639 = vunpack.c.h.b16 %v202
    %v640 = vunpack.c.l.b16 %v203
    %v641 = vunpack.c.h.b16 %v203
    %v642 = vunpack.c.l.b16 %v204
    %v643 = vunpack.c.h.b16 %v204
    %v644 = vunpack.c.l.b16 %v205
    %v645 = vunpack.c.h.b16 %v205
    %v646 = vunpack.c.l.b16 %v206
    %v647 = vunpack.c.h.b16 %v206
    %v648 = vunpack.c.l.b16 %v207
    %v649 = vunpack.c.h.b16 %v207
    %v650 = vunpack.c.l.b16 %v208
    %v651 = vunpack.c.h.b16 %v208
    %v652 = vunpack.c.l.b16 %v209
    %v653 = vunpack.c.h.b16 %v209
    %v654 = vunpack.c.l.b16 %v210
    %v655 = vunpack.c.h.b16 %v210
    %v656 = vunpack.c.l.b16 %v211
    %v657 = vunpack.c.h.b16 %v211
    %v658 = vunpack.c.l.b16 %v212
    %v659 = vunpack.c.h.b16 %v212
    %v660 = vunpack.c.l.b16 %v213
    %v661 = vunpack.c.h.b16 %v213
    %v662 = vunpack.c.l.b16 %v214
    %v663 = vunpack.c.h.b16 %v214
    %v664 = vunpack.c.l.b16 %v215
    %v665 = vunpack.c.h.b16 %v215
    %v666 = vunpack.c.l.b16 %v216
    %v667 = vunpack.c.h.b16 %v216
    %v668 = vunpack.c.l.b16 %v217
    %v669 = vunpack.c.h.b16 %v217
    %v670 = vunpack.c.l.b16 %v218
    %v671 = vunpack.c.h.b16 %v218
    %v672 = vunpack.c.l.b16 %v219
    %v673 = vunpack.c.h.b16 %v219
    %v674 = vunpack.c.l.b16 %v220
    %v675 = vunpack.c.h.b16 %v220
    %v676 = vunpack.c.l.b16 %v221
    %v677 = vunpack.c.h.b16 %v221
    %v678 = vunpack.c.l.b16 %v222
    %v679 = vunpack.c.h.b16 %v222
    %v680 = vunpack.c.l.b16 %v223
    %v681 = vunpack.c.h.b16 %v223
    %v682 = vunpack.c.l.b16 %v224
    %v683 = vunpack.c.h.b16 %v224
    %v684 = vunpack.c.l.b16 %v225
    %v685 = vunpack.c.h.b16 %v225
    %v686 = vunpack.c.l.b16 %v226
    %v687 = vunpack.c.h.b16 %v226
    %v688 = vunpack.c.l.b16 %v227
    %v689 = vunpack.c.h.b16 %v227
    %v690 = vunpack.c.l.b16 %v228
    %v691 = vunpack.c.h.b16 %v228
    %v692 = vunpack.c.l.b16 %v229
    %v693 = vunpack.c.h.b16 %v229
    %v694 = vunpack.c.l.b16 %v230
    %v695 = vunpack.c.h.b16 %v230
    %v696 = vunpack.c.l.b16 %v231
    %v697 = vunpack.c.h.b16 %v231
    %v698 = vunpack.c.l.b16 %v232
    %v699 = vunpack.c.h.b16 %v232
    %v700 = vunpack.c.l.b16 %v233
    %v701 = vunpack.c.h.b16 %v233
    %v702 = vunpack.c.l.b16 %v234
    %v703 = vunpack.c.h.b16 %v234
    %v704 = vunpack.c.l.b16 %v235
    %v705 = vunpack.c.h.b16 %v235
    %v706 = vunpack.c.l.b16 %v236
    %v707 = vunpack.c.h.b16 %v236
    %v708 = vunpack.c.l.b16 %v237
    %v709 = vunpack.c.h.b16 %v237
    %v710 = vunpack.c.l.b16 %v238
    %v711 = vunpack.c.h.b16 %v238
    %v712 = vunpack.c.l.b16 %v239
    %v713 = vunpack.c.h.b16 %v239
    %v714 = vunpack.c.l.b16 %v240
    %v715 = vunpack.c.h.b16 %v240
    %v716 = vunpack.c.l.b16 %v241
    %v717 = vunpack.c.h.b16 %v241
    %v718 = vunpack.c.l.b16 %v242
    %v719 = vunpack.c.h.b16 %v242
    %v720 = vunpack.c.l.b16 %v243
    %v721 = vunpack.c.h.b16 %v243
    %v722 = vunpack.c.l.b16 %v244
    %v723 = vunpack.c.h.b16 %v244
    %v724 = vunpack.c.l.b16 %v245
    %v725 = vunpack.c.h.b16 %v245
    %v726 = vunpack.c.l.b16 %v246
    %v727 = vunpack.c.h.b16 %v246
    %v728 = vunpack.c.l.b16 %v247
    %v729 = vunpack.c.h.b16 %v247
    %v730 = vunpack.c.l.b16 %v248
    %v731 = vunpack.c.h.b16 %v248
    %v732 = vunpack.c.l.b16 %v249
    %v733 = vunpack.c.h.b16 %v249
    %v734 = vunpack.c.l.b16 %v250
    %v735 = vunpack.c.h.b16 %v250
    %v736 = vunpack.c.l.b16 %v251
    %v737 = vunpack.c.h.b16 %v251
    %v738 = vunpack.c.l.b16 %v252
    %v739 = vunpack.c.h.b16 %v252
    %v740 = vunpack.c.l.b16 %v253
    %v741 = vunpack.c.h.b16 %v253
    %v742 = vunpack.c.l.b16 %v254
    %v743 = vunpack.c.h.b16 %v254
    %v744 = vunpack.c.l.b16 %v255
    %v745 = vunpack.c.h.b16 %v255
    %v746 = vunpack.c.l.b16 %v256
    %v747 = vunpack.c.h.b16 %v256
    %v748 = vunpack.c.l.b16 %v257
    %v749 = vunpack.c.h.b16 %v257
    %v750 = vunpack.c.l.b16 %v258
    %v751 = vunpack.c.h.b16 %v258
    %v752 = vunpack.c.l.b16 %v259
    %v753 = vunpack.c.h.b16 %v259
    %v754 = vunpack.c.l.b16 %v260
    %v755 = vunpack.c.h.b16 %v260
    %v756 = vunpack.c.l.b16 %v261
    %v757 = vunpack.c.h.b16 %v261
    %v758 = vunpack.c.l.b16 %v262
    %v759 = vunpack.c.h.b16 %v262
    %v760 = vunpack.c.l.b16 %v263
    %v761 = vunpack.c.h.b16 %v263
    %v762 = vunpack.c.l.b16 %v264
    %v763 = vunpack.c.h.b16 %v264
    %v764 = vunpack.c.l.b16 %v265
    %v765 = vunpack.c.h.b16 %v265
    %v766 = vunpack.c.l.b16 %v266
    %v767 = vunpack.c.h.b16 %v266
    %v768 = vunpack.c.l.b16 %v267
    %v769 = vunpack.c.h.b16 %v267
    %v770 = vunpack.c.l.b16 %v268
    %v771 = vunpack.c.h.b16 %v268
    %v772 = vunpack.c.l.b16 %v269
    %v773 = vunpack.c.h.b16 %v269
    %v774 = vunpack.c.l.b16 %v270
    %v775 = vunpack.c.h.b16 %v270
    %v776 = vunpack.c.l.b16 %v271
    %v777 = vunpack.c.h.b16 %v271
    %v778 = vunpack.c.l.b16 %v272
    %v779 = vunpack.c.h.b16 %v272
    %v780 = vunpack.c.l.b16 %v273
    %v781 = vunpack.c.h.b16 %v273
    %v782 = vunpack.c.l.b16 %v274
    %v783 = vunpack.c.h.b16 %v274
    %v784 = vunpack.c.l.b16 %v275
    %v785 = vunpack.c.h.b16 %v275
    %v786 = vunpack.c.l.b16 %v276
    %v787 = vunpack.c.h.b16 %v276
    %v788 = vunpack.c.l.b16 %v277
    %v789 = vunpack.c.h.b16 %v277
    %v790 = vunpack.c.l.b16 %v278
    %v791 = vunpack.c.h.b16 %v278
    %v792 = vunpack.c.l.b16 %v279
    %v793 = vunpack.c.h.b16 %v279
    %v794 = vunpack.c.l.b16 %v280
    %v795 = vunpack.c.h.b16 %v280
    %v796 = vunpack.c.l.b16 %v281
    %v797 = vunpack.c.h.b16 %v281
    %v798 = vunpack.c.l.b16 %v282
    %v799 = vunpack.c.h.b16 %v282
    %v800 = vunpack.c.l.b16 %v283
    %v801 = vunpack.c.h.b16 %v283
    %v802 = vunpack.c.l.b16 %v284
    %v803 = vunpack.c.h.b16 %v284
    %v804 = vunpack.c.l.b16 %v285
    %v805 = vunpack.c.h.b16 %v285
    %v806 = vunpack.c.l.b16 %v286
    %v807 = vunpack.c.h.b16 %v286
    %v808 = vunpack.c.l.b16 %v287
    %v809 = vunpack.c.h.b16 %v287
    %v810 = vunpack.c.l.b16 %v288
    %v811 = vunpack.c.h.b16 %v288
    %v812 = vunpack.c.l.b16 %v289
    %v813 = vunpack.c.h.b16 %v289
    %v814 = vunpack.c.l.b16 %v290
    %v815 = vunpack.c.h.b16 %v290
    %v816 = vunpack.c.l.b16 %v291
    %v817 = vunpack.c.h.b16 %v291
    %v818 = vunpack.c.l.b16 %v292
    %v819 = vunpack.c.h.b16 %v292
    %v820 = vunpack.c.l.b16 %v293
    %v821 = vunpack.c.h.b16 %v293
    %v822 = vunpack.c.l.b16 %v294
    %v823 = vunpack.c.h.b16 %v294
    %v824 = vunpack.c.l.b16 %v295
    %v825 = vunpack.c.h.b16 %v295
    %v826 = vunpack.c.l.b16 %v296
    %v827 = vunpack.c.h.b16 %v296
    %v828 = vunpack.c.l.b16 %v297
    %v829 = vunpack.c.h.b16 %v297
    %v830 = vunpack.c.l.b16 %v298
    %v831 = vunpack.c.h.b16 %v298
    %v832 = vunpack.c.l.b16 %v299
    %v833 = vunpack.c.h.b16 %v299
    %v834 = vunpack.c.l.b16 %v300
    %v835 = vunpack.c.h.b16 %v300
    %v836 = vunpack.c.l.b16 %v301
    %v837 = vunpack.c.h.b16 %v301
    %v838 = vunpack.c.l.b16 %v302
    %v839 = vunpack.c.h.b16 %v302
    %v840 = vunpack.c.l.b16 %v303
    %v841 = vunpack.c.h.b16 %v303
    %v842 = vunpack.c.l.b16 %v304
    %v843 = vunpack.c.h.b16 %v304
    %v844 = vunpack.c.l.b16 %v305
    %v845 = vunpack.c.h.b16 %v305
    %v846 = vunpack.c.l.b16 %v306
    %v847 = vunpack.c.h.b16 %v306
    %v848 = vunpack.c.l.b16 %v307
    %v849 = vunpack.c.h.b16 %v307
    %v850 = vunpack.c.l.b16 %v308
    %v851 = vunpack.c.h.b16 %v308
    %v852 = vunpack.c.l.b16 %v309
    %v853 = vunpack.c.h.b16 %v309
    %v854 = vunpack.c.l.b16 %v310
    %v855 = vunpack.c.h.b16 %v310
    %v856 = vunpack.c.l.b16 %v311
    %v857 = vunpack.c.h.b16 %v311
    %v858 = vunpack.c.l.b16 %v312
    %v859 = vunpack.c.h.b16 %v312
    %v860 = vunpack.c.l.b16 %v313
    %v861 = vunpack.c.h.b16 %v313
    %v862 = vunpack.c.l.b16 %v314
    %v863 = vunpack.c.h.b16 %v314
    %v864 = vunpack.c.l.b16 %v315
    %v865 = vunpack.c.h.b16 %v315
    %v866 = vunpack.c.l.b16 %v316
    %v867 = vunpack.c.h.b16 %v316
    %v868 = vunpack.c.l.b16 %v317
    %v869 = vunpack.c.h.b16 %v317
    %v870 = vunpack.c.l.b16 %v318
    %v871 = vunpack.c.h.b16 %v318
    %v872 = vunpack.c.l.b16 %v319
    %v873 = vunpack.c.h.b16 %v319
    %v874 = vunpack.c.l.b16 %v320
    %v875 = vunpack.c.h.b16 %v320
    %v876 = vunpack.c.l.b16 %v321
    %v877 = vunpack.c.h.b16 %v321
    %v878 = vunpack.c.l.b16 %v322
    %v879 = vunpack.c.h.b16 %v322
    %v880 = vunpack.c.l.b16 %v323
    %v881 = vunpack.c.h.b16 %v323
    %v882 = vunpack.c.l.b16 %v324
    %v883 = vunpack.c.h.b16 %v324
    %v884 = vunpack.c.l.b16 %v325
    %v885 = vunpack.c.h.b16 %v325
    %v886 = vunpack.c.l.b16 %v326
    %v887 = vunpack.c.h.b16 %v326
    %v888 = vunpack.c.l.b16 %v327
    %v889 = vunpack.c.h.b16 %v327
    %v890 = vunpack.c.l.b16 %v328
    %v891 = vunpack.c.h.b16 %v328
    %v892 = vunpack.c.l.b16 %v329
    %v893 = vunpack.c.h.b16 %v329
    %v894 = vunpack.c.l.b16 %v330
    %v895 = vunpack.c.h.b16 %v330
    %v896 = vunpack.c.l.b16 %v331
    %v897 = vunpack.c.h.b16 %v331
    %v898 = vunpack.c.l.b16 %v332
    %v899 = vunpack.c.h.b16 %v332
    %v900 = vunpack.c.l.b16 %v333
    %v901 = vunpack.c.h.b16 %v333
    %v902 = vunpack.c.l.b16 %v334
    %v903 = vunpack.c.h.b16 %v334
    %v904 = vunpack.c.l.b16 %v335
    %v905 = vunpack.c.h.b16 %v335
    %v906 = vunpack.c.l.b16 %v336
    %v907 = vunpack.c.h.b16 %v336
    %v908 = vunpack.c.l.b16 %v337
    %v909 = vunpack.c.h.b16 %v337
    %v910 = vunpack.c.l.b16 %v338
    %v911 = vunpack.c.h.b16 %v338
    %v912 = vunpack.c.l.b16 %v339
    %v913 = vunpack.c.h.b16 %v339
    %v914 = vunpack.c.l.b16 %v340
    %v915 = vunpack.c.h.b16 %v340
    %v916 = vunpack.c.l.b16 %v341
    %v917 = vunpack.c.h.b16 %v341
    %v918 = vunpack.c.l.b16 %v342
    %v919 = vunpack.c.h.b16 %v342
    %v920 = vunpack.c.l.b16 %v343
    %v921 = vunpack.c.h.b16 %v343
    %v922 = vunpack.c.l.b16 %v344
    %v923 = vunpack.c.h.b16 %v344
    %v924 = vunpack.c.l.b16 %v345
    %v925 = vunpack.c.h.b16 %v345
    %v926 = vunpack.c.l.b16 %v346
    %v927 = vunpack.c.h.b16 %v346
    %v928 = vunpack.c.l.b16 %v347
    %v929 = vunpack.c.h.b16 %v347
    %v930 = vunpack.c.l.b16 %v348
    %v931 = vunpack.c.h.b16 %v348
    %v932 = vunpack.c.l.b16 %v349
    %v933 = vunpack.c.h.b16 %v349
    %v934 = vunpack.c.l.b16 %v350
    %v935 = vunpack.c.h.b16 %v350
    %v936 = vunpack.c.l.b16 %v351
    %v937 = vunpack.c.h.b16 %v351
    %v938 = vunpack.c.l.b16 %v352
    %v939 = vunpack.c.h.b16 %v352
    %v940 = vunpack.c.l.b16 %v353
    %v941 = vunpack.c.h.b16 %v353
    %v942 = vunpack.c.l.b16 %v354
    %v943 = vunpack.c.h.b16 %v354
    %v944 = vunpack.c.l.b16 %v355
    %v945 = vunpack.c.h.b16 %v355
    %v946 = vunpack.c.l.b16 %v356
    %v947 = vunpack.c.h.b16 %v356
    %v948 = vunpack.c.l.b16 %v357
    %v949 = vunpack.c.h.b16 %v357
    %v950 = vunpack.c.l.b16 %v358
    %v951 = vunpack.c.h.b16 %v358
    %v952 = vunpack.c.l.b16 %v359
    %v953 = vunpack.c.h.b16 %v359
    %v954 = vunpack.c.l.b16 %v360
    %v955 = vunpack.c.h.b16 %v360
    %v956 = vunpack.c.l.b16 %v361
    %v957 = vunpack.c.h.b16 %v361
    %v958 = vunpack.c.l.b16 %v362
    %v959 = vunpack.c.h.b16 %v362
    %v960 = vunpack.c.l.b16 %v363
    %v961 = vunpack.c.h.b16 %v363
    %v962 = vpack.c.b16 %v574, %v570
    %v963 = vpack.c.b16 %v575, %v571
    %v964 = vpack.c.b16 %v576, %v572
    %v965 = vpack.c.b16 %v577, %v573
    %v966 = vpack.c.b16 %v582, %v578
    %v967 = vpack.c.b16 %v583, %v579
    %v968 = vpack.c.b16 %v584, %v580
    %v969 = vpack.c.b16 %v585, %v581
    %v970 = vpack.c.b16 %v590, %v586
    %v971 = vpack.c.b16 %v591, %v587
    %v972 = vpack.c.b16 %v592, %v588
    %v973 = vpack.c.b16 %v593, %v589
    %v974 = vpack.c.b16 %v598, %v594
    %v975 = vpack.c.b16 %v599, %v595
    %v976 = vpack.c.b16 %v600, %v596
    %v977 = vpack.c.b16 %v601, %v597
    %v978 = vpack.c.b16 %v606, %v602
    %v979 = vpack.c.b16 %v607, %v603
    %v980 = vpack.c.b16 %v608, %v604
    %v981 = vpack.c.b16 %v609, %v605
    %v982 = vpack.c.b16 %v614, %v610
    %v983 = vpack.c.b16 %v615, %v611
    %v984 = vpack.c.b16 %v616, %v612
    %v985 = vpack.c.b16 %v617, %v613
    %v986 = vpack.c.b16 %v622, %v618
    %v987 = vpack.c.b16 %v623, %v619
    %v988 = vpack.c.b16 %v624, %v620
    %v989 = vpack.c.b16 %v625, %v621
    %v990 = vpack.c.b16 %v630, %v626
    %v991 = vpack.c.b16 %v631, %v627
    %v992 = vpack.c.b16 %v632, %v628
    %v993 = vpack.c.b16 %v633, %v629
    %v994 = vpack.c.b16 %v638, %v634
    %v995 = vpack.c.b16 %v639, %v635
    %v996 = vpack.c.b16 %v640, %v636
    %v997 = vpack.c.b16 %v641, %v637
    %v998 = vpack.c.b16 %v646, %v642
    %v999 = vpack.c.b16 %v647, %v643
    %v1000 = vpack.c.b16 %v648, %v644
    %v1001 = vpack.c.b16 %v649, %v645
    %v1002 = vpack.c.b16 %v654, %v650
    %v1003 = vpack.c.b16 %v655, %v651
    %v1004 = vpack.c.b16 %v656, %v652
    %v1005 = vpack.c.b16 %v657, %v653
    %v1006 = vpack.c.b16 %v662, %v658
    %v1007 = vpack.c.b16 %v663, %v659
    %v1008 = vpack.c.b16 %v664, %v660
    %v1009 = vpack.c.b16 %v665, %v661
    %v1010 = vpack.c.b16 %v670, %v666
    %v1011 = vpack.c.b16 %v671, %v667
    %v1012 = vpack.c.b16 %v672, %v668
    %v1013 = vpack.c.b16 %v673, %v669
    %v1014 = vpack.c.b16 %v678, %v674
    %v1015 = vpack.c.b16 %v679, %v675
    %v1016 = vpack.c.b16 %v680, %v676
    %v1017 = vpack.c.b16 %v681, %v677
    %v1018 = vpack.c.b16 %v686, %v682
    %v1019 = vpack.c.b16 %v687, %v683
    %v1020 = vpack.c.b16 %v688, %v684
    %v1021 = vpack.c.b16 %v689, %v685
    %v1022 = vpack.c.b16 %v694, %v690
    %v1023 = vpack.c.b16 %v695, %v691
    %v1024 = vpack.c.b16 %v696, %v692
    %v1025 = vpack.c.b16 %v697, %v693
    %v1026 = vpack.c.b16 %v702, %v698
    %v1027 = vpack.c.b16 %v703, %v699
    %v1028 = vpack.c.b16 %v704, %v700
    %v1029 = vpack.c.b16 %v705, %v701
    %v1030 = vpack.c.b16 %v710, %v706
    %v1031 = vpack.c.b16 %v711, %v707
    %v1032 = vpack.c.b16 %v712, %v708
    %v1033 = vpack.c.b16 %v713, %v709
    %v1034 = vpack.c.b16 %v718, %v714
    %v1035 = vpack.c.b16 %v719, %v715
    %v1036 = vpack.c.b16 %v720, %v716
    %v1037 = vpack.c.b16 %v721, %v717
    %v1038 = vpack.c.b16 %v726, %v722
    %v1039 = vpack.c.b16 %v727, %v723
    %v1040 = vpack.c.b16 %v728, %v724
    %v1041 = vpack.c.b16 %v729, %v725
    %v1042 = vpack.c.b16 %v734, %v730
    %v1043 = vpack.c.b16 %v735, %v731
    %v1044 = vpack.c.b16 %v736, %v732
    %v1045 = vpack.c.b16 %v737, %v733
    %v1046 = vpack.c.b16 %v742, %v738
    %v1047 = vpack.c.b16 %v743, %v739
    %v1048 = vpack.c.b16 %v744, %v740
    %v1049 = vpack.c.b16 %v745, %v741
    %v1050 = vpack.c.b16 %v750, %v746
    %v1051 = vpack.c.b16 %v751, %v747
    %v1052 = vpack.c.b16 %v752, %v748
    %v1053 = vpack.c.b16 %v753, %v749
    %v1054 = vpack.c.b16 %v758, %v754
    %v1055 = vpack.c.b16 %v759, %v755
    %v1056 = vpack.c.b16 %v760, %v756
    %v1057 = vpack.c.b16 %v761, %v757
    %v1058 = vpack.c.b16 %v766, %v762
    %v1059 = vpack.c.b16 %v767, %v763
    %v1060 = vpack.c.b16 %v768, %v764
    %v1061 = vpack.c.b16 %v769, %v765
    %v1062 = vpack.c.b16 %v774, %v770
    %v1063 = vpack.c.b16 %v775, %v771
    %v1064 = vpack.c.b16 %v776, %v772
    %v1065 = vpack.c.b16 %v777, %v773
    %v1066 = vpack.c.b16 %v782, %v778
    %v1067 = vpack.c.b16 %v783, %v779
    %v1068 = vpack.c.b16 %v784, %v780
    %v1069 = vpack.c.b16 %v785, %v781
    %v1070 = vpack.c.b16 %v790, %v786
    %v1071 = vpack.c.b16 %v791, %v787
    %v1072 = vpack.c.b16 %v792, %v788
    %v1073 = vpack.c.b16 %v793, %v789
    %v1074 = vpack.c.b16 %v798, %v794
    %v1075 = vpack.c.b16 %v799, %v795
    %v1076 = vpack.c.b16 %v800, %v796
    %v1077 = vpack.c.b16 %v801, %v797
    %v1078 = vpack.c.b16 %v806, %v802
    %v1079 = vpack.c.b16 %v807, %v803
    %v1080 = vpack.c.b16 %v808, %v804
    %v1081 = vpack.c.b16 %v809, %v805
    %v1082 = vpack.c.b16 %v814, %v810
    %v1083 = vpack.c.b16 %v815, %v811
    %v1084 = vpack.c.b16 %v816, %v812
    %v1085 = vpack.c.b16 %v817, %v813
    %v1086 = vpack.c.b16 %v822, %v818
    %v1087 = vpack.c.b16 %v823, %v819
    %v1088 = vpack.c.b16 %v824, %v820
    %v1089 = vpack.c.b16 %v825, %v821
    %v1090 = vpack.c.b16 %v830, %v826
    %v1091 = vpack.c.b16 %v831, %v827
    %v1092 = vpack.c.b16 %v832, %v828
    %v1093 = vpack.c.b16 %v833, %v829
    %v1094 = vpack.c.b16 %v838, %v834
    %v1095 = vpack.c.b16 %v839, %v835
    %v1096 = vpack.c.b16 %v840, %v836
    %v1097 = vpack.c.b16 %v841, %v837
    %v1098 = vpack.c.b16 %v846, %v842
    %v1099 = vpack.c.b16 %v847, %v843
    %v1100 = vpack.c.b16 %v848, %v844
    %v1101 = vpack.c.b16 %v849, %v845
    %v1102 = vpack.c.b16 %v854, %v850
    %v1103 = vpack.c.b16 %v855, %v851
    %v1104 = vpack.c.b16 %v856, %v852
    %v1105 = vpack.c.b16 %v857, %v853
    %v1106 = vpack.c.b16 %v862, %v858
    %v1107 = vpack.c.b16 %v863, %v859
    %v1108 = vpack.c.b16 %v864, %v860
    %v1109 = vpack.c.b16 %v865, %v861
    %v1110 = vpack.c.b16 %v870, %v866
    %v1111 = vpack.c.b16 %v871, %v867
    %v1112 = vpack.c.b16 %v872, %v868
    %v1113 = vpack.c.b16 %v873, %v869
    %v1114 = vpack.c.b16 %v878, %v874
    %v1115 = vpack.c.b16 %v879, %v875
    %v1116 = vpack.c.b16 %v880, %v876
    %v1117 = vpack.c.b16 %v881, %v877
    %v1118 = vpack.c.b16 %v886, %v882
    %v1119 = vpack.c.b16 %v887, %v883
    %v1120 = vpack.c.b16 %v888, %v884
    %v1121 = vpack.c.b16 %v889, %v885
    %v1122 = vpack.c.b16 %v894, %v890
    %v1123 = vpack.c.b16 %v895, %v891
    %v1124 = vpack.c.b16 %v896, %v892
    %v1125 = vpack.c.b16 %v897, %v893
    %v1126 = vpack.c.b16 %v902, %v898
    %v1127 = vpack.c.b16 %v903, %v899
    %v1128 = vpack.c.b16 %v904, %v900
    %v1129 = vpack.c.b16 %v905, %v901
    %v1130 = vpack.c.b16 %v910, %v906
    %v1131 = vpack.c.b16 %v911, %v907
    %v1132 = vpack.c.b16 %v912, %v908
    %v1133 = vpack.c.b16 %v913, %v909
    %v1134 = vpack.c.b16 %v918, %v914
    %v1135 = vpack.c.b16 %v919, %v915
    %v1136 = vpack.c.b16 %v920, %v916
    %v1137 = vpack.c.b16 %v921, %v917
    %v1138 = vpack.c.b16 %v926, %v922
    %v1139 = vpack.c.b16 %v927, %v923
    %v1140 = vpack.c.b16 %v928, %v924
    %v1141 = vpack.c.b16 %v929, %v925
    %v1142 = vpack.c.b16 %v934, %v930
    %v1143 = vpack.c.b16 %v935, %v931
    %v1144 = vpack.c.b16 %v936, %v932
    %v1145 = vpack.c.b16 %v937, %v933
    %v1146 = vpack.c.b16 %v942, %v938
    %v1147 = vpack.c.b16 %v943, %v939
    %v1148 = vpack.c.b16 %v944, %v940
    %v1149 = vpack.c.b16 %v945, %v941
    %v1150 = vpack.c.b16 %v950, %v946
    %v1151 = vpack.c.b16 %v951, %v947
    %v1152 = vpack.c.b16 %v952, %v948
    %v1153 = vpack.c.b16 %v953, %v949
    %v1154 = vpack.c.b16 %v958, %v954
    %v1155 = vpack.c.b16 %v959, %v955
    %v1156 = vpack.c.b16 %v960, %v956
    %v1157 = vpack.c.b16 %v961, %v957
    %vm1354 = vcmask 130048
    %v1356 = vsel %vm1354, %v167, 0
    %1358 = vmatpush.bf16.msra.mxu0 %v990
    %1359 = vmatpush.bf16.msra.mxu0 %v986
    %1360 = vmatpush.bf16.msra.mxu0 %v982
    %1361 = vmatpush.bf16.msra.mxu0 %v978
    %1362 = vmatpush.bf16.msra.mxu0 %v974
    %1363 = vmatpush.bf16.msra.mxu0 %v970
    %1364 = vmatpush.bf16.msra.mxu0 %v966
    %1365 = vmatpush.bf16.msra.mxu0 %v962
    %1366 = vmatmul.bf16.gmra.mxu0 %v161
    %v1367 = vpop.f32.mrf.mxu0
    %v1368 = vadd.f32 %v366, %v1367
    %v1369 = vpop.f32.mrf.mxu0
    %v1370 = vadd.f32 %v366, %v1369
    %1371 = vdwg.mxu0
    %1372 = vmatpush.bf16.msra.mxu0 %v1022
    %1373 = vmatpush.bf16.msra.mxu0 %v1018
    %1374 = vmatpush.bf16.msra.mxu0 %v1014
    %1375 = vmatpush.bf16.msra.mxu0 %v1010
    %1376 = vmatpush.bf16.msra.mxu0 %v1006
    %1377 = vmatpush.bf16.msra.mxu0 %v1002
    %1378 = vmatpush.bf16.msra.mxu0 %v998
    %1379 = vmatpush.bf16.msra.mxu0 %v994
    %1380 = vmatmul.bf16.gmra.mxu0 %v162
    %v1381 = vpop.f32.mrf.mxu0
    %v1382 = vadd.f32 %v1368, %v1381
    %v1383 = vpop.f32.mrf.mxu0
    %v1384 = vadd.f32 %v1370, %v1383
    %1385 = vdwg.mxu0
    %1386 = vmatpush.bf16.msra.mxu0 %v1054
    %1387 = vmatpush.bf16.msra.mxu0 %v1050
    %1388 = vmatpush.bf16.msra.mxu0 %v1046
    %1389 = vmatpush.bf16.msra.mxu0 %v1042
    %1390 = vmatpush.bf16.msra.mxu0 %v1038
    %1391 = vmatpush.bf16.msra.mxu0 %v1034
    %1392 = vmatpush.bf16.msra.mxu0 %v1030
    %1393 = vmatpush.bf16.msra.mxu0 %v1026
    %1394 = vmatmul.bf16.gmra.mxu0 %v163
    %v1395 = vpop.f32.mrf.mxu0
    %v1396 = vadd.f32 %v1382, %v1395
    %v1397 = vpop.f32.mrf.mxu0
    %v1398 = vadd.f32 %v1384, %v1397
    %1399 = vdwg.mxu0
    %1400 = vmatpush.bf16.msra.mxu0 %v1086
    %1401 = vmatpush.bf16.msra.mxu0 %v1082
    %1402 = vmatpush.bf16.msra.mxu0 %v1078
    %1403 = vmatpush.bf16.msra.mxu0 %v1074
    %1404 = vmatpush.bf16.msra.mxu0 %v1070
    %1405 = vmatpush.bf16.msra.mxu0 %v1066
    %1406 = vmatpush.bf16.msra.mxu0 %v1062
    %1407 = vmatpush.bf16.msra.mxu0 %v1058
    %1408 = vmatmul.bf16.gmra.mxu0 %v164
    %v1409 = vpop.f32.mrf.mxu0
    %v1410 = vadd.f32 %v1396, %v1409
    %v1411 = vpop.f32.mrf.mxu0
    %v1412 = vadd.f32 %v1398, %v1411
    %1413 = vdwg.mxu0
    %1414 = vmatpush.bf16.msra.mxu0 %v1118
    %1415 = vmatpush.bf16.msra.mxu0 %v1114
    %1416 = vmatpush.bf16.msra.mxu0 %v1110
    %1417 = vmatpush.bf16.msra.mxu0 %v1106
    %1418 = vmatpush.bf16.msra.mxu0 %v1102
    %1419 = vmatpush.bf16.msra.mxu0 %v1098
    %1420 = vmatpush.bf16.msra.mxu0 %v1094
    %1421 = vmatpush.bf16.msra.mxu0 %v1090
    %1422 = vmatmul.bf16.gmra.mxu0 %v165
    %v1423 = vpop.f32.mrf.mxu0
    %v1424 = vadd.f32 %v1410, %v1423
    %v1425 = vpop.f32.mrf.mxu0
    %v1426 = vadd.f32 %v1412, %v1425
    %1427 = vdwg.mxu0
    %1428 = vmatpush.bf16.msra.mxu0 %v1150
    %1429 = vmatpush.bf16.msra.mxu0 %v1146
    %1430 = vmatpush.bf16.msra.mxu0 %v1142
    %1431 = vmatpush.bf16.msra.mxu0 %v1138
    %1432 = vmatpush.bf16.msra.mxu0 %v1134
    %1433 = vmatpush.bf16.msra.mxu0 %v1130
    %1434 = vmatpush.bf16.msra.mxu0 %v1126
    %1435 = vmatpush.bf16.msra.mxu0 %v1122
    %1436 = vmatmul.bf16.gmra.mxu0 %v166
    %v1437 = vpop.f32.mrf.mxu0
    %v1438 = vadd.f32 %v1424, %v1437
    %v1439 = vpop.f32.mrf.mxu0
    %v1440 = vadd.f32 %v1426, %v1439
    %1441 = vdwg.mxu0
    %1442 = vmatpush.bf16.msra.mxu0 0
    %1443 = vmatpush.bf16.msra.mxu0 0
    %1444 = vmatpush.bf16.msra.mxu0 0
    %1445 = vmatpush.bf16.msra.mxu0 0
    %1446 = vmatpush.bf16.msra.mxu0 0
    %1447 = vmatpush.bf16.msra.mxu0 0
    %1448 = vmatpush.bf16.msra.mxu0 0
    %1449 = vmatpush.bf16.msra.mxu0 %v1154
    %1450 = vmatmul.bf16.gmra.mxu0 %v1356
    %v1451 = vpop.f32.mrf.mxu0
    %v1452 = vadd.f32 %v1438, %v1451
    %v1453 = vpop.f32.mrf.mxu0
    %v1454 = vadd.f32 %v1440, %v1453
    %1455 = vdwg.mxu0
    %1456 = vmatpush.bf16.msra.mxu0 %v991
    %1457 = vmatpush.bf16.msra.mxu0 %v987
    %1458 = vmatpush.bf16.msra.mxu0 %v983
    %1459 = vmatpush.bf16.msra.mxu0 %v979
    %1460 = vmatpush.bf16.msra.mxu0 %v975
    %1461 = vmatpush.bf16.msra.mxu0 %v971
    %1462 = vmatpush.bf16.msra.mxu0 %v967
    %1463 = vmatpush.bf16.msra.mxu0 %v963
    %1464 = vmatmul.bf16.gmra.mxu0 %v161
    %v1465 = vpop.f32.mrf.mxu0
    %v1466 = vadd.f32 %v367, %v1465
    %v1467 = vpop.f32.mrf.mxu0
    %v1468 = vadd.f32 %v367, %v1467
    %1469 = vdwg.mxu0
    %1470 = vmatpush.bf16.msra.mxu0 %v1023
    %1471 = vmatpush.bf16.msra.mxu0 %v1019
    %1472 = vmatpush.bf16.msra.mxu0 %v1015
    %1473 = vmatpush.bf16.msra.mxu0 %v1011
    %1474 = vmatpush.bf16.msra.mxu0 %v1007
    %1475 = vmatpush.bf16.msra.mxu0 %v1003
    %1476 = vmatpush.bf16.msra.mxu0 %v999
    %1477 = vmatpush.bf16.msra.mxu0 %v995
    %1478 = vmatmul.bf16.gmra.mxu0 %v162
    %v1479 = vpop.f32.mrf.mxu0
    %v1480 = vadd.f32 %v1466, %v1479
    %v1481 = vpop.f32.mrf.mxu0
    %v1482 = vadd.f32 %v1468, %v1481
    %1483 = vdwg.mxu0
    %1484 = vmatpush.bf16.msra.mxu0 %v1055
    %1485 = vmatpush.bf16.msra.mxu0 %v1051
    %1486 = vmatpush.bf16.msra.mxu0 %v1047
    %1487 = vmatpush.bf16.msra.mxu0 %v1043
    %1488 = vmatpush.bf16.msra.mxu0 %v1039
    %1489 = vmatpush.bf16.msra.mxu0 %v1035
    %1490 = vmatpush.bf16.msra.mxu0 %v1031
    %1491 = vmatpush.bf16.msra.mxu0 %v1027
    %1492 = vmatmul.bf16.gmra.mxu0 %v163
    %v1493 = vpop.f32.mrf.mxu0
    %v1494 = vadd.f32 %v1480, %v1493
    %v1495 = vpop.f32.mrf.mxu0
    %v1496 = vadd.f32 %v1482, %v1495
    %1497 = vdwg.mxu0
    %1498 = vmatpush.bf16.msra.mxu0 %v1087
    %1499 = vmatpush.bf16.msra.mxu0 %v1083
    %1500 = vmatpush.bf16.msra.mxu0 %v1079
    %1501 = vmatpush.bf16.msra.mxu0 %v1075
    %1502 = vmatpush.bf16.msra.mxu0 %v1071
    %1503 = vmatpush.bf16.msra.mxu0 %v1067
    %1504 = vmatpush.bf16.msra.mxu0 %v1063
    %1505 = vmatpush.bf16.msra.mxu0 %v1059
    %1506 = vmatmul.bf16.gmra.mxu0 %v164
    %v1507 = vpop.f32.mrf.mxu0
    %v1508 = vadd.f32 %v1494, %v1507
    %v1509 = vpop.f32.mrf.mxu0
    %v1510 = vadd.f32 %v1496, %v1509
    %1511 = vdwg.mxu0
    %1512 = vmatpush.bf16.msra.mxu0 %v1119
    %1513 = vmatpush.bf16.msra.mxu0 %v1115
    %1514 = vmatpush.bf16.msra.mxu0 %v1111
    %1515 = vmatpush.bf16.msra.mxu0 %v1107
    %1516 = vmatpush.bf16.msra.mxu0 %v1103
    %1517 = vmatpush.bf16.msra.mxu0 %v1099
    %1518 = vmatpush.bf16.msra.mxu0 %v1095
    %1519 = vmatpush.bf16.msra.mxu0 %v1091
    %1520 = vmatmul.bf16.gmra.mxu0 %v165
    %v1521 = vpop.f32.mrf.mxu0
    %v1522 = vadd.f32 %v1508, %v1521
    %v1523 = vpop.f32.mrf.mxu0
    %v1524 = vadd.f32 %v1510, %v1523
    %1525 = vdwg.mxu0
    %1526 = vmatpush.bf16.msra.mxu0 %v1151
    %1527 = vmatpush.bf16.msra.mxu0 %v1147
    %1528 = vmatpush.bf16.msra.mxu0 %v1143
    %1529 = vmatpush.bf16.msra.mxu0 %v1139
    %1530 = vmatpush.bf16.msra.mxu0 %v1135
    %1531 = vmatpush.bf16.msra.mxu0 %v1131
    %1532 = vmatpush.bf16.msra.mxu0 %v1127
    %1533 = vmatpush.bf16.msra.mxu0 %v1123
    %1534 = vmatmul.bf16.gmra.mxu0 %v166
    %v1535 = vpop.f32.mrf.mxu0
    %v1536 = vadd.f32 %v1522, %v1535
    %v1537 = vpop.f32.mrf.mxu0
    %v1538 = vadd.f32 %v1524, %v1537
    %1539 = vdwg.mxu0
    %1540 = vmatpush.bf16.msra.mxu0 0
    %1541 = vmatpush.bf16.msra.mxu0 0
    %1542 = vmatpush.bf16.msra.mxu0 0
    %1543 = vmatpush.bf16.msra.mxu0 0
    %1544 = vmatpush.bf16.msra.mxu0 0
    %1545 = vmatpush.bf16.msra.mxu0 0
    %1546 = vmatpush.bf16.msra.mxu0 0
    %1547 = vmatpush.bf16.msra.mxu0 %v1155
    %1548 = vmatmul.bf16.gmra.mxu0 %v1356
    %v1549 = vpop.f32.mrf.mxu0
    %v1550 = vadd.f32 %v1536, %v1549
    %v1551 = vpop.f32.mrf.mxu0
    %v1552 = vadd.f32 %v1538, %v1551
    %1553 = vdwg.mxu0
    %1554 = vmatpush.bf16.msra.mxu0 %v992
    %1555 = vmatpush.bf16.msra.mxu0 %v988
    %1556 = vmatpush.bf16.msra.mxu0 %v984
    %1557 = vmatpush.bf16.msra.mxu0 %v980
    %1558 = vmatpush.bf16.msra.mxu0 %v976
    %1559 = vmatpush.bf16.msra.mxu0 %v972
    %1560 = vmatpush.bf16.msra.mxu0 %v968
    %1561 = vmatpush.bf16.msra.mxu0 %v964
    %1562 = vmatmul.bf16.gmra.mxu0 %v161
    %v1563 = vpop.f32.mrf.mxu0
    %v1564 = vadd.f32 %v368, %v1563
    %v1565 = vpop.f32.mrf.mxu0
    %v1566 = vadd.f32 %v368, %v1565
    %1567 = vdwg.mxu0
    %1568 = vmatpush.bf16.msra.mxu0 %v1024
    %1569 = vmatpush.bf16.msra.mxu0 %v1020
    %1570 = vmatpush.bf16.msra.mxu0 %v1016
    %1571 = vmatpush.bf16.msra.mxu0 %v1012
    %1572 = vmatpush.bf16.msra.mxu0 %v1008
    %1573 = vmatpush.bf16.msra.mxu0 %v1004
    %1574 = vmatpush.bf16.msra.mxu0 %v1000
    %1575 = vmatpush.bf16.msra.mxu0 %v996
    %1576 = vmatmul.bf16.gmra.mxu0 %v162
    %v1577 = vpop.f32.mrf.mxu0
    %v1578 = vadd.f32 %v1564, %v1577
    %v1579 = vpop.f32.mrf.mxu0
    %v1580 = vadd.f32 %v1566, %v1579
    %1581 = vdwg.mxu0
    %1582 = vmatpush.bf16.msra.mxu0 %v1056
    %1583 = vmatpush.bf16.msra.mxu0 %v1052
    %1584 = vmatpush.bf16.msra.mxu0 %v1048
    %1585 = vmatpush.bf16.msra.mxu0 %v1044
    %1586 = vmatpush.bf16.msra.mxu0 %v1040
    %1587 = vmatpush.bf16.msra.mxu0 %v1036
    %1588 = vmatpush.bf16.msra.mxu0 %v1032
    %1589 = vmatpush.bf16.msra.mxu0 %v1028
    %1590 = vmatmul.bf16.gmra.mxu0 %v163
    %v1591 = vpop.f32.mrf.mxu0
    %v1592 = vadd.f32 %v1578, %v1591
    %v1593 = vpop.f32.mrf.mxu0
    %v1594 = vadd.f32 %v1580, %v1593
    %1595 = vdwg.mxu0
    %1596 = vmatpush.bf16.msra.mxu0 %v1088
    %1597 = vmatpush.bf16.msra.mxu0 %v1084
    %1598 = vmatpush.bf16.msra.mxu0 %v1080
    %1599 = vmatpush.bf16.msra.mxu0 %v1076
    %1600 = vmatpush.bf16.msra.mxu0 %v1072
    %1601 = vmatpush.bf16.msra.mxu0 %v1068
    %1602 = vmatpush.bf16.msra.mxu0 %v1064
    %1603 = vmatpush.bf16.msra.mxu0 %v1060
    %1604 = vmatmul.bf16.gmra.mxu0 %v164
    %v1605 = vpop.f32.mrf.mxu0
    %v1606 = vadd.f32 %v1592, %v1605
    %v1607 = vpop.f32.mrf.mxu0
    %v1608 = vadd.f32 %v1594, %v1607
    %1609 = vdwg.mxu0
    %1610 = vmatpush.bf16.msra.mxu0 %v1120
    %1611 = vmatpush.bf16.msra.mxu0 %v1116
    %1612 = vmatpush.bf16.msra.mxu0 %v1112
    %1613 = vmatpush.bf16.msra.mxu0 %v1108
    %1614 = vmatpush.bf16.msra.mxu0 %v1104
    %1615 = vmatpush.bf16.msra.mxu0 %v1100
    %1616 = vmatpush.bf16.msra.mxu0 %v1096
    %1617 = vmatpush.bf16.msra.mxu0 %v1092
    %1618 = vmatmul.bf16.gmra.mxu0 %v165
    %v1619 = vpop.f32.mrf.mxu0
    %v1620 = vadd.f32 %v1606, %v1619
    %v1621 = vpop.f32.mrf.mxu0
    %v1622 = vadd.f32 %v1608, %v1621
    %1623 = vdwg.mxu0
    %1624 = vmatpush.bf16.msra.mxu0 %v1152
    %1625 = vmatpush.bf16.msra.mxu0 %v1148
    %1626 = vmatpush.bf16.msra.mxu0 %v1144
    %1627 = vmatpush.bf16.msra.mxu0 %v1140
    %1628 = vmatpush.bf16.msra.mxu0 %v1136
    %1629 = vmatpush.bf16.msra.mxu0 %v1132
    %1630 = vmatpush.bf16.msra.mxu0 %v1128
    %1631 = vmatpush.bf16.msra.mxu0 %v1124
    %1632 = vmatmul.bf16.gmra.mxu0 %v166
    %v1633 = vpop.f32.mrf.mxu0
    %v1634 = vadd.f32 %v1620, %v1633
    %v1635 = vpop.f32.mrf.mxu0
    %v1636 = vadd.f32 %v1622, %v1635
    %1637 = vdwg.mxu0
    %1638 = vmatpush.bf16.msra.mxu0 0
    %1639 = vmatpush.bf16.msra.mxu0 0
    %1640 = vmatpush.bf16.msra.mxu0 0
    %1641 = vmatpush.bf16.msra.mxu0 0
    %1642 = vmatpush.bf16.msra.mxu0 0
    %1643 = vmatpush.bf16.msra.mxu0 0
    %1644 = vmatpush.bf16.msra.mxu0 0
    %1645 = vmatpush.bf16.msra.mxu0 %v1156
    %1646 = vmatmul.bf16.gmra.mxu0 %v1356
    %v1647 = vpop.f32.mrf.mxu0
    %v1648 = vadd.f32 %v1634, %v1647
    %v1649 = vpop.f32.mrf.mxu0
    %v1650 = vadd.f32 %v1636, %v1649
    %1651 = vdwg.mxu0
    %1652 = vmatpush.bf16.msra.mxu0 %v993
    %1653 = vmatpush.bf16.msra.mxu0 %v989
    %1654 = vmatpush.bf16.msra.mxu0 %v985
    %1655 = vmatpush.bf16.msra.mxu0 %v981
    %1656 = vmatpush.bf16.msra.mxu0 %v977
    %1657 = vmatpush.bf16.msra.mxu0 %v973
    %1658 = vmatpush.bf16.msra.mxu0 %v969
    %1659 = vmatpush.bf16.msra.mxu0 %v965
    %1660 = vmatmul.bf16.gmra.mxu0 %v161
    %v1661 = vpop.f32.mrf.mxu0
    %v1662 = vadd.f32 %v369, %v1661
    %v1663 = vpop.f32.mrf.mxu0
    %v1664 = vadd.f32 %v369, %v1663
    %1665 = vdwg.mxu0
    %1666 = vmatpush.bf16.msra.mxu0 %v1025
    %1667 = vmatpush.bf16.msra.mxu0 %v1021
    %1668 = vmatpush.bf16.msra.mxu0 %v1017
    %1669 = vmatpush.bf16.msra.mxu0 %v1013
    %1670 = vmatpush.bf16.msra.mxu0 %v1009
    %1671 = vmatpush.bf16.msra.mxu0 %v1005
    %1672 = vmatpush.bf16.msra.mxu0 %v1001
    %1673 = vmatpush.bf16.msra.mxu0 %v997
    %1674 = vmatmul.bf16.gmra.mxu0 %v162
    %v1675 = vpop.f32.mrf.mxu0
    %v1676 = vadd.f32 %v1662, %v1675
    %v1677 = vpop.f32.mrf.mxu0
    %v1678 = vadd.f32 %v1664, %v1677
    %1679 = vdwg.mxu0
    %1680 = vmatpush.bf16.msra.mxu0 %v1057
    %1681 = vmatpush.bf16.msra.mxu0 %v1053
    %1682 = vmatpush.bf16.msra.mxu0 %v1049
    %1683 = vmatpush.bf16.msra.mxu0 %v1045
    %1684 = vmatpush.bf16.msra.mxu0 %v1041
    %1685 = vmatpush.bf16.msra.mxu0 %v1037
    %1686 = vmatpush.bf16.msra.mxu0 %v1033
    %1687 = vmatpush.bf16.msra.mxu0 %v1029
    %1688 = vmatmul.bf16.gmra.mxu0 %v163
    %v1689 = vpop.f32.mrf.mxu0
    %v1690 = vadd.f32 %v1676, %v1689
    %v1691 = vpop.f32.mrf.mxu0
    %v1692 = vadd.f32 %v1678, %v1691
    %1693 = vdwg.mxu0
    %1694 = vmatpush.bf16.msra.mxu0 %v1089
    %1695 = vmatpush.bf16.msra.mxu0 %v1085
    %1696 = vmatpush.bf16.msra.mxu0 %v1081
    %1697 = vmatpush.bf16.msra.mxu0 %v1077
    %1698 = vmatpush.bf16.msra.mxu0 %v1073
    %1699 = vmatpush.bf16.msra.mxu0 %v1069
    %1700 = vmatpush.bf16.msra.mxu0 %v1065
    %1701 = vmatpush.bf16.msra.mxu0 %v1061
    %1702 = vmatmul.bf16.gmra.mxu0 %v164
    %v1703 = vpop.f32.mrf.mxu0
    %v1704 = vadd.f32 %v1690, %v1703
    %v1705 = vpop.f32.mrf.mxu0
    %v1706 = vadd.f32 %v1692, %v1705
    %1707 = vdwg.mxu0
    %1708 = vmatpush.bf16.msra.mxu0 %v1121
    %1709 = vmatpush.bf16.msra.mxu0 %v1117
    %1710 = vmatpush.bf16.msra.mxu0 %v1113
    %1711 = vmatpush.bf16.msra.mxu0 %v1109
    %1712 = vmatpush.bf16.msra.mxu0 %v1105
    %1713 = vmatpush.bf16.msra.mxu0 %v1101
    %1714 = vmatpush.bf16.msra.mxu0 %v1097
    %1715 = vmatpush.bf16.msra.mxu0 %v1093
    %1716 = vmatmul.bf16.gmra.mxu0 %v165
    %v1717 = vpop.f32.mrf.mxu0
    %v1718 = vadd.f32 %v1704, %v1717
    %v1719 = vpop.f32.mrf.mxu0
    %v1720 = vadd.f32 %v1706, %v1719
    %1721 = vdwg.mxu0
    %1722 = vmatpush.bf16.msra.mxu0 %v1153
    %1723 = vmatpush.bf16.msra.mxu0 %v1149
    %1724 = vmatpush.bf16.msra.mxu0 %v1145
    %1725 = vmatpush.bf16.msra.mxu0 %v1141
    %1726 = vmatpush.bf16.msra.mxu0 %v1137
    %1727 = vmatpush.bf16.msra.mxu0 %v1133
    %1728 = vmatpush.bf16.msra.mxu0 %v1129
    %1729 = vmatpush.bf16.msra.mxu0 %v1125
    %1730 = vmatmul.bf16.gmra.mxu0 %v166
    %v1731 = vpop.f32.mrf.mxu0
    %v1732 = vadd.f32 %v1718, %v1731
    %v1733 = vpop.f32.mrf.mxu0
    %v1734 = vadd.f32 %v1720, %v1733
    %1735 = vdwg.mxu0
    %1736 = vmatpush.bf16.msra.mxu0 0
    %1737 = vmatpush.bf16.msra.mxu0 0
    %1738 = vmatpush.bf16.msra.mxu0 0
    %1739 = vmatpush.bf16.msra.mxu0 0
    %1740 = vmatpush.bf16.msra.mxu0 0
    %1741 = vmatpush.bf16.msra.mxu0 0
    %1742 = vmatpush.bf16.msra.mxu0 0
    %1743 = vmatpush.bf16.msra.mxu0 %v1157
    %1744 = vmatmul.bf16.gmra.mxu0 %v1356
    %v1745 = vpop.f32.mrf.mxu0
    %v1746 = vadd.f32 %v1732, %v1745
    %v1747 = vpop.f32.mrf.mxu0
    %v1748 = vadd.f32 %v1734, %v1747
    %1749 = vdwg.mxu0
    %v1750 = vmax.f32 %v1452, 0.0
    %v1751 = vmax.f32 %v1550, 0.0
    %v1752 = vmax.f32 %v1648, 0.0
    %v1753 = vmax.f32 %v1746, 0.0
    %v1754 = vmax.f32 %v1454, 0.0
    %v1755 = vmax.f32 %v1552, 0.0
    %v1756 = vmax.f32 %v1650, 0.0
    %v1757 = vmax.f32 %v1748, 0.0
    %v1758 = vpack.c.bf16 %v1754, %v1750
    %v1759 = vpack.c.bf16 %v1755, %v1751
    %v1760 = vpack.c.bf16 %v1756, %v1752
    %v1761 = vpack.c.bf16 %v1757, %v1753
    %v1762 = vld [vmem:[#allocation8] sm:$0xff]
    %v1763 = vld [vmem:[#allocation8 + $0x8] sm:$0xff]
    %v1764 = vld [vmem:[#allocation8 + $0x10] sm:$0xff]
    %v1765 = vld [vmem:[#allocation8 + $0x18] sm:$0xff]
    %v1766 = vld [vmem:[#allocation8 + $0x20] sm:$0xff]
    %v1767 = vld [vmem:[#allocation8 + $0x28] sm:$0xff]
    %v1768 = vld [vmem:[#allocation8 + $0x30] sm:$0xff]
    %v1769 = vld [vmem:[#allocation8 + $0x38] sm:$0xff]
    %v1770 = vld [vmem:[#allocation8 + $0x40] sm:$0xff]
    %v1771 = vld [vmem:[#allocation8 + $0x48] sm:$0xff]
    %v1772 = vld [vmem:[#allocation8 + $0x50] sm:$0xff]
    %v1773 = vld [vmem:[#allocation8 + $0x58] sm:$0xff]
    %v1774 = vld [vmem:[#allocation8 + $0x60] sm:$0xff]
    %v1775 = vld [vmem:[#allocation8 + $0x68] sm:$0xff]
    %v1776 = vld [vmem:[#allocation8 + $0x70] sm:$0xff]
    %v1777 = vld [vmem:[#allocation8 + $0x78] sm:$0xff]
    %v1778 = vld [vmem:[#allocation8 + $0x80] sm:$0xff]
    %v1779 = vld [vmem:[#allocation8 + $0x88] sm:$0xff]
    %v1780 = vld [vmem:[#allocation8 + $0x90] sm:$0xff]
    %v1781 = vld [vmem:[#allocation8 + $0x98] sm:$0xff]
    %v1782 = vld [vmem:[#allocation8 + $0xa0] sm:$0xff]
    %v1783 = vld [vmem:[#allocation8 + $0xa8] sm:$0xff]
    %v1784 = vld [vmem:[#allocation8 + $0xb0] sm:$0xff]
    %v1785 = vld [vmem:[#allocation8 + $0xb8] sm:$0xff]
    %v1786 = vld [vmem:[#allocation8 + $0xc0] sm:$0xff]
    %v1787 = vld [vmem:[#allocation8 + $0xc8] sm:$0xff]
    %v1788 = vld [vmem:[#allocation8 + $0xd0] sm:$0xff]
    %v1789 = vld [vmem:[#allocation8 + $0xd8] sm:$0xff]
    %v1790 = vld [vmem:[#allocation8 + $0xe0] sm:$0xff]
    %v1791 = vld [vmem:[#allocation8 + $0xe8] sm:$0xff]
    %v1792 = vld [vmem:[#allocation8 + $0xf0] sm:$0xff]
    %v1793 = vld [vmem:[#allocation8 + $0xf8] sm:$0xff]
    %v1794 = vld [vmem:[#allocation8 + $0x100] sm:$0xff]
    %v1795 = vld [vmem:[#allocation8 + $0x108] sm:$0xff]
    %v1796 = vld [vmem:[#allocation8 + $0x110] sm:$0xff]
    %v1797 = vld [vmem:[#allocation8 + $0x118] sm:$0xff]
    %v1798 = vld [vmem:[#allocation8 + $0x120] sm:$0xff]
    %v1799 = vld [vmem:[#allocation8 + $0x128] sm:$0xff]
    %v1800 = vld [vmem:[#allocation8 + $0x130] sm:$0xff]
    %v1801 = vld [vmem:[#allocation8 + $0x138] sm:$0xff]
    %v1802 = vld [vmem:[#allocation8 + $0x140] sm:$0xff]
    %v1803 = vld [vmem:[#allocation8 + $0x148] sm:$0xff]
    %v1804 = vld [vmem:[#allocation8 + $0x150] sm:$0xff]
    %v1805 = vld [vmem:[#allocation8 + $0x158] sm:$0xff]
    %v1806 = vld [vmem:[#allocation8 + $0x160] sm:$0xff]
    %v1807 = vld [vmem:[#allocation8 + $0x168] sm:$0xff]
    %v1808 = vld [vmem:[#allocation8 + $0x170] sm:$0xff]
    %v1809 = vld [vmem:[#allocation8 + $0x178] sm:$0xff]
    %v1810 = vld [vmem:[#allocation8 + $0x180] sm:$0xff]
    %v1811 = vld [vmem:[#allocation8 + $0x188] sm:$0xff]
    %v1812 = vld [vmem:[#allocation8 + $0x190] sm:$0xff]
    %v1813 = vld [vmem:[#allocation8 + $0x198] sm:$0xff]
    %v1814 = vld [vmem:[#allocation8 + $0x1a0] sm:$0xff]
    %v1815 = vld [vmem:[#allocation8 + $0x1a8] sm:$0xff]
    %v1816 = vld [vmem:[#allocation8 + $0x1b0] sm:$0xff]
    %v1817 = vld [vmem:[#allocation8 + $0x1b8] sm:$0xff]
    %v1818 = vld [vmem:[#allocation8 + $0x1c0] sm:$0xff]
    %v1819 = vld [vmem:[#allocation8 + $0x1c8] sm:$0xff]
    %v1820 = vld [vmem:[#allocation8 + $0x1d0] sm:$0xff]
    %v1821 = vld [vmem:[#allocation8 + $0x1d8] sm:$0xff]
    %v1822 = vld [vmem:[#allocation8 + $0x1e0] sm:$0xff]
    %v1823 = vld [vmem:[#allocation8 + $0x1e8] sm:$0xff]
    %v1824 = vld [vmem:[#allocation8 + $0x1f0] sm:$0xff]
    %v1825 = vld [vmem:[#allocation8 + $0x1f8] sm:$0xff]
    %v1826 = vld [vmem:[%s4] sm:$0x3]
    %v1828 = vperm.slane %v1826, 0
    %v1829 = vperm.slane %v1826, 1
    %v1896 = vunpack.c.l.b16 %v1762
    %v1897 = vunpack.c.h.b16 %v1762
    %v1898 = vunpack.c.l.b16 %v1763
    %v1899 = vunpack.c.h.b16 %v1763
    %v1900 = vunpack.c.l.b16 %v1764
    %v1901 = vunpack.c.h.b16 %v1764
    %v1902 = vunpack.c.l.b16 %v1765
    %v1903 = vunpack.c.h.b16 %v1765
    %v1904 = vunpack.c.l.b16 %v1766
    %v1905 = vunpack.c.h.b16 %v1766
    %v1906 = vunpack.c.l.b16 %v1767
    %v1907 = vunpack.c.h.b16 %v1767
    %v1908 = vunpack.c.l.b16 %v1768
    %v1909 = vunpack.c.h.b16 %v1768
    %v1910 = vunpack.c.l.b16 %v1769
    %v1911 = vunpack.c.h.b16 %v1769
    %v1912 = vunpack.c.l.b16 %v1770
    %v1913 = vunpack.c.h.b16 %v1770
    %v1914 = vunpack.c.l.b16 %v1771
    %v1915 = vunpack.c.h.b16 %v1771
    %v1916 = vunpack.c.l.b16 %v1772
    %v1917 = vunpack.c.h.b16 %v1772
    %v1918 = vunpack.c.l.b16 %v1773
    %v1919 = vunpack.c.h.b16 %v1773
    %v1920 = vunpack.c.l.b16 %v1774
    %v1921 = vunpack.c.h.b16 %v1774
    %v1922 = vunpack.c.l.b16 %v1775
    %v1923 = vunpack.c.h.b16 %v1775
    %v1924 = vunpack.c.l.b16 %v1776
    %v1925 = vunpack.c.h.b16 %v1776
    %v1926 = vunpack.c.l.b16 %v1777
    %v1927 = vunpack.c.h.b16 %v1777
    %v1928 = vunpack.c.l.b16 %v1778
    %v1929 = vunpack.c.h.b16 %v1778
    %v1930 = vunpack.c.l.b16 %v1779
    %v1931 = vunpack.c.h.b16 %v1779
    %v1932 = vunpack.c.l.b16 %v1780
    %v1933 = vunpack.c.h.b16 %v1780
    %v1934 = vunpack.c.l.b16 %v1781
    %v1935 = vunpack.c.h.b16 %v1781
    %v1936 = vunpack.c.l.b16 %v1782
    %v1937 = vunpack.c.h.b16 %v1782
    %v1938 = vunpack.c.l.b16 %v1783
    %v1939 = vunpack.c.h.b16 %v1783
    %v1940 = vunpack.c.l.b16 %v1784
    %v1941 = vunpack.c.h.b16 %v1784
    %v1942 = vunpack.c.l.b16 %v1785
    %v1943 = vunpack.c.h.b16 %v1785
    %v1944 = vunpack.c.l.b16 %v1786
    %v1945 = vunpack.c.h.b16 %v1786
    %v1946 = vunpack.c.l.b16 %v1787
    %v1947 = vunpack.c.h.b16 %v1787
    %v1948 = vunpack.c.l.b16 %v1788
    %v1949 = vunpack.c.h.b16 %v1788
    %v1950 = vunpack.c.l.b16 %v1789
    %v1951 = vunpack.c.h.b16 %v1789
    %v1952 = vunpack.c.l.b16 %v1790
    %v1953 = vunpack.c.h.b16 %v1790
    %v1954 = vunpack.c.l.b16 %v1791
    %v1955 = vunpack.c.h.b16 %v1791
    %v1956 = vunpack.c.l.b16 %v1792
    %v1957 = vunpack.c.h.b16 %v1792
    %v1958 = vunpack.c.l.b16 %v1793
    %v1959 = vunpack.c.h.b16 %v1793
    %v1960 = vunpack.c.l.b16 %v1794
    %v1961 = vunpack.c.h.b16 %v1794
    %v1962 = vunpack.c.l.b16 %v1795
    %v1963 = vunpack.c.h.b16 %v1795
    %v1964 = vunpack.c.l.b16 %v1796
    %v1965 = vunpack.c.h.b16 %v1796
    %v1966 = vunpack.c.l.b16 %v1797
    %v1967 = vunpack.c.h.b16 %v1797
    %v1968 = vunpack.c.l.b16 %v1798
    %v1969 = vunpack.c.h.b16 %v1798
    %v1970 = vunpack.c.l.b16 %v1799
    %v1971 = vunpack.c.h.b16 %v1799
    %v1972 = vunpack.c.l.b16 %v1800
    %v1973 = vunpack.c.h.b16 %v1800
    %v1974 = vunpack.c.l.b16 %v1801
    %v1975 = vunpack.c.h.b16 %v1801
    %v1976 = vunpack.c.l.b16 %v1802
    %v1977 = vunpack.c.h.b16 %v1802
    %v1978 = vunpack.c.l.b16 %v1803
    %v1979 = vunpack.c.h.b16 %v1803
    %v1980 = vunpack.c.l.b16 %v1804
    %v1981 = vunpack.c.h.b16 %v1804
    %v1982 = vunpack.c.l.b16 %v1805
    %v1983 = vunpack.c.h.b16 %v1805
    %v1984 = vunpack.c.l.b16 %v1806
    %v1985 = vunpack.c.h.b16 %v1806
    %v1986 = vunpack.c.l.b16 %v1807
    %v1987 = vunpack.c.h.b16 %v1807
    %v1988 = vunpack.c.l.b16 %v1808
    %v1989 = vunpack.c.h.b16 %v1808
    %v1990 = vunpack.c.l.b16 %v1809
    %v1991 = vunpack.c.h.b16 %v1809
    %v1992 = vunpack.c.l.b16 %v1810
    %v1993 = vunpack.c.h.b16 %v1810
    %v1994 = vunpack.c.l.b16 %v1811
    %v1995 = vunpack.c.h.b16 %v1811
    %v1996 = vunpack.c.l.b16 %v1812
    %v1997 = vunpack.c.h.b16 %v1812
    %v1998 = vunpack.c.l.b16 %v1813
    %v1999 = vunpack.c.h.b16 %v1813
    %v2000 = vunpack.c.l.b16 %v1814
    %v2001 = vunpack.c.h.b16 %v1814
    %v2002 = vunpack.c.l.b16 %v1815
    %v2003 = vunpack.c.h.b16 %v1815
    %v2004 = vunpack.c.l.b16 %v1816
    %v2005 = vunpack.c.h.b16 %v1816
    %v2006 = vunpack.c.l.b16 %v1817
    %v2007 = vunpack.c.h.b16 %v1817
    %v2008 = vunpack.c.l.b16 %v1818
    %v2009 = vunpack.c.h.b16 %v1818
    %v2010 = vunpack.c.l.b16 %v1819
    %v2011 = vunpack.c.h.b16 %v1819
    %v2012 = vunpack.c.l.b16 %v1820
    %v2013 = vunpack.c.h.b16 %v1820
    %v2014 = vunpack.c.l.b16 %v1821
    %v2015 = vunpack.c.h.b16 %v1821
    %v2016 = vunpack.c.l.b16 %v1822
    %v2017 = vunpack.c.h.b16 %v1822
    %v2018 = vunpack.c.l.b16 %v1823
    %v2019 = vunpack.c.h.b16 %v1823
    %v2020 = vunpack.c.l.b16 %v1824
    %v2021 = vunpack.c.h.b16 %v1824
    %v2022 = vunpack.c.l.b16 %v1825
    %v2023 = vunpack.c.h.b16 %v1825
    %v2024 = vpack.c.b16 %v1898, %v1896
    %v2025 = vpack.c.b16 %v1899, %v1897
    %v2026 = vpack.c.b16 %v1902, %v1900
    %v2027 = vpack.c.b16 %v1903, %v1901
    %v2028 = vpack.c.b16 %v1906, %v1904
    %v2029 = vpack.c.b16 %v1907, %v1905
    %v2030 = vpack.c.b16 %v1910, %v1908
    %v2031 = vpack.c.b16 %v1911, %v1909
    %v2032 = vpack.c.b16 %v1914, %v1912
    %v2033 = vpack.c.b16 %v1915, %v1913
    %v2034 = vpack.c.b16 %v1918, %v1916
    %v2035 = vpack.c.b16 %v1919, %v1917
    %v2036 = vpack.c.b16 %v1922, %v1920
    %v2037 = vpack.c.b16 %v1923, %v1921
    %v2038 = vpack.c.b16 %v1926, %v1924
    %v2039 = vpack.c.b16 %v1927, %v1925
    %v2040 = vpack.c.b16 %v1930, %v1928
    %v2041 = vpack.c.b16 %v1931, %v1929
    %v2042 = vpack.c.b16 %v1934, %v1932
    %v2043 = vpack.c.b16 %v1935, %v1933
    %v2044 = vpack.c.b16 %v1938, %v1936
    %v2045 = vpack.c.b16 %v1939, %v1937
    %v2046 = vpack.c.b16 %v1942, %v1940
    %v2047 = vpack.c.b16 %v1943, %v1941
    %v2048 = vpack.c.b16 %v1946, %v1944
    %v2049 = vpack.c.b16 %v1947, %v1945
    %v2050 = vpack.c.b16 %v1950, %v1948
    %v2051 = vpack.c.b16 %v1951, %v1949
    %v2052 = vpack.c.b16 %v1954, %v1952
    %v2053 = vpack.c.b16 %v1955, %v1953
    %v2054 = vpack.c.b16 %v1958, %v1956
    %v2055 = vpack.c.b16 %v1959, %v1957
    %v2056 = vpack.c.b16 %v1962, %v1960
    %v2057 = vpack.c.b16 %v1963, %v1961
    %v2058 = vpack.c.b16 %v1966, %v1964
    %v2059 = vpack.c.b16 %v1967, %v1965
    %v2060 = vpack.c.b16 %v1970, %v1968
    %v2061 = vpack.c.b16 %v1971, %v1969
    %v2062 = vpack.c.b16 %v1974, %v1972
    %v2063 = vpack.c.b16 %v1975, %v1973
    %v2064 = vpack.c.b16 %v1978, %v1976
    %v2065 = vpack.c.b16 %v1979, %v1977
    %v2066 = vpack.c.b16 %v1982, %v1980
    %v2067 = vpack.c.b16 %v1983, %v1981
    %v2068 = vpack.c.b16 %v1986, %v1984
    %v2069 = vpack.c.b16 %v1987, %v1985
    %v2070 = vpack.c.b16 %v1990, %v1988
    %v2071 = vpack.c.b16 %v1991, %v1989
    %v2072 = vpack.c.b16 %v1994, %v1992
    %v2073 = vpack.c.b16 %v1995, %v1993
    %v2074 = vpack.c.b16 %v1998, %v1996
    %v2075 = vpack.c.b16 %v1999, %v1997
    %v2076 = vpack.c.b16 %v2002, %v2000
    %v2077 = vpack.c.b16 %v2003, %v2001
    %v2078 = vpack.c.b16 %v2006, %v2004
    %v2079 = vpack.c.b16 %v2007, %v2005
    %v2080 = vpack.c.b16 %v2010, %v2008
    %v2081 = vpack.c.b16 %v2011, %v2009
    %v2082 = vpack.c.b16 %v2014, %v2012
    %v2083 = vpack.c.b16 %v2015, %v2013
    %v2084 = vpack.c.b16 %v2018, %v2016
    %v2085 = vpack.c.b16 %v2019, %v2017
    %v2086 = vpack.c.b16 %v2022, %v2020
    %v2087 = vpack.c.b16 %v2023, %v2021
    %2152 = vmatpush.bf16.msra.mxu0 %v2038
    %2153 = vmatpush.bf16.msra.mxu0 %v2036
    %2154 = vmatpush.bf16.msra.mxu0 %v2034
    %2155 = vmatpush.bf16.msra.mxu0 %v2032
    %2156 = vmatpush.bf16.msra.mxu0 %v2030
    %2157 = vmatpush.bf16.msra.mxu0 %v2028
    %2158 = vmatpush.bf16.msra.mxu0 %v2026
    %2159 = vmatpush.bf16.msra.mxu0 %v2024
    %2160 = vmatmul.bf16.gmra.mxu0 %v1758
    %v2161 = vpop.f32.mrf.mxu0
    %v2162 = vadd.f32 %v1828, %v2161
    %v2163 = vpop.f32.mrf.mxu0
    %v2164 = vadd.f32 %v1828, %v2163
    %2165 = vdwg.mxu0
    %2166 = vmatpush.bf16.msra.mxu0 %v2054
    %2167 = vmatpush.bf16.msra.mxu0 %v2052
    %2168 = vmatpush.bf16.msra.mxu0 %v2050
    %2169 = vmatpush.bf16.msra.mxu0 %v2048
    %2170 = vmatpush.bf16.msra.mxu0 %v2046
    %2171 = vmatpush.bf16.msra.mxu0 %v2044
    %2172 = vmatpush.bf16.msra.mxu0 %v2042
    %2173 = vmatpush.bf16.msra.mxu0 %v2040
    %2174 = vmatmul.bf16.gmra.mxu0 %v1759
    %v2175 = vpop.f32.mrf.mxu0
    %v2176 = vadd.f32 %v2162, %v2175
    %v2177 = vpop.f32.mrf.mxu0
    %v2178 = vadd.f32 %v2164, %v2177
    %2179 = vdwg.mxu0
    %2180 = vmatpush.bf16.msra.mxu0 %v2070
    %2181 = vmatpush.bf16.msra.mxu0 %v2068
    %2182 = vmatpush.bf16.msra.mxu0 %v2066
    %2183 = vmatpush.bf16.msra.mxu0 %v2064
    %2184 = vmatpush.bf16.msra.mxu0 %v2062
    %2185 = vmatpush.bf16.msra.mxu0 %v2060
    %2186 = vmatpush.bf16.msra.mxu0 %v2058
    %2187 = vmatpush.bf16.msra.mxu0 %v2056
    %2188 = vmatmul.bf16.gmra.mxu0 %v1760
    %v2189 = vpop.f32.mrf.mxu0
    %v2190 = vadd.f32 %v2176, %v2189
    %v2191 = vpop.f32.mrf.mxu0
    %v2192 = vadd.f32 %v2178, %v2191
    %2193 = vdwg.mxu0
    %2194 = vmatpush.bf16.msra.mxu0 %v2086
    %2195 = vmatpush.bf16.msra.mxu0 %v2084
    %2196 = vmatpush.bf16.msra.mxu0 %v2082
    %2197 = vmatpush.bf16.msra.mxu0 %v2080
    %2198 = vmatpush.bf16.msra.mxu0 %v2078
    %2199 = vmatpush.bf16.msra.mxu0 %v2076
    %2200 = vmatpush.bf16.msra.mxu0 %v2074
    %2201 = vmatpush.bf16.msra.mxu0 %v2072
    %2202 = vmatmul.bf16.gmra.mxu0 %v1761
    %v2203 = vpop.f32.mrf.mxu0
    %v2204 = vadd.f32 %v2190, %v2203
    %v2205 = vpop.f32.mrf.mxu0
    %v2206 = vadd.f32 %v2192, %v2205
    %2207 = vdwg.mxu0
    %2208 = vmatpush.bf16.msra.mxu0 %v2039
    %2209 = vmatpush.bf16.msra.mxu0 %v2037
    %2210 = vmatpush.bf16.msra.mxu0 %v2035
    %2211 = vmatpush.bf16.msra.mxu0 %v2033
    %2212 = vmatpush.bf16.msra.mxu0 %v2031
    %2213 = vmatpush.bf16.msra.mxu0 %v2029
    %2214 = vmatpush.bf16.msra.mxu0 %v2027
    %2215 = vmatpush.bf16.msra.mxu0 %v2025
    %2216 = vmatmul.bf16.gmra.mxu0 %v1758
    %v2217 = vpop.f32.mrf.mxu0
    %v2218 = vadd.f32 %v1829, %v2217
    %v2219 = vpop.f32.mrf.mxu0
    %v2220 = vadd.f32 %v1829, %v2219
    %2221 = vdwg.mxu0
    %2222 = vmatpush.bf16.msra.mxu0 %v2055
    %2223 = vmatpush.bf16.msra.mxu0 %v2053
    %2224 = vmatpush.bf16.msra.mxu0 %v2051
    %2225 = vmatpush.bf16.msra.mxu0 %v2049
    %2226 = vmatpush.bf16.msra.mxu0 %v2047
    %2227 = vmatpush.bf16.msra.mxu0 %v2045
    %2228 = vmatpush.bf16.msra.mxu0 %v2043
    %2229 = vmatpush.bf16.msra.mxu0 %v2041
    %2230 = vmatmul.bf16.gmra.mxu0 %v1759
    %v2231 = vpop.f32.mrf.mxu0
    %v2232 = vadd.f32 %v2218, %v2231
    %v2233 = vpop.f32.mrf.mxu0
    %v2234 = vadd.f32 %v2220, %v2233
    %2235 = vdwg.mxu0
    %2236 = vmatpush.bf16.msra.mxu0 %v2071
    %2237 = vmatpush.bf16.msra.mxu0 %v2069
    %2238 = vmatpush.bf16.msra.mxu0 %v2067
    %2239 = vmatpush.bf16.msra.mxu0 %v2065
    %2240 = vmatpush.bf16.msra.mxu0 %v2063
    %2241 = vmatpush.bf16.msra.mxu0 %v2061
    %2242 = vmatpush.bf16.msra.mxu0 %v2059
    %2243 = vmatpush.bf16.msra.mxu0 %v2057
    %2244 = vmatmul.bf16.gmra.mxu0 %v1760
    %v2245 = vpop.f32.mrf.mxu0
    %v2246 = vadd.f32 %v2232, %v2245
    %v2247 = vpop.f32.mrf.mxu0
    %v2248 = vadd.f32 %v2234, %v2247
    %2249 = vdwg.mxu0
    %2250 = vmatpush.bf16.msra.mxu0 %v2087
    %2251 = vmatpush.bf16.msra.mxu0 %v2085
    %2252 = vmatpush.bf16.msra.mxu0 %v2083
    %2253 = vmatpush.bf16.msra.mxu0 %v2081
    %2254 = vmatpush.bf16.msra.mxu0 %v2079
    %2255 = vmatpush.bf16.msra.mxu0 %v2077
    %2256 = vmatpush.bf16.msra.mxu0 %v2075
    %2257 = vmatpush.bf16.msra.mxu0 %v2073
    %2258 = vmatmul.bf16.gmra.mxu0 %v1761
    %v2259 = vpop.f32.mrf.mxu0
    %v2260 = vadd.f32 %v2246, %v2259
    %v2261 = vpop.f32.mrf.mxu0
    %v2262 = vadd.f32 %v2248, %v2261
    %2263 = vdwg.mxu0
    %v2264 = vmax.f32 %v2204, 0.0
    %v2265 = vmax.f32 %v2260, 0.0
    %v2266 = vmax.f32 %v2206, 0.0
    %v2267 = vmax.f32 %v2262, 0.0
    %v2268 = vpack.c.bf16 %v2266, %v2264
    %v2269 = vpack.c.bf16 %v2267, %v2265
    %v2270 = vld [vmem:[#allocation10] sm:$0xf]
    %v2271 = vld [vmem:[#allocation10 + $0x4] sm:$0xf]
    %v2272 = vld [vmem:[#allocation10 + $0x8] sm:$0xf]
    %v2273 = vld [vmem:[#allocation10 + $0xc] sm:$0xf]
    %v2274 = vld [vmem:[#allocation10 + $0x10] sm:$0xf]
    %v2275 = vld [vmem:[#allocation10 + $0x14] sm:$0xf]
    %v2276 = vld [vmem:[#allocation10 + $0x18] sm:$0xf]
    %v2277 = vld [vmem:[#allocation10 + $0x1c] sm:$0xf]
    %v2278 = vld [vmem:[#allocation10 + $0x20] sm:$0xf]
    %v2279 = vld [vmem:[#allocation10 + $0x24] sm:$0xf]
    %v2280 = vld [vmem:[#allocation10 + $0x28] sm:$0xf]
    %v2281 = vld [vmem:[#allocation10 + $0x2c] sm:$0xf]
    %v2282 = vld [vmem:[#allocation10 + $0x30] sm:$0xf]
    %v2283 = vld [vmem:[#allocation10 + $0x34] sm:$0xf]
    %v2284 = vld [vmem:[#allocation10 + $0x38] sm:$0xf]
    %v2285 = vld [vmem:[#allocation10 + $0x3c] sm:$0xf]
    %v2286 = vld [vmem:[#allocation10 + $0x40] sm:$0xf]
    %v2287 = vld [vmem:[#allocation10 + $0x44] sm:$0xf]
    %v2288 = vld [vmem:[#allocation10 + $0x48] sm:$0xf]
    %v2289 = vld [vmem:[#allocation10 + $0x4c] sm:$0xf]
    %v2290 = vld [vmem:[#allocation10 + $0x50] sm:$0xf]
    %v2291 = vld [vmem:[#allocation10 + $0x54] sm:$0xf]
    %v2292 = vld [vmem:[#allocation10 + $0x58] sm:$0xf]
    %v2293 = vld [vmem:[#allocation10 + $0x5c] sm:$0xf]
    %v2294 = vld [vmem:[#allocation10 + $0x60] sm:$0xf]
    %v2295 = vld [vmem:[#allocation10 + $0x64] sm:$0xf]
    %v2296 = vld [vmem:[#allocation10 + $0x68] sm:$0xf]
    %v2297 = vld [vmem:[#allocation10 + $0x6c] sm:$0xf]
    %v2298 = vld [vmem:[#allocation10 + $0x70] sm:$0xf]
    %v2299 = vld [vmem:[#allocation10 + $0x74] sm:$0xf]
    %v2300 = vld [vmem:[#allocation10 + $0x78] sm:$0xf]
    %v2301 = vld [vmem:[#allocation10 + $0x7c] sm:$0xf]
    %v2302 = vld [vmem:[%s6] sm:$0x1]
    %v2304 = vperm.slane %v2302, 0
    %v2338 = vunpack.c.l.b16 %v2270
    %v2339 = vunpack.c.l.b16 %v2271
    %v2340 = vunpack.c.l.b16 %v2272
    %v2341 = vunpack.c.l.b16 %v2273
    %v2342 = vunpack.c.l.b16 %v2274
    %v2343 = vunpack.c.l.b16 %v2275
    %v2344 = vunpack.c.l.b16 %v2276
    %v2345 = vunpack.c.l.b16 %v2277
    %v2346 = vunpack.c.l.b16 %v2278
    %v2347 = vunpack.c.l.b16 %v2279
    %v2348 = vunpack.c.l.b16 %v2280
    %v2349 = vunpack.c.l.b16 %v2281
    %v2350 = vunpack.c.l.b16 %v2282
    %v2351 = vunpack.c.l.b16 %v2283
    %v2352 = vunpack.c.l.b16 %v2284
    %v2353 = vunpack.c.l.b16 %v2285
    %v2354 = vunpack.c.l.b16 %v2286
    %v2355 = vunpack.c.l.b16 %v2287
    %v2356 = vunpack.c.l.b16 %v2288
    %v2357 = vunpack.c.l.b16 %v2289
    %v2358 = vunpack.c.l.b16 %v2290
    %v2359 = vunpack.c.l.b16 %v2291
    %v2360 = vunpack.c.l.b16 %v2292
    %v2361 = vunpack.c.l.b16 %v2293
    %v2362 = vunpack.c.l.b16 %v2294
    %v2363 = vunpack.c.l.b16 %v2295
    %v2364 = vunpack.c.l.b16 %v2296
    %v2365 = vunpack.c.l.b16 %v2297
    %v2366 = vunpack.c.l.b16 %v2298
    %v2367 = vunpack.c.l.b16 %v2299
    %v2368 = vunpack.c.l.b16 %v2300
    %v2369 = vunpack.c.l.b16 %v2301
    %v2370 = vpack.c.b16 %v2339, %v2338
    %v2371 = vpack.c.b16 %v2341, %v2340
    %v2372 = vpack.c.b16 %v2343, %v2342
    %v2373 = vpack.c.b16 %v2345, %v2344
    %v2374 = vpack.c.b16 %v2347, %v2346
    %v2375 = vpack.c.b16 %v2349, %v2348
    %v2376 = vpack.c.b16 %v2351, %v2350
    %v2377 = vpack.c.b16 %v2353, %v2352
    %v2378 = vpack.c.b16 %v2355, %v2354
    %v2379 = vpack.c.b16 %v2357, %v2356
    %v2380 = vpack.c.b16 %v2359, %v2358
    %v2381 = vpack.c.b16 %v2361, %v2360
    %v2382 = vpack.c.b16 %v2363, %v2362
    %v2383 = vpack.c.b16 %v2365, %v2364
    %v2384 = vpack.c.b16 %v2367, %v2366
    %v2385 = vpack.c.b16 %v2369, %v2368
    %2402 = vmatpush.bf16.msra.mxu0 %v2377
    %2403 = vmatpush.bf16.msra.mxu0 %v2376
    %2404 = vmatpush.bf16.msra.mxu0 %v2375
    %2405 = vmatpush.bf16.msra.mxu0 %v2374
    %2406 = vmatpush.bf16.msra.mxu0 %v2373
    %2407 = vmatpush.bf16.msra.mxu0 %v2372
    %2408 = vmatpush.bf16.msra.mxu0 %v2371
    %2409 = vmatpush.bf16.msra.mxu0 %v2370
    %2410 = vmatmul.bf16.gmra.mxu0 %v2268
    %v2411 = vpop.f32.mrf.mxu0
    %v2412 = vadd.f32 %v2304, %v2411
    %v2413 = vpop.f32.mrf.mxu0
    %v2414 = vadd.f32 %v2304, %v2413
    %2415 = vdwg.mxu0
    %2416 = vmatpush.bf16.msra.mxu0 %v2385
    %2417 = vmatpush.bf16.msra.mxu0 %v2384
    %2418 = vmatpush.bf16.msra.mxu0 %v2383
    %2419 = vmatpush.bf16.msra.mxu0 %v2382
    %2420 = vmatpush.bf16.msra.mxu0 %v2381
    %2421 = vmatpush.bf16.msra.mxu0 %v2380
    %2422 = vmatpush.bf16.msra.mxu0 %v2379
    %2423 = vmatpush.bf16.msra.mxu0 %v2378
    %2424 = vmatmul.bf16.gmra.mxu0 %v2269
    %v2425 = vpop.f32.mrf.mxu0
    %v2426 = vadd.f32 %v2412, %v2425
    %v2427 = vpop.f32.mrf.mxu0
    %v2428 = vadd.f32 %v2414, %v2427
    %2429 = vdwg.mxu0
    %v2430 = vmax.f32 %v2426, 0.0
    %v2431 = vmax.f32 %v2428, 0.0
    %v2432 = vpack.c.bf16 %v2431, %v2430
    %v2433 = vld [vmem:[#allocation11] sm:$0xf]
    %v2434 = vld [vmem:[#allocation11 + $0x4] sm:$0xf]
    %v2435 = vld [vmem:[#allocation11 + $0x8] sm:$0xf]
    %v2436 = vld [vmem:[#allocation11 + $0xc] sm:$0xf]
    %v2437 = vld [vmem:[#allocation11 + $0x10] sm:$0xf]
    %v2438 = vld [vmem:[#allocation11 + $0x14] sm:$0xf]
    %v2439 = vld [vmem:[#allocation11 + $0x18] sm:$0xf]
    %v2440 = vld [vmem:[#allocation11 + $0x1c] sm:$0xf]
    %v2441 = vld [vmem:[#allocation11 + $0x20] sm:$0xf]
    %v2442 = vld [vmem:[#allocation11 + $0x24] sm:$0xf]
    %v2443 = vld [vmem:[#allocation11 + $0x28] sm:$0xf]
    %v2444 = vld [vmem:[#allocation11 + $0x2c] sm:$0xf]
    %v2445 = vld [vmem:[#allocation11 + $0x30] sm:$0xf]
    %v2446 = vld [vmem:[#allocation11 + $0x34] sm:$0xf]
    %v2447 = vld [vmem:[#allocation11 + $0x38] sm:$0xf]
    %v2448 = vld [vmem:[#allocation11 + $0x3c] sm:$0xf]
    %v2449 = vld [vmem:[%s8] sm:$0x1]
    %v2451 = vperm.slane %v2449, 0
    %v2469 = vunpack.c.l.b16 %v2433
    %v2470 = vunpack.c.l.b16 %v2434
    %v2471 = vunpack.c.l.b16 %v2435
    %v2472 = vunpack.c.l.b16 %v2436
    %v2473 = vunpack.c.l.b16 %v2437
    %v2474 = vunpack.c.l.b16 %v2438
    %v2475 = vunpack.c.l.b16 %v2439
    %v2476 = vunpack.c.l.b16 %v2440
    %v2477 = vunpack.c.l.b16 %v2441
    %v2478 = vunpack.c.l.b16 %v2442
    %v2479 = vunpack.c.l.b16 %v2443
    %v2480 = vunpack.c.l.b16 %v2444
    %v2481 = vunpack.c.l.b16 %v2445
    %v2482 = vunpack.c.l.b16 %v2446
    %v2483 = vunpack.c.l.b16 %v2447
    %v2484 = vunpack.c.l.b16 %v2448
    %v2485 = vpack.c.b16 %v2470, %v2469
    %v2486 = vpack.c.b16 %v2472, %v2471
    %v2487 = vpack.c.b16 %v2474, %v2473
    %v2488 = vpack.c.b16 %v2476, %v2475
    %v2489 = vpack.c.b16 %v2478, %v2477
    %v2490 = vpack.c.b16 %v2480, %v2479
    %v2491 = vpack.c.b16 %v2482, %v2481
    %v2492 = vpack.c.b16 %v2484, %v2483
    %2501 = vmatpush.bf16.msra.mxu0 %v2492
    %2502 = vmatpush.bf16.msra.mxu0 %v2491
    %2503 = vmatpush.bf16.msra.mxu0 %v2490
    %2504 = vmatpush.bf16.msra.mxu0 %v2489
    %2505 = vmatpush.bf16.msra.mxu0 %v2488
    %2506 = vmatpush.bf16.msra.mxu0 %v2487
    %2507 = vmatpush.bf16.msra.mxu0 %v2486
    %2508 = vmatpush.bf16.msra.mxu0 %v2485
    %2509 = vmatmul.bf16.gmra.mxu0 %v2432
    %v2510 = vpop.f32.mrf.mxu0
    %v2511 = vadd.f32 %v2451, %v2510
    %v2512 = vpop.f32.mrf.mxu0
    %v2513 = vadd.f32 %v2451, %v2512
    %2514 = vdwg.mxu0
    %v2515 = vmax.f32 %v2511, 0.0
    %v2516 = vmax.f32 %v2513, 0.0
    %v2517 = vpack.c.bf16 %v2516, %v2515
    %v2518 = vld [vmem:[#allocation13] sm:$0xf]
    %v2519 = vld [vmem:[#allocation13 + $0x4] sm:$0xf]
    %v2520 = vld [vmem:[#allocation13 + $0x8] sm:$0xf]
    %v2521 = vld [vmem:[#allocation13 + $0xc] sm:$0xf]
    %v2522 = vld [vmem:[#allocation13 + $0x10] sm:$0xf]
    %v2523 = vld [vmem:[#allocation13 + $0x14] sm:$0xf]
    %v2524 = vld [vmem:[#allocation13 + $0x18] sm:$0xf]
    %v2525 = vld [vmem:[#allocation13 + $0x1c] sm:$0xf]
    %v2526 = vld [vmem:[#allocation13 + $0x20] sm:$0xf]
    %v2527 = vld [vmem:[#allocation13 + $0x24] sm:$0xf]
    %v2528 = vld [vmem:[#allocation13 + $0x28] sm:$0xf]
    %v2529 = vld [vmem:[#allocation13 + $0x2c] sm:$0xf]
    %v2530 = vld [vmem:[#allocation13 + $0x30] sm:$0xf]
    %v2531 = vld [vmem:[#allocation13 + $0x34] sm:$0xf]
    %v2532 = vld [vmem:[#allocation13 + $0x38] sm:$0xf]
    %v2533 = vld [vmem:[#allocation13 + $0x3c] sm:$0xf]
    %v2534 = vld [vmem:[%s10] sm:$0x1]
    %v2536 = vperm.slane %v2534, 0
    %v2554 = vunpack.c.l.b16 %v2518
    %v2555 = vunpack.c.l.b16 %v2519
    %v2556 = vunpack.c.l.b16 %v2520
    %v2557 = vunpack.c.l.b16 %v2521
    %v2558 = vunpack.c.l.b16 %v2522
    %v2559 = vunpack.c.l.b16 %v2523
    %v2560 = vunpack.c.l.b16 %v2524
    %v2561 = vunpack.c.l.b16 %v2525
    %v2562 = vunpack.c.l.b16 %v2526
    %v2563 = vunpack.c.l.b16 %v2527
    %v2564 = vunpack.c.l.b16 %v2528
    %v2565 = vunpack.c.l.b16 %v2529
    %v2566 = vunpack.c.l.b16 %v2530
    %v2567 = vunpack.c.l.b16 %v2531
    %v2568 = vunpack.c.l.b16 %v2532
    %v2569 = vunpack.c.l.b16 %v2533
    %v2570 = vpack.c.b16 %v2555, %v2554
    %v2571 = vpack.c.b16 %v2557, %v2556
    %v2572 = vpack.c.b16 %v2559, %v2558
    %v2573 = vpack.c.b16 %v2561, %v2560
    %v2574 = vpack.c.b16 %v2563, %v2562
    %v2575 = vpack.c.b16 %v2565, %v2564
    %v2576 = vpack.c.b16 %v2567, %v2566
    %v2577 = vpack.c.b16 %v2569, %v2568
    %2586 = vmatpush.bf16.msra.mxu0 %v2577
    %2587 = vmatpush.bf16.msra.mxu0 %v2576
    %2588 = vmatpush.bf16.msra.mxu0 %v2575
    %2589 = vmatpush.bf16.msra.mxu0 %v2574
    %2590 = vmatpush.bf16.msra.mxu0 %v2573
    %2591 = vmatpush.bf16.msra.mxu0 %v2572
    %2592 = vmatpush.bf16.msra.mxu0 %v2571
    %2593 = vmatpush.bf16.msra.mxu0 %v2570
    %2594 = vmatmul.bf16.gmra.mxu0 %v2517
    %v2595 = vpop.f32.mrf.mxu0
    %v2596 = vadd.f32 %v2536, %v2595
    %v2597 = vpop.f32.mrf.mxu0
    %v2598 = vadd.f32 %v2536, %v2597
    %2599 = vdwg.mxu0
    %2600 = vst [vmem:[#allocation14] sm:$0xff] %v2596
    %2601 = vst [vmem:[#allocation14 + $0x8] sm:$0xff] %v2598
    // Predicated region
    $region74: #{tpu_custom_call.1} parent=1 // pred_check
      _
    $region75: #{tpu_custom_call.1} parent=1 // pred_check_branch
      %2603 = sbr.rel (0) target = $region77
    $region76: #{tpu_custom_call.1} parent=1 // pred_region
      %2605 = vsyncadd [#allocation4], 0
      %s2606 = sshll.u32 [#allocation14], 4
      %s2607 = int_to_ptr.vmem [resolvable:$true] %s2606
      %s2608 = sshll.u32 %s11, 4
      %s2609 = int_to_ptr.hbm [resolvable:$true] %s2608
      %2614 = dma.vmem_to_hbm [thread:$0]  %s2607, 256, %s2609, [#allocation4], 128, 128, 8
    $region77: #{tpu_custom_call.1} parent=1 // pred_fallthru
      _
    // Predicated region
    $region78: #{tpu_custom_call.1} parent=1 // pred_check
      _
    $region79: #{tpu_custom_call.1} parent=1 // pred_check_branch
      %2616 = sbr.rel (0) target = $region81
    $region80: #{tpu_custom_call.1} parent=1 // pred_region
      %2618 = dma.done [#allocation4], 256
    $region81: #{tpu_custom_call.1} parent=1 // pred_fallthru
      _
    %2619 = vsyncpa [#allocation3], 1
    %2620 = vsyncpa [#allocation6], 1
    %2621 = vsyncpa [#allocation9], 1
    %2622 = vsyncpa [#allocation12], 1
    %2623 = vsyncpa [#allocation4], 1

</llo_original>
